<compile_context>
chip_gen: v7x
topology: tpu7x:2x2x1
jax: 0.10.0
libtpu: 0.0.40
codegen_flags: <defaults>
</compile_context>

<pallas_src>
import math

import jax
import jax.numpy as jnp
from jax.experimental import pallas as pl
from jax.experimental.pallas import tpu as pltpu

# ---- model hyper-parameters (lane-dense, consistent with the module) ---------
D_MODEL = 128
N_HEAD = 4
HEAD_DIM = D_MODEL // N_HEAD
INTERMEDIATE = 256
LN_EPS = 1e-5
NEG_INF = -1e30  # large negative instead of -inf (safe for softmax on TPU)


def _layer_norm(x, gamma, beta):
    mu = jnp.mean(x, axis=-1, keepdims=True)
    xc = x - mu
    var = jnp.mean(xc * xc, axis=-1, keepdims=True)
    return xc * jax.lax.rsqrt(var + LN_EPS) * gamma + beta


# ------------------------------ Pallas kernel ---------------------------------
def encoder_kernel(lens_ref,            # SMEM (B,) int32 (scalar prefetch)
                   x_ref,               # (TB, S, D)
                   g1_ref, be1_ref,     # (1, D)
                   wqkv_ref, bqkv_ref,  # (D, 3D), (1, 3D)  scale folded into Q
                   woh_ref, bo_ref,     # (H, hd, D), (1, D)
                   g2_ref, be2_ref,     # (1, D)
                   w1_ref, b1_ref,      # (D, I), (1, I)
                   w2_ref, b2_ref,      # (I, D), (1, D)
                   out_ref):            # (TB, S, D)
    TB, S, D = x_ref.shape
    H = N_HEAD
    HD = D // H

    # flatten the TB sequences into one (M, D) slab for all dense math
    x = x_ref[...].astype(jnp.float32).reshape(TB * S, D)          # (M, D)

    # ---- LayerNorm 1 (pre-LN) ----
    x1 = _layer_norm(x, g1_ref[...], be1_ref[...])

    # ---- fused Q/K/V projection (single MXU push; scale pre-folded) ----
    qkv = jnp.dot(x1, wqkv_ref[...], preferred_element_type=jnp.float32)
    qkv = (qkv + bqkv_ref[...]).reshape(TB, S, 3 * D)               # (TB, S, 3D)

    # ---- key-padding mask from SMEM lengths (additive bias, built in-kernel) --
    base = pl.program_id(0) * TB
    batch_idx = jax.lax.broadcasted_iota(jnp.int32, (TB, S, S), 0)
    key_pos = jax.lax.broadcasted_iota(jnp.int32, (TB, S, S), 2)
    lens = jnp.zeros((TB, S, S), jnp.int32)
    for t in range(TB):                       # static unroll (TB is small)
        lens = jnp.where(batch_idx == t, lens_ref[base + t], lens)
    attn_bias = jnp.where(key_pos < lens, 0.0, NEG_INF)             # (TB, S, S)

    # ---- multi-head self-attention, batched over the TB sequences ----
    attn = jnp.zeros((TB * S, D), jnp.float32)
    for h in range(H):                        # static unroll over heads
        qh = qkv[:, :, h * HD:(h + 1) * HD]                          # (TB, S, hd)
        kh = qkv[:, :, D + h * HD:D + (h + 1) * HD]
        vh = qkv[:, :, 2 * D + h * HD:2 * D + (h + 1) * HD]
        # contract last dims directly -> no explicit kh.T transpose
        s = jnp.einsum('bqd,bkd->bqk', qh, kh,
                       preferred_element_type=jnp.float32)           # (TB, S, S)
        s = s + attn_bias
        m = jnp.max(s, axis=-1, keepdims=True)
        p = jnp.exp(s - m)
        p = p * pl.reciprocal(jnp.sum(p, axis=-1, keepdims=True), approx=True)
        oh = jnp.einsum('bqk,bkd->bqd', p, vh,
                        preferred_element_type=jnp.float32)          # (TB, S, hd)
        # accumulate through the per-head slice of the out-projection (no concat)
        attn = attn + jnp.dot(oh.reshape(TB * S, HD), woh_ref[h],
                              preferred_element_type=jnp.float32)    # (M, D)
    attn = attn + bo_ref[...]

    x = x + attn                               # residual 1 (attn_dropout = id)

    # ---- LayerNorm 2 (pre-LN) + feed-forward ----
    x2 = _layer_norm(x, g2_ref[...], be2_ref[...])
    h1 = jnp.dot(x2, w1_ref[...], preferred_element_type=jnp.float32) + b1_ref[...]
    h1 = jnp.maximum(h1, 0.0)
    ffn = jnp.dot(h1, w2_ref[...], preferred_element_type=jnp.float32) + b2_ref[...]

    out_ref[...] = (x + ffn).reshape(TB, S, D).astype(out_ref.dtype)  # residual 2


# ------------------------------ wrapper ----------------------------------------
def preln_transformer_encoder(x, inp_len, params, *, block_b=None):
    B, S, D = x.shape
    H = N_HEAD
    HD = D // H
    I = params["w1"].shape[1]

    if block_b is None:
        # keep >= 2 grid steps when possible (v7x has 2 TensorCores),
        # while processing multiple sequences per step.
        block_b = B // 2 if (B % 2 == 0 and B >= 2) else B
    assert B % block_b == 0, "batch must be divisible by block_b"
    nb = B // block_b

    # fused QKV weight/bias with the softmax scale folded into the Q columns
    scale = 1.0 / math.sqrt(HD)
    wqkv = jnp.concatenate([params["wq"] * scale, params["wk"], params["wv"]], axis=1)
    bqkv = jnp.concatenate([params["bq"] * scale, params["bk"], params["bv"]], axis=1)
    woh = params["wo"].reshape(H, HD, D)     # per-head slices of the out-projection

    def full(shape):
        return pl.BlockSpec(shape, lambda n, lens: (0,) * len(shape))

    grid_spec = pltpu.PrefetchScalarGridSpec(
        num_scalar_prefetch=1,               # inp_len -> SMEM
        grid=(nb,),
        in_specs=[
            pl.BlockSpec((block_b, S, D), lambda n, lens: (n, 0, 0)),   # x
            full((1, D)), full((1, D)),                                 # ln1 gamma/beta
            full((D, 3 * D)), full((1, 3 * D)),                         # wqkv, bqkv
            full((H, HD, D)), full((1, D)),                             # woh, bo
            full((1, D)), full((1, D)),                                 # ln2 gamma/beta
            full((D, I)), full((1, I)),                                 # w1, b1
            full((I, D)), full((1, D)),                                 # w2, b2
        ],
        out_specs=pl.BlockSpec((block_b, S, D), lambda n, lens: (n, 0, 0)),
    )

    return pl.pallas_call(
        encoder_kernel,
        out_shape=jax.ShapeDtypeStruct((B, S, D), x.dtype),
        grid_spec=grid_spec,
        compiler_params=pltpu.CompilerParams(
            dimension_semantics=("parallel",)),
    )(inp_len.astype(jnp.int32), x,
      params["g1"], params["be1"],
      wqkv, bqkv, woh, params["bo"],
      params["g2"], params["be2"],
      params["w1"], params["b1"], params["w2"], params["b2"])


# --------------------------- pure-JAX reference ---------------------------------
def reference(x, inp_len, p):
    B, S, D = x.shape
    H = N_HEAD
    HD = D // H
    key_pad = jnp.arange(S)[None, :] >= inp_len[:, None]        # (B, S) True = pad

    x1 = _layer_norm(x, p["g1"], p["be1"])
    q = x1 @ p["wq"] + p["bq"]
    k = x1 @ p["wk"] + p["bk"]
    v = x1 @ p["wv"] + p["bv"]
    q = q.reshape(B, S, H, HD).transpose(0, 2, 1, 3)
    k = k.reshape(B, S, H, HD).transpose(0, 2, 1, 3)
    v = v.reshape(B, S, H, HD).transpose(0, 2, 1, 3)
    s = jnp.einsum("bhqd,bhkd->bhqk", q, k) / math.sqrt(HD)
    s = jnp.where(key_pad[:, None, None, :], NEG_INF, s)
    a = jax.nn.softmax(s, axis=-1)
    o = jnp.einsum("bhqk,bhkd->bhqd", a, v).transpose(0, 2, 1, 3).reshape(B, S, D)
    o = o @ p["wo"] + p["bo"]
    x = x + o
    x2 = _layer_norm(x, p["g2"], p["be2"])
    ffn = jnp.maximum(x2 @ p["w1"] + p["b1"], 0.0) @ p["w2"] + p["b2"]
    return x + ffn


# ------------------------------- main --------------------------------------------
if __name__ == "__main__":
    key = jax.random.PRNGKey(0)
    ks = jax.random.split(key, 10)

    B, S = 8, 8
    x = jax.random.normal(ks[0], (B, S, D_MODEL), dtype=jnp.float32)
    inp_len = jnp.array([5, 8, 3, 8, 1, 7, 8, 2], dtype=jnp.int32)

    def w(k, shape, scale=0.05):
        return scale * jax.random.normal(k, shape, dtype=jnp.float32)

    # weights stored so the kernel right-multiplies: y = x @ W + b
    params = {
        "g1": jnp.ones((1, D_MODEL), jnp.float32),
        "be1": jnp.zeros((1, D_MODEL), jnp.float32),
        "wq": w(ks[1], (D_MODEL, D_MODEL)),
        "bq": w(ks[2], (1, D_MODEL), 0.01),
        "wk": w(ks[3], (D_MODEL, D_MODEL)),
        "bk": jnp.zeros((1, D_MODEL), jnp.float32),
        "wv": w(ks[4], (D_MODEL, D_MODEL)),
        "bv": jnp.zeros((1, D_MODEL), jnp.float32),
        "wo": w(ks[5], (D_MODEL, D_MODEL)),
        "bo": w(ks[6], (1, D_MODEL), 0.01),
        "g2": jnp.ones((1, D_MODEL), jnp.float32),
        "be2": jnp.zeros((1, D_MODEL), jnp.float32),
        "w1": w(ks[7], (D_MODEL, INTERMEDIATE)),
        "b1": jnp.zeros((1, INTERMEDIATE), jnp.float32),
        "w2": w(ks[8], (INTERMEDIATE, D_MODEL)),
        "b2": jnp.zeros((1, D_MODEL), jnp.float32),
    }

    out = preln_transformer_encoder(x, inp_len, params)
    out = jax.block_until_ready(out)

    ref = reference(x, inp_len, params)
    assert out.shape == (B, S, D_MODEL)
    assert jnp.allclose(out, ref, atol=2e-3, rtol=2e-3), "mismatch vs reference"

    print("KERNEL_OK")
</pallas_src>

<mosaic_0001>
module attributes {stable_mosaic.version = 11 : i64} {
  func.func @encoder_kernel(%arg0: i32, %arg1: memref<8xi32, #tpu.memory_space<smem>>, %arg2: memref<4x8x128xf32, #tpu.memory_space<vmem>>, %arg3: memref<1x128xf32, #tpu.memory_space<vmem>>, %arg4: memref<1x128xf32, #tpu.memory_space<vmem>>, %arg5: memref<128x384xf32, #tpu.memory_space<vmem>>, %arg6: memref<1x384xf32, #tpu.memory_space<vmem>>, %arg7: memref<4x32x128xf32, #tpu.memory_space<vmem>>, %arg8: memref<1x128xf32, #tpu.memory_space<vmem>>, %arg9: memref<1x128xf32, #tpu.memory_space<vmem>>, %arg10: memref<1x128xf32, #tpu.memory_space<vmem>>, %arg11: memref<128x256xf32, #tpu.memory_space<vmem>>, %arg12: memref<1x256xf32, #tpu.memory_space<vmem>>, %arg13: memref<256x128xf32, #tpu.memory_space<vmem>>, %arg14: memref<1x128xf32, #tpu.memory_space<vmem>>, %arg15: memref<4x8x128xf32, #tpu.memory_space<vmem>>) attributes {dimension_semantics = [#tpu.dimension_semantics<parallel>], iteration_bounds = array<i64: 2>, scalar_prefetch = 1 : i64, scratch_operands = 0 : i64, tpu.core_type = #tpu.core_type<tc>, window_params = [{transform_indices = @transform_0, window_bounds = array<i64: 4, 8, 128>}, {pipeline_mode = #tpu.pipeline_mode<synchronous>, transform_indices = @transform_1, window_bounds = array<i64: 1, 128>}, {pipeline_mode = #tpu.pipeline_mode<synchronous>, transform_indices = @transform_2, window_bounds = array<i64: 1, 128>}, {pipeline_mode = #tpu.pipeline_mode<synchronous>, transform_indices = @transform_3, window_bounds = array<i64: 128, 384>}, {pipeline_mode = #tpu.pipeline_mode<synchronous>, transform_indices = @transform_4, window_bounds = array<i64: 1, 384>}, {pipeline_mode = #tpu.pipeline_mode<synchronous>, transform_indices = @transform_5, window_bounds = array<i64: 4, 32, 128>}, {pipeline_mode = #tpu.pipeline_mode<synchronous>, transform_indices = @transform_6, window_bounds = array<i64: 1, 128>}, {pipeline_mode = #tpu.pipeline_mode<synchronous>, transform_indices = @transform_7, window_bounds = array<i64: 1, 128>}, {pipeline_mode = #tpu.pipeline_mode<synchronous>, transform_indices = @transform_8, window_bounds = array<i64: 1, 128>}, {pipeline_mode = #tpu.pipeline_mode<synchronous>, transform_indices = @transform_9, window_bounds = array<i64: 128, 256>}, {pipeline_mode = #tpu.pipeline_mode<synchronous>, transform_indices = @transform_10, window_bounds = array<i64: 1, 256>}, {pipeline_mode = #tpu.pipeline_mode<synchronous>, transform_indices = @transform_11, window_bounds = array<i64: 256, 128>}, {pipeline_mode = #tpu.pipeline_mode<synchronous>, transform_indices = @transform_12, window_bounds = array<i64: 1, 128>}, {transform_indices = @transform_13, window_bounds = array<i64: 4, 8, 128>}]} {
    %c0 = arith.constant 0 : index
    %c0_0 = arith.constant 0 : index
    %c0_1 = arith.constant 0 : index
    %0 = vector.load %arg2[%c0, %c0_0, %c0_1] : memref<4x8x128xf32, #tpu.memory_space<vmem>>, vector<4x8x128xf32>
    %1 = vector.shape_cast %0 : vector<4x8x128xf32> to vector<32x128xf32>
    %c0_2 = arith.constant 0 : index
    %c0_3 = arith.constant 0 : index
    %2 = vector.load %arg3[%c0_2, %c0_3] : memref<1x128xf32, #tpu.memory_space<vmem>>, vector<1x128xf32>
    %c0_4 = arith.constant 0 : index
    %c0_5 = arith.constant 0 : index
    %3 = vector.load %arg4[%c0_4, %c0_5] : memref<1x128xf32, #tpu.memory_space<vmem>>, vector<1x128xf32>
    %cst = arith.constant dense<0.000000e+00> : vector<32xf32>
    %4 = vector.multi_reduction <add>, %1, %cst [1] : vector<32x128xf32> to vector<32xf32>
    %5 = vector.shape_cast %4 : vector<32xf32> to vector<32x1xf32>
    %cst_6 = arith.constant 1.280000e+02 : f32
    %6 = vector.broadcast %cst_6 : f32 to vector<32x1xf32>
    %7 = arith.divf %5, %6 : vector<32x1xf32>
    %8 = vector.broadcast %7 : vector<32x1xf32> to vector<32x128xf32>
    %9 = arith.subf %1, %8 : vector<32x128xf32>
    %10 = arith.mulf %9, %9 : vector<32x128xf32>
    %cst_7 = arith.constant dense<0.000000e+00> : vector<32xf32>
    %11 = vector.multi_reduction <add>, %10, %cst_7 [1] : vector<32x128xf32> to vector<32xf32>
    %12 = vector.shape_cast %11 : vector<32xf32> to vector<32x1xf32>
    %cst_8 = arith.constant 1.280000e+02 : f32
    %13 = vector.broadcast %cst_8 : f32 to vector<32x1xf32>
    %14 = arith.divf %12, %13 : vector<32x1xf32>
    %cst_9 = arith.constant 9.99999974E-6 : f32
    %15 = vector.broadcast %cst_9 : f32 to vector<32x1xf32>
    %16 = arith.addf %14, %15 : vector<32x1xf32>
    %17 = math.rsqrt %16 : vector<32x1xf32>
    %18 = vector.broadcast %17 : vector<32x1xf32> to vector<32x128xf32>
    %19 = arith.mulf %9, %18 : vector<32x128xf32>
    %20 = vector.broadcast %2 : vector<1x128xf32> to vector<32x128xf32>
    %21 = arith.mulf %19, %20 : vector<32x128xf32>
    %22 = vector.broadcast %3 : vector<1x128xf32> to vector<32x128xf32>
    %23 = arith.addf %21, %22 : vector<32x128xf32>
    %c0_10 = arith.constant 0 : index
    %c0_11 = arith.constant 0 : index
    %24 = vector.load %arg5[%c0_10, %c0_11] : memref<128x384xf32, #tpu.memory_space<vmem>>, vector<128x384xf32>
    %cst_12 = arith.constant dense<0.000000e+00> : vector<32x384xf32>
    %25 = tpu.matmul %23, %24, %cst_12 {dimension_numbers = #tpu.dot_dimension_numbers<[1], [0], [0], [1], [0, 0, 1, 1], [], []>} : vector<32x128xf32>, vector<128x384xf32>, vector<32x384xf32> -> vector<32x384xf32>
    %c0_13 = arith.constant 0 : index
    %c0_14 = arith.constant 0 : index
    %26 = vector.load %arg6[%c0_13, %c0_14] : memref<1x384xf32, #tpu.memory_space<vmem>>, vector<1x384xf32>
    %27 = vector.broadcast %26 : vector<1x384xf32> to vector<32x384xf32>
    %28 = arith.addf %25, %27 : vector<32x384xf32>
    %29 = vector.shape_cast %28 : vector<32x384xf32> to vector<4x8x384xf32>
    %c4_i32 = arith.constant 4 : i32
    %30 = arith.muli %arg0, %c4_i32 : i32
    %31 = tpu.iota {dimensions = array<i32: 0>} : vector<4x8x8xi32>
    %32 = tpu.iota {dimensions = array<i32: 2>} : vector<4x8x8xi32>
    %c0_i32 = arith.constant 0 : i32
    %33 = vector.broadcast %c0_i32 : i32 to vector<4x8x8xi32>
    %c0_i32_15 = arith.constant 0 : i32
    %34 = vector.broadcast %c0_i32_15 : i32 to vector<4x8x8xi32>
    %35 = arith.cmpi eq, %31, %34 : vector<4x8x8xi32>
    %c0_i32_16 = arith.constant 0 : i32
    %36 = arith.addi %30, %c0_i32_16 : i32
    %37 = arith.index_cast %36 : i32 to index
    %38 = memref.load %arg1[%37] : memref<8xi32, #tpu.memory_space<smem>>
    %39 = vector.broadcast %38 : i32 to vector<4x8x8xi32>
    %40 = arith.select %35, %39, %33 : vector<4x8x8xi1>, vector<4x8x8xi32>
    %c1_i32 = arith.constant 1 : i32
    %41 = vector.broadcast %c1_i32 : i32 to vector<4x8x8xi32>
    %42 = arith.cmpi eq, %31, %41 : vector<4x8x8xi32>
    %c1_i32_17 = arith.constant 1 : i32
    %43 = arith.addi %30, %c1_i32_17 : i32
    %44 = arith.index_cast %43 : i32 to index
    %45 = memref.load %arg1[%44] : memref<8xi32, #tpu.memory_space<smem>>
    %46 = vector.broadcast %45 : i32 to vector<4x8x8xi32>
    %47 = arith.select %42, %46, %40 : vector<4x8x8xi1>, vector<4x8x8xi32>
    %c2_i32 = arith.constant 2 : i32
    %48 = vector.broadcast %c2_i32 : i32 to vector<4x8x8xi32>
    %49 = arith.cmpi eq, %31, %48 : vector<4x8x8xi32>
    %c2_i32_18 = arith.constant 2 : i32
    %50 = arith.addi %30, %c2_i32_18 : i32
    %51 = arith.index_cast %50 : i32 to index
    %52 = memref.load %arg1[%51] : memref<8xi32, #tpu.memory_space<smem>>
    %53 = vector.broadcast %52 : i32 to vector<4x8x8xi32>
    %54 = arith.select %49, %53, %47 : vector<4x8x8xi1>, vector<4x8x8xi32>
    %c3_i32 = arith.constant 3 : i32
    %55 = vector.broadcast %c3_i32 : i32 to vector<4x8x8xi32>
    %56 = arith.cmpi eq, %31, %55 : vector<4x8x8xi32>
    %c3_i32_19 = arith.constant 3 : i32
    %57 = arith.addi %30, %c3_i32_19 : i32
    %58 = arith.index_cast %57 : i32 to index
    %59 = memref.load %arg1[%58] : memref<8xi32, #tpu.memory_space<smem>>
    %60 = vector.broadcast %59 : i32 to vector<4x8x8xi32>
    %61 = arith.select %56, %60, %54 : vector<4x8x8xi1>, vector<4x8x8xi32>
    %62 = arith.cmpi slt, %32, %61 : vector<4x8x8xi32>
    %cst_20 = arith.constant 0.000000e+00 : f32
    %cst_21 = arith.constant -1.000000e+30 : f32
    %63 = vector.broadcast %cst_20 : f32 to vector<4x8x8xf32>
    %64 = vector.broadcast %cst_21 : f32 to vector<4x8x8xf32>
    %65 = arith.select %62, %63, %64 : vector<4x8x8xi1>, vector<4x8x8xf32>
    %cst_22 = arith.constant 0.000000e+00 : f32
    %66 = vector.broadcast %cst_22 : f32 to vector<32x128xf32>
    %67 = vector.extract_strided_slice %29 {offsets = [0, 0, 0], sizes = [4, 8, 32], strides = [1, 1, 1]} : vector<4x8x384xf32> to vector<4x8x32xf32>
    %68 = vector.extract_strided_slice %29 {offsets = [0, 0, 128], sizes = [4, 8, 32], strides = [1, 1, 1]} : vector<4x8x384xf32> to vector<4x8x32xf32>
    %69 = vector.extract_strided_slice %29 {offsets = [0, 0, 256], sizes = [4, 8, 32], strides = [1, 1, 1]} : vector<4x8x384xf32> to vector<4x8x32xf32>
    "tpu.trace_start"() <{level = 10 : i32, message = "bqd,bkd->bqk"}> : () -> ()
    %cst_23 = arith.constant dense<0.000000e+00> : vector<4x8x8xf32>
    %70 = tpu.matmul %67, %68, %cst_23 {dimension_numbers = #tpu.dot_dimension_numbers<[2], [2], [1], [1], [0, 0, 0, 1, 1, 1], [0], [0]>} : vector<4x8x32xf32>, vector<4x8x32xf32>, vector<4x8x8xf32> -> vector<4x8x8xf32>
    "tpu.trace_stop"() : () -> ()
    %71 = arith.addf %70, %65 : vector<4x8x8xf32>
    %cst_24 = arith.constant dense<0xFF800000> : vector<4x8xf32>
    %72 = vector.multi_reduction <maximumf>, %71, %cst_24 [2] : vector<4x8x8xf32> to vector<4x8xf32>
    %73 = vector.shape_cast %72 : vector<4x8xf32> to vector<4x8x1xf32>
    %74 = vector.broadcast %73 : vector<4x8x1xf32> to vector<4x8x8xf32>
    %75 = arith.subf %71, %74 : vector<4x8x8xf32>
    %76 = math.exp %75 : vector<4x8x8xf32>
    %cst_25 = arith.constant dense<0.000000e+00> : vector<4x8xf32>
    %77 = vector.multi_reduction <add>, %76, %cst_25 [2] : vector<4x8x8xf32> to vector<4x8xf32>
    %78 = vector.shape_cast %77 : vector<4x8xf32> to vector<4x8x1xf32>
    %79 = tpu.reciprocal %78 {approx = true} : vector<4x8x1xf32> -> vector<4x8x1xf32>
    %80 = vector.broadcast %79 : vector<4x8x1xf32> to vector<4x8x8xf32>
    %81 = arith.mulf %76, %80 : vector<4x8x8xf32>
    "tpu.trace_start"() <{level = 10 : i32, message = "bqk,bkd->bqd"}> : () -> ()
    %cst_26 = arith.constant dense<0.000000e+00> : vector<4x8x32xf32>
    %82 = tpu.matmul %81, %69, %cst_26 {dimension_numbers = #tpu.dot_dimension_numbers<[2], [1], [1], [2], [0, 0, 0, 1, 1, 2], [0], [0]>} : vector<4x8x8xf32>, vector<4x8x32xf32>, vector<4x8x32xf32> -> vector<4x8x32xf32>
    "tpu.trace_stop"() : () -> ()
    %83 = vector.shape_cast %82 : vector<4x8x32xf32> to vector<32x32xf32>
    %c0_27 = arith.constant 0 : index
    %c0_28 = arith.constant 0 : index
    %c0_29 = arith.constant 0 : index
    %84 = vector.load %arg7[%c0_27, %c0_28, %c0_29] : memref<4x32x128xf32, #tpu.memory_space<vmem>>, vector<1x32x128xf32>
    %85 = vector.shape_cast %84 : vector<1x32x128xf32> to vector<32x128xf32>
    %cst_30 = arith.constant dense<0.000000e+00> : vector<32x128xf32>
    %86 = tpu.matmul %83, %85, %cst_30 {dimension_numbers = #tpu.dot_dimension_numbers<[1], [0], [0], [1], [0, 0, 1, 1], [], []>} : vector<32x32xf32>, vector<32x128xf32>, vector<32x128xf32> -> vector<32x128xf32>
    %87 = arith.addf %66, %86 : vector<32x128xf32>
    %88 = vector.extract_strided_slice %29 {offsets = [0, 0, 32], sizes = [4, 8, 32], strides = [1, 1, 1]} : vector<4x8x384xf32> to vector<4x8x32xf32>
    %89 = vector.extract_strided_slice %29 {offsets = [0, 0, 160], sizes = [4, 8, 32], strides = [1, 1, 1]} : vector<4x8x384xf32> to vector<4x8x32xf32>
    %90 = vector.extract_strided_slice %29 {offsets = [0, 0, 288], sizes = [4, 8, 32], strides = [1, 1, 1]} : vector<4x8x384xf32> to vector<4x8x32xf32>
    "tpu.trace_start"() <{level = 10 : i32, message = "bqd,bkd->bqk"}> : () -> ()
    %cst_31 = arith.constant dense<0.000000e+00> : vector<4x8x8xf32>
    %91 = tpu.matmul %88, %89, %cst_31 {dimension_numbers = #tpu.dot_dimension_numbers<[2], [2], [1], [1], [0, 0, 0, 1, 1, 1], [0], [0]>} : vector<4x8x32xf32>, vector<4x8x32xf32>, vector<4x8x8xf32> -> vector<4x8x8xf32>
    "tpu.trace_stop"() : () -> ()
    %92 = arith.addf %91, %65 : vector<4x8x8xf32>
    %cst_32 = arith.constant dense<0xFF800000> : vector<4x8xf32>
    %93 = vector.multi_reduction <maximumf>, %92, %cst_32 [2] : vector<4x8x8xf32> to vector<4x8xf32>
    %94 = vector.shape_cast %93 : vector<4x8xf32> to vector<4x8x1xf32>
    %95 = vector.broadcast %94 : vector<4x8x1xf32> to vector<4x8x8xf32>
    %96 = arith.subf %92, %95 : vector<4x8x8xf32>
    %97 = math.exp %96 : vector<4x8x8xf32>
    %cst_33 = arith.constant dense<0.000000e+00> : vector<4x8xf32>
    %98 = vector.multi_reduction <add>, %97, %cst_33 [2] : vector<4x8x8xf32> to vector<4x8xf32>
    %99 = vector.shape_cast %98 : vector<4x8xf32> to vector<4x8x1xf32>
    %100 = tpu.reciprocal %99 {approx = true} : vector<4x8x1xf32> -> vector<4x8x1xf32>
    %101 = vector.broadcast %100 : vector<4x8x1xf32> to vector<4x8x8xf32>
    %102 = arith.mulf %97, %101 : vector<4x8x8xf32>
    "tpu.trace_start"() <{level = 10 : i32, message = "bqk,bkd->bqd"}> : () -> ()
    %cst_34 = arith.constant dense<0.000000e+00> : vector<4x8x32xf32>
    %103 = tpu.matmul %102, %90, %cst_34 {dimension_numbers = #tpu.dot_dimension_numbers<[2], [1], [1], [2], [0, 0, 0, 1, 1, 2], [0], [0]>} : vector<4x8x8xf32>, vector<4x8x32xf32>, vector<4x8x32xf32> -> vector<4x8x32xf32>
    "tpu.trace_stop"() : () -> ()
    %104 = vector.shape_cast %103 : vector<4x8x32xf32> to vector<32x32xf32>
    %c1 = arith.constant 1 : index
    %c0_35 = arith.constant 0 : index
    %c0_36 = arith.constant 0 : index
    %105 = vector.load %arg7[%c1, %c0_35, %c0_36] : memref<4x32x128xf32, #tpu.memory_space<vmem>>, vector<1x32x128xf32>
    %106 = vector.shape_cast %105 : vector<1x32x128xf32> to vector<32x128xf32>
    %cst_37 = arith.constant dense<0.000000e+00> : vector<32x128xf32>
    %107 = tpu.matmul %104, %106, %cst_37 {dimension_numbers = #tpu.dot_dimension_numbers<[1], [0], [0], [1], [0, 0, 1, 1], [], []>} : vector<32x32xf32>, vector<32x128xf32>, vector<32x128xf32> -> vector<32x128xf32>
    %108 = arith.addf %87, %107 : vector<32x128xf32>
    %109 = vector.extract_strided_slice %29 {offsets = [0, 0, 64], sizes = [4, 8, 32], strides = [1, 1, 1]} : vector<4x8x384xf32> to vector<4x8x32xf32>
    %110 = vector.extract_strided_slice %29 {offsets = [0, 0, 192], sizes = [4, 8, 32], strides = [1, 1, 1]} : vector<4x8x384xf32> to vector<4x8x32xf32>
    %111 = vector.extract_strided_slice %29 {offsets = [0, 0, 320], sizes = [4, 8, 32], strides = [1, 1, 1]} : vector<4x8x384xf32> to vector<4x8x32xf32>
    "tpu.trace_start"() <{level = 10 : i32, message = "bqd,bkd->bqk"}> : () -> ()
    %cst_38 = arith.constant dense<0.000000e+00> : vector<4x8x8xf32>
    %112 = tpu.matmul %109, %110, %cst_38 {dimension_numbers = #tpu.dot_dimension_numbers<[2], [2], [1], [1], [0, 0, 0, 1, 1, 1], [0], [0]>} : vector<4x8x32xf32>, vector<4x8x32xf32>, vector<4x8x8xf32> -> vector<4x8x8xf32>
    "tpu.trace_stop"() : () -> ()
    %113 = arith.addf %112, %65 : vector<4x8x8xf32>
    %cst_39 = arith.constant dense<0xFF800000> : vector<4x8xf32>
    %114 = vector.multi_reduction <maximumf>, %113, %cst_39 [2] : vector<4x8x8xf32> to vector<4x8xf32>
    %115 = vector.shape_cast %114 : vector<4x8xf32> to vector<4x8x1xf32>
    %116 = vector.broadcast %115 : vector<4x8x1xf32> to vector<4x8x8xf32>
    %117 = arith.subf %113, %116 : vector<4x8x8xf32>
    %118 = math.exp %117 : vector<4x8x8xf32>
    %cst_40 = arith.constant dense<0.000000e+00> : vector<4x8xf32>
    %119 = vector.multi_reduction <add>, %118, %cst_40 [2] : vector<4x8x8xf32> to vector<4x8xf32>
    %120 = vector.shape_cast %119 : vector<4x8xf32> to vector<4x8x1xf32>
    %121 = tpu.reciprocal %120 {approx = true} : vector<4x8x1xf32> -> vector<4x8x1xf32>
    %122 = vector.broadcast %121 : vector<4x8x1xf32> to vector<4x8x8xf32>
    %123 = arith.mulf %118, %122 : vector<4x8x8xf32>
    "tpu.trace_start"() <{level = 10 : i32, message = "bqk,bkd->bqd"}> : () -> ()
    %cst_41 = arith.constant dense<0.000000e+00> : vector<4x8x32xf32>
    %124 = tpu.matmul %123, %111, %cst_41 {dimension_numbers = #tpu.dot_dimension_numbers<[2], [1], [1], [2], [0, 0, 0, 1, 1, 2], [0], [0]>} : vector<4x8x8xf32>, vector<4x8x32xf32>, vector<4x8x32xf32> -> vector<4x8x32xf32>
    "tpu.trace_stop"() : () -> ()
    %125 = vector.shape_cast %124 : vector<4x8x32xf32> to vector<32x32xf32>
    %c2 = arith.constant 2 : index
    %c0_42 = arith.constant 0 : index
    %c0_43 = arith.constant 0 : index
    %126 = vector.load %arg7[%c2, %c0_42, %c0_43] : memref<4x32x128xf32, #tpu.memory_space<vmem>>, vector<1x32x128xf32>
    %127 = vector.shape_cast %126 : vector<1x32x128xf32> to vector<32x128xf32>
    %cst_44 = arith.constant dense<0.000000e+00> : vector<32x128xf32>
    %128 = tpu.matmul %125, %127, %cst_44 {dimension_numbers = #tpu.dot_dimension_numbers<[1], [0], [0], [1], [0, 0, 1, 1], [], []>} : vector<32x32xf32>, vector<32x128xf32>, vector<32x128xf32> -> vector<32x128xf32>
    %129 = arith.addf %108, %128 : vector<32x128xf32>
    %130 = vector.extract_strided_slice %29 {offsets = [0, 0, 96], sizes = [4, 8, 32], strides = [1, 1, 1]} : vector<4x8x384xf32> to vector<4x8x32xf32>
    %131 = vector.extract_strided_slice %29 {offsets = [0, 0, 224], sizes = [4, 8, 32], strides = [1, 1, 1]} : vector<4x8x384xf32> to vector<4x8x32xf32>
    %132 = vector.extract_strided_slice %29 {offsets = [0, 0, 352], sizes = [4, 8, 32], strides = [1, 1, 1]} : vector<4x8x384xf32> to vector<4x8x32xf32>
    "tpu.trace_start"() <{level = 10 : i32, message = "bqd,bkd->bqk"}> : () -> ()
    %cst_45 = arith.constant dense<0.000000e+00> : vector<4x8x8xf32>
    %133 = tpu.matmul %130, %131, %cst_45 {dimension_numbers = #tpu.dot_dimension_numbers<[2], [2], [1], [1], [0, 0, 0, 1, 1, 1], [0], [0]>} : vector<4x8x32xf32>, vector<4x8x32xf32>, vector<4x8x8xf32> -> vector<4x8x8xf32>
    "tpu.trace_stop"() : () -> ()
    %134 = arith.addf %133, %65 : vector<4x8x8xf32>
    %cst_46 = arith.constant dense<0xFF800000> : vector<4x8xf32>
    %135 = vector.multi_reduction <maximumf>, %134, %cst_46 [2] : vector<4x8x8xf32> to vector<4x8xf32>
    %136 = vector.shape_cast %135 : vector<4x8xf32> to vector<4x8x1xf32>
    %137 = vector.broadcast %136 : vector<4x8x1xf32> to vector<4x8x8xf32>
    %138 = arith.subf %134, %137 : vector<4x8x8xf32>
    %139 = math.exp %138 : vector<4x8x8xf32>
    %cst_47 = arith.constant dense<0.000000e+00> : vector<4x8xf32>
    %140 = vector.multi_reduction <add>, %139, %cst_47 [2] : vector<4x8x8xf32> to vector<4x8xf32>
    %141 = vector.shape_cast %140 : vector<4x8xf32> to vector<4x8x1xf32>
    %142 = tpu.reciprocal %141 {approx = true} : vector<4x8x1xf32> -> vector<4x8x1xf32>
    %143 = vector.broadcast %142 : vector<4x8x1xf32> to vector<4x8x8xf32>
    %144 = arith.mulf %139, %143 : vector<4x8x8xf32>
    "tpu.trace_start"() <{level = 10 : i32, message = "bqk,bkd->bqd"}> : () -> ()
    %cst_48 = arith.constant dense<0.000000e+00> : vector<4x8x32xf32>
    %145 = tpu.matmul %144, %132, %cst_48 {dimension_numbers = #tpu.dot_dimension_numbers<[2], [1], [1], [2], [0, 0, 0, 1, 1, 2], [0], [0]>} : vector<4x8x8xf32>, vector<4x8x32xf32>, vector<4x8x32xf32> -> vector<4x8x32xf32>
    "tpu.trace_stop"() : () -> ()
    %146 = vector.shape_cast %145 : vector<4x8x32xf32> to vector<32x32xf32>
    %c3 = arith.constant 3 : index
    %c0_49 = arith.constant 0 : index
    %c0_50 = arith.constant 0 : index
    %147 = vector.load %arg7[%c3, %c0_49, %c0_50] : memref<4x32x128xf32, #tpu.memory_space<vmem>>, vector<1x32x128xf32>
    %148 = vector.shape_cast %147 : vector<1x32x128xf32> to vector<32x128xf32>
    %cst_51 = arith.constant dense<0.000000e+00> : vector<32x128xf32>
    %149 = tpu.matmul %146, %148, %cst_51 {dimension_numbers = #tpu.dot_dimension_numbers<[1], [0], [0], [1], [0, 0, 1, 1], [], []>} : vector<32x32xf32>, vector<32x128xf32>, vector<32x128xf32> -> vector<32x128xf32>
    %150 = arith.addf %129, %149 : vector<32x128xf32>
    %c0_52 = arith.constant 0 : index
    %c0_53 = arith.constant 0 : index
    %151 = vector.load %arg8[%c0_52, %c0_53] : memref<1x128xf32, #tpu.memory_space<vmem>>, vector<1x128xf32>
    %152 = vector.broadcast %151 : vector<1x128xf32> to vector<32x128xf32>
    %153 = arith.addf %150, %152 : vector<32x128xf32>
    %154 = arith.addf %1, %153 : vector<32x128xf32>
    %c0_54 = arith.constant 0 : index
    %c0_55 = arith.constant 0 : index
    %155 = vector.load %arg9[%c0_54, %c0_55] : memref<1x128xf32, #tpu.memory_space<vmem>>, vector<1x128xf32>
    %c0_56 = arith.constant 0 : index
    %c0_57 = arith.constant 0 : index
    %156 = vector.load %arg10[%c0_56, %c0_57] : memref<1x128xf32, #tpu.memory_space<vmem>>, vector<1x128xf32>
    %cst_58 = arith.constant dense<0.000000e+00> : vector<32xf32>
    %157 = vector.multi_reduction <add>, %154, %cst_58 [1] : vector<32x128xf32> to vector<32xf32>
    %158 = vector.shape_cast %157 : vector<32xf32> to vector<32x1xf32>
    %cst_59 = arith.constant 1.280000e+02 : f32
    %159 = vector.broadcast %cst_59 : f32 to vector<32x1xf32>
    %160 = arith.divf %158, %159 : vector<32x1xf32>
    %161 = vector.broadcast %160 : vector<32x1xf32> to vector<32x128xf32>
    %162 = arith.subf %154, %161 : vector<32x128xf32>
    %163 = arith.mulf %162, %162 : vector<32x128xf32>
    %cst_60 = arith.constant dense<0.000000e+00> : vector<32xf32>
    %164 = vector.multi_reduction <add>, %163, %cst_60 [1] : vector<32x128xf32> to vector<32xf32>
    %165 = vector.shape_cast %164 : vector<32xf32> to vector<32x1xf32>
    %cst_61 = arith.constant 1.280000e+02 : f32
    %166 = vector.broadcast %cst_61 : f32 to vector<32x1xf32>
    %167 = arith.divf %165, %166 : vector<32x1xf32>
    %cst_62 = arith.constant 9.99999974E-6 : f32
    %168 = vector.broadcast %cst_62 : f32 to vector<32x1xf32>
    %169 = arith.addf %167, %168 : vector<32x1xf32>
    %170 = math.rsqrt %169 : vector<32x1xf32>
    %171 = vector.broadcast %170 : vector<32x1xf32> to vector<32x128xf32>
    %172 = arith.mulf %162, %171 : vector<32x128xf32>
    %173 = vector.broadcast %155 : vector<1x128xf32> to vector<32x128xf32>
    %174 = arith.mulf %172, %173 : vector<32x128xf32>
    %175 = vector.broadcast %156 : vector<1x128xf32> to vector<32x128xf32>
    %176 = arith.addf %174, %175 : vector<32x128xf32>
    %c0_63 = arith.constant 0 : index
    %c0_64 = arith.constant 0 : index
    %177 = vector.load %arg11[%c0_63, %c0_64] : memref<128x256xf32, #tpu.memory_space<vmem>>, vector<128x256xf32>
    %cst_65 = arith.constant dense<0.000000e+00> : vector<32x256xf32>
    %178 = tpu.matmul %176, %177, %cst_65 {dimension_numbers = #tpu.dot_dimension_numbers<[1], [0], [0], [1], [0, 0, 1, 1], [], []>} : vector<32x128xf32>, vector<128x256xf32>, vector<32x256xf32> -> vector<32x256xf32>
    %c0_66 = arith.constant 0 : index
    %c0_67 = arith.constant 0 : index
    %179 = vector.load %arg12[%c0_66, %c0_67] : memref<1x256xf32, #tpu.memory_space<vmem>>, vector<1x256xf32>
    %180 = vector.broadcast %179 : vector<1x256xf32> to vector<32x256xf32>
    %181 = arith.addf %178, %180 : vector<32x256xf32>
    %cst_68 = arith.constant 0.000000e+00 : f32
    %182 = vector.broadcast %cst_68 : f32 to vector<32x256xf32>
    %183 = arith.maximumf %181, %182 : vector<32x256xf32>
    %c0_69 = arith.constant 0 : index
    %c0_70 = arith.constant 0 : index
    %184 = vector.load %arg13[%c0_69, %c0_70] : memref<256x128xf32, #tpu.memory_space<vmem>>, vector<256x128xf32>
    %cst_71 = arith.constant dense<0.000000e+00> : vector<32x128xf32>
    %185 = tpu.matmul %183, %184, %cst_71 {dimension_numbers = #tpu.dot_dimension_numbers<[1], [0], [0], [1], [0, 0, 1, 1], [], []>} : vector<32x256xf32>, vector<256x128xf32>, vector<32x128xf32> -> vector<32x128xf32>
    %c0_72 = arith.constant 0 : index
    %c0_73 = arith.constant 0 : index
    %186 = vector.load %arg14[%c0_72, %c0_73] : memref<1x128xf32, #tpu.memory_space<vmem>>, vector<1x128xf32>
    %187 = vector.broadcast %186 : vector<1x128xf32> to vector<32x128xf32>
    %188 = arith.addf %185, %187 : vector<32x128xf32>
    %189 = arith.addf %154, %188 : vector<32x128xf32>
    %190 = vector.shape_cast %189 : vector<32x128xf32> to vector<4x8x128xf32>
    %c0_74 = arith.constant 0 : index
    %c0_75 = arith.constant 0 : index
    %c0_76 = arith.constant 0 : index
    %191 = vector.load %arg15[%c0_74, %c0_75, %c0_76] : memref<4x8x128xf32, #tpu.memory_space<vmem>>, vector<4x8x128xf32>
    tpu.vector_store %arg15[%c0_74, %c0_75, %c0_76], %190 {strides = array<i32>} : memref<4x8x128xf32, #tpu.memory_space<vmem>>, vector<4x8x128xf32>,
    return
  }
  func.func @transform_0(%arg0: i32, %arg1: memref<8xi32, #tpu.memory_space<smem>>) -> (i32, i32, i32) {
    %c0_i32 = arith.constant 0 : i32
    %c0_i32_0 = arith.constant 0 : i32
    %c0_i32_1 = arith.constant 0 : i32
    return %arg0, %c0_i32, %c0_i32_0 : i32, i32, i32
  }
  func.func @transform_1(%arg0: i32, %arg1: memref<8xi32, #tpu.memory_space<smem>>) -> (i32, i32) {
    %c0_i32 = arith.constant 0 : i32
    %c0_i32_0 = arith.constant 0 : i32
    %c0_i32_1 = arith.constant 0 : i32
    return %c0_i32, %c0_i32_0 : i32, i32
  }
  func.func @transform_2(%arg0: i32, %arg1: memref<8xi32, #tpu.memory_space<smem>>) -> (i32, i32) {
    %c0_i32 = arith.constant 0 : i32
    %c0_i32_0 = arith.constant 0 : i32
    %c0_i32_1 = arith.constant 0 : i32
    return %c0_i32, %c0_i32_0 : i32, i32
  }
  func.func @transform_3(%arg0: i32, %arg1: memref<8xi32, #tpu.memory_space<smem>>) -> (i32, i32) {
    %c0_i32 = arith.constant 0 : i32
    %c0_i32_0 = arith.constant 0 : i32
    %c0_i32_1 = arith.constant 0 : i32
    return %c0_i32, %c0_i32_0 : i32, i32
  }
  func.func @transform_4(%arg0: i32, %arg1: memref<8xi32, #tpu.memory_space<smem>>) -> (i32, i32) {
    %c0_i32 = arith.constant 0 : i32
    %c0_i32_0 = arith.constant 0 : i32
    %c0_i32_1 = arith.constant 0 : i32
    return %c0_i32, %c0_i32_0 : i32, i32
  }
  func.func @transform_5(%arg0: i32, %arg1: memref<8xi32, #tpu.memory_space<smem>>) -> (i32, i32, i32) {
    %c0_i32 = arith.constant 0 : i32
    %c0_i32_0 = arith.constant 0 : i32
    %c0_i32_1 = arith.constant 0 : i32
    %c0_i32_2 = arith.constant 0 : i32
    return %c0_i32, %c0_i32_0, %c0_i32_1 : i32, i32, i32
  }
  func.func @transform_6(%arg0: i32, %arg1: memref<8xi32, #tpu.memory_space<smem>>) -> (i32, i32) {
    %c0_i32 = arith.constant 0 : i32
    %c0_i32_0 = arith.constant 0 : i32
    %c0_i32_1 = arith.constant 0 : i32
    return %c0_i32, %c0_i32_0 : i32, i32
  }
  func.func @transform_7(%arg0: i32, %arg1: memref<8xi32, #tpu.memory_space<smem>>) -> (i32, i32) {
    %c0_i32 = arith.constant 0 : i32
    %c0_i32_0 = arith.constant 0 : i32
    %c0_i32_1 = arith.constant 0 : i32
    return %c0_i32, %c0_i32_0 : i32, i32
  }
  func.func @transform_8(%arg0: i32, %arg1: memref<8xi32, #tpu.memory_space<smem>>) -> (i32, i32) {
    %c0_i32 = arith.constant 0 : i32
    %c0_i32_0 = arith.constant 0 : i32
    %c0_i32_1 = arith.constant 0 : i32
    return %c0_i32, %c0_i32_0 : i32, i32
  }
  func.func @transform_9(%arg0: i32, %arg1: memref<8xi32, #tpu.memory_space<smem>>) -> (i32, i32) {
    %c0_i32 = arith.constant 0 : i32
    %c0_i32_0 = arith.constant 0 : i32
    %c0_i32_1 = arith.constant 0 : i32
    return %c0_i32, %c0_i32_0 : i32, i32
  }
  func.func @transform_10(%arg0: i32, %arg1: memref<8xi32, #tpu.memory_space<smem>>) -> (i32, i32) {
    %c0_i32 = arith.constant 0 : i32
    %c0_i32_0 = arith.constant 0 : i32
    %c0_i32_1 = arith.constant 0 : i32
    return %c0_i32, %c0_i32_0 : i32, i32
  }
  func.func @transform_11(%arg0: i32, %arg1: memref<8xi32, #tpu.memory_space<smem>>) -> (i32, i32) {
    %c0_i32 = arith.constant 0 : i32
    %c0_i32_0 = arith.constant 0 : i32
    %c0_i32_1 = arith.constant 0 : i32
    return %c0_i32, %c0_i32_0 : i32, i32
  }
  func.func @transform_12(%arg0: i32, %arg1: memref<8xi32, #tpu.memory_space<smem>>) -> (i32, i32) {
    %c0_i32 = arith.constant 0 : i32
    %c0_i32_0 = arith.constant 0 : i32
    %c0_i32_1 = arith.constant 0 : i32
    return %c0_i32, %c0_i32_0 : i32, i32
  }
  func.func @transform_13(%arg0: i32, %arg1: memref<8xi32, #tpu.memory_space<smem>>) -> (i32, i32, i32) {
    %c0_i32 = arith.constant 0 : i32
    %c0_i32_0 = arith.constant 0 : i32
    %c0_i32_1 = arith.constant 0 : i32
    return %arg0, %c0_i32, %c0_i32_0 : i32, i32, i32
  }
}

</mosaic_0001>

<llo_original>
// kernel: tpu_custom_call.1
$region0: #{tpu_custom_call.1}
  #allocation0 [shape = 'u32[]', space=smem, size = 0x4, offset = 0x4, fixed_abs, tag = 'smem constant byte address 0x4 - core index']
  #allocation1 [shape = 'u32[144,128]{1,0:T(1,128)}', space=vmem, size = 0x12000, scoped, tag = 'internal scratch']
  #allocation2 [shape = 's32[1]{0}', space=sflag, size = 0x4, scoped, tag = 'scoped memory for tpu_custom_call.1']
  #allocation3 [shape = 'u8[512]{0}', space=smem, size = 0x200, scoped, tag = 'prefetched SMEM operand 0']
  %s0 = inlined_call_operand.hbm [shape: s32[8], index: 0, kind: input, shape index: {}]
  %s1 = inlined_call_operand.hbm [shape: f32[8,8,128], index: 1, kind: input, shape index: {}]
  %s2 = inlined_call_operand.vmem [shape: f32[1,128], index: 2, kind: input, shape index: {}]
  %s3 = inlined_call_operand.vmem [shape: f32[1,128], index: 3, kind: input, shape index: {}]
  %s4 = inlined_call_operand.hbm [shape: f32[128,384], index: 4, kind: input, shape index: {}]
  %s5 = inlined_call_operand.vmem [shape: f32[1,384], index: 5, kind: input, shape index: {}]
  %s6 = inlined_call_operand.hbm [shape: f32[4,32,128], index: 6, kind: input, shape index: {}]
  %s7 = inlined_call_operand.vmem [shape: f32[1,128], index: 7, kind: input, shape index: {}]
  %s8 = inlined_call_operand.vmem [shape: f32[1,128], index: 8, kind: input, shape index: {}]
  %s9 = inlined_call_operand.vmem [shape: f32[1,128], index: 9, kind: input, shape index: {}]
  %s10 = inlined_call_operand.hbm [shape: f32[128,256], index: 10, kind: input, shape index: {}]
  %s11 = inlined_call_operand.vmem [shape: f32[1,256], index: 11, kind: input, shape index: {}]
  %s12 = inlined_call_operand.hbm [shape: f32[256,128], index: 12, kind: input, shape index: {}]
  %s13 = inlined_call_operand.vmem [shape: f32[1,128], index: 13, kind: input, shape index: {}]
  %s14 = inlined_call_operand.hbm [shape: f32[8,8,128], index: 14, kind: output, shape index: {}]
  %s15 = sld [smem:[#allocation0]]
  $region105: #{tpu_custom_call.1} parent=0
    _
  %s17 = ssub.s32 1, %s15
  %s18 = scalar_select 0, %s17, %s15
  %20 = dma.hbm_to_smem %s0, 16, [#allocation3], [#allocation2]
  %21 = dma.done [#allocation2], 16
  %22 = sfence
  $region1: #{tpu_custom_call.1} parent=0
    #allocation4 [shape = 'u8[32768]{0}', space=vmem, size = 0x8000, scoped, tag = 'input window, operand 1']
    #allocation5 [shape = 's32[2]{0}', space=sflag, size = 0x8, scoped, tag = 'scoped memory for tpu_custom_call.1']
    #allocation6 [shape = 's32[2]{0}', space=sflag, size = 0x8, scoped, tag = 'scoped memory for tpu_custom_call.1']
    #allocation7 [shape = 'u8[196608]{0}', space=vmem, size = 0x30000, scoped, tag = 'input window, operand 4, single buffered']
    #allocation8 [shape = 's32[1]{0}', space=sflag, size = 0x4, scoped, tag = 'scoped memory for tpu_custom_call.1']
    #allocation9 [shape = 'u8[65536]{0}', space=vmem, size = 0x10000, scoped, tag = 'input window, operand 6, single buffered']
    #allocation10 [shape = 'u8[131072]{0}', space=vmem, size = 0x20000, scoped, tag = 'input window, operand 10, single buffered']
    #allocation11 [shape = 's32[1]{0}', space=sflag, size = 0x4, scoped, tag = 'scoped memory for tpu_custom_call.1']
    #allocation12 [shape = 'u8[131072]{0}', space=vmem, size = 0x20000, scoped, tag = 'input window, operand 12, single buffered']
    #allocation13 [shape = 'u8[32768]{0}', space=vmem, size = 0x8000, scoped, tag = 'output window, operand 0']
    %23 = vsyncpa [#allocation5], 0
    %s24 = scalar_lea.sflag [#allocation5], 1
    %25 = vsyncpa %s24, 0
    %26 = vsyncpa [#allocation8], 0
    %27 = vsyncpa [#allocation11], 0
    %28 = vsyncpa [#allocation6], 0
    %s29 = scalar_lea.sflag [#allocation6], 1
    %30 = vsyncpa %s29, 0
    loop: start=0, step=1, limit=4
    $region2: #{tpu_custom_call.1} parent=1 // loop_pre_header
      _
    $region3: #{tpu_custom_call.1} parent=1 // loop_header
      %s32 = sphi 0, %s36
      %p33 = scmp.ge.s32.totalorder %s32, 4
      %s42 = sphi 0, %s44
      %s45 = sphi 0, %s42
      %s46 = sphi 0, %s45
      %s62 = sphi 0, %s46
      %s66 = sphi 0, %s66
      %s68 = sphi 0, %s66
      %s69 = sphi 0, %s68
      %s83 = sphi 0, %s69
      %s87 = sphi 0, %s87
      %s89 = sphi 0, %s87
      %s90 = sphi 0, %s89
      %s104 = sphi 0, %s90
      %s108 = sphi 0, %s108
      %s110 = sphi 0, %s108
      %s111 = sphi 0, %s110
      %s125 = sphi 0, %s111
      %s129 = sphi 0, %s129
      %s131 = sphi 0, %s129
      %s132 = sphi 0, %s131
      %s146 = sphi 0, %s132
      %s150 = sphi 0, %s150
      %s152 = sphi 0, %s150
      %s153 = sphi 0, %s152
      %s167 = sphi 0, %s153
      %s171 = sphi 0, %s171
      %s173 = sphi 0, %s171
      %s174 = sphi 0, %s173
      %s188 = sphi 0, %s174
      %s192 = sphi 0, %s192
      %s194 = sphi 0, %s192
      %s195 = sphi 0, %s194
      %s209 = sphi 0, %s195
      %s213 = sphi 0, %s213
      %s215 = sphi 0, %s213
      %s216 = sphi 0, %s215
      %s230 = sphi 0, %s216
      %s234 = sphi 0, %s234
      %s236 = sphi 0, %s234
      %s237 = sphi 0, %s236
      %s251 = sphi 0, %s237
      %s255 = sphi 0, %s255
      %s257 = sphi 0, %s255
      %s258 = sphi 0, %s257
      %s272 = sphi 0, %s258
      %s276 = sphi 0, %s276
      %s278 = sphi 0, %s276
      %s279 = sphi 0, %s278
      %s293 = sphi 0, %s279
      %s297 = sphi 0, %s297
      %s299 = sphi 0, %s297
      %s300 = sphi 0, %s299
      %s314 = sphi 0, %s300
      %s320 = sphi 0, %s322
      %s323 = sphi 0, %s320
      %s324 = sphi 0, %s323
      %s340 = sphi 0, %s324
    $region4: #{tpu_custom_call.1} parent=1 // loop_header_branch
      %35 = sbr.rel (%p33) target = $region8
    $region5: #{tpu_custom_call.1} parent=1 // loop_body
      %s37 = ssub.s32 %s32, 1
      %s38 = ssub.s32 %s32, 2
      %s39 = sadd.s32 %s32, 1
      %s40 = ssub.s32 %s32, %s39
      %p41 = scmp.eq.s32.totalorder %s40, 0
      %s43 = sadd.s32 %s42, 1
      %s44 = scalar_select %p41, %s42, %s43
      %p47 = pneg %p41
      %p48 = scmp.eq.s32.totalorder %s32, 1
      %p49 = por %p47, %p48
      %p50 = scmp.ne.s32.totalorder %s42, %s45
      %p51 = scmp.eq.s32.totalorder %s32, 0
      %p52 = por %p50, %p51
      %p53 = scmp.ne.s32.totalorder %s42, %s45
      %p54 = scmp.eq.s32.totalorder %s37, 1
      %p55 = por %p53, %p54
      %p56 = scmp.ne.s32.totalorder %s45, %s46
      %p57 = scmp.eq.s32.totalorder %s37, 0
      %p58 = por %p56, %p57
      %p59 = scmp.ne.s32.totalorder %s45, %s46
      %p60 = scmp.eq.s32.totalorder %s38, 1
      %p61 = por %p59, %p60
      %p63 = scmp.ne.s32.totalorder %s46, %s62
      %p64 = scmp.eq.s32.totalorder %s38, 0
      %p65 = por %p63, %p64
      %s67 = sadd.s32 %s66, 1
      %p70 = scmp.eq.s32.totalorder %s32, 1
      %p71 = scmp.ne.s32.totalorder %s66, %s68
      %p72 = scmp.eq.s32.totalorder %s32, 0
      %p73 = por %p71, %p72
      %p74 = scmp.ne.s32.totalorder %s66, %s68
      %p75 = scmp.eq.s32.totalorder %s37, 1
      %p76 = por %p74, %p75
      %p77 = scmp.ne.s32.totalorder %s68, %s69
      %p78 = scmp.eq.s32.totalorder %s37, 0
      %p79 = por %p77, %p78
      %p80 = scmp.ne.s32.totalorder %s68, %s69
      %p81 = scmp.eq.s32.totalorder %s38, 1
      %p82 = por %p80, %p81
      %p84 = scmp.ne.s32.totalorder %s69, %s83
      %p85 = scmp.eq.s32.totalorder %s38, 0
      %p86 = por %p84, %p85
      %s88 = sadd.s32 %s87, 1
      %p91 = scmp.eq.s32.totalorder %s32, 1
      %p92 = scmp.ne.s32.totalorder %s87, %s89
      %p93 = scmp.eq.s32.totalorder %s32, 0
      %p94 = por %p92, %p93
      %p95 = scmp.ne.s32.totalorder %s87, %s89
      %p96 = scmp.eq.s32.totalorder %s37, 1
      %p97 = por %p95, %p96
      %p98 = scmp.ne.s32.totalorder %s89, %s90
      %p99 = scmp.eq.s32.totalorder %s37, 0
      %p100 = por %p98, %p99
      %p101 = scmp.ne.s32.totalorder %s89, %s90
      %p102 = scmp.eq.s32.totalorder %s38, 1
      %p103 = por %p101, %p102
      %p105 = scmp.ne.s32.totalorder %s90, %s104
      %p106 = scmp.eq.s32.totalorder %s38, 0
      %p107 = por %p105, %p106
      %s109 = sadd.s32 %s108, 1
      %p112 = scmp.eq.s32.totalorder %s32, 1
      %p113 = scmp.ne.s32.totalorder %s108, %s110
      %p114 = scmp.eq.s32.totalorder %s32, 0
      %p115 = por %p113, %p114
      %p116 = scmp.ne.s32.totalorder %s108, %s110
      %p117 = scmp.eq.s32.totalorder %s37, 1
      %p118 = por %p116, %p117
      %p119 = scmp.ne.s32.totalorder %s110, %s111
      %p120 = scmp.eq.s32.totalorder %s37, 0
      %p121 = por %p119, %p120
      %p122 = scmp.ne.s32.totalorder %s110, %s111
      %p123 = scmp.eq.s32.totalorder %s38, 1
      %p124 = por %p122, %p123
      %p126 = scmp.ne.s32.totalorder %s111, %s125
      %p127 = scmp.eq.s32.totalorder %s38, 0
      %p128 = por %p126, %p127
      %s130 = sadd.s32 %s129, 1
      %p133 = scmp.eq.s32.totalorder %s32, 1
      %p134 = scmp.ne.s32.totalorder %s129, %s131
      %p135 = scmp.eq.s32.totalorder %s32, 0
      %p136 = por %p134, %p135
      %p137 = scmp.ne.s32.totalorder %s129, %s131
      %p138 = scmp.eq.s32.totalorder %s37, 1
      %p139 = por %p137, %p138
      %p140 = scmp.ne.s32.totalorder %s131, %s132
      %p141 = scmp.eq.s32.totalorder %s37, 0
      %p142 = por %p140, %p141
      %p143 = scmp.ne.s32.totalorder %s131, %s132
      %p144 = scmp.eq.s32.totalorder %s38, 1
      %p145 = por %p143, %p144
      %p147 = scmp.ne.s32.totalorder %s132, %s146
      %p148 = scmp.eq.s32.totalorder %s38, 0
      %p149 = por %p147, %p148
      %s151 = sadd.s32 %s150, 1
      %p154 = scmp.eq.s32.totalorder %s32, 1
      %p155 = scmp.ne.s32.totalorder %s150, %s152
      %p156 = scmp.eq.s32.totalorder %s32, 0
      %p157 = por %p155, %p156
      %p158 = scmp.ne.s32.totalorder %s150, %s152
      %p159 = scmp.eq.s32.totalorder %s37, 1
      %p160 = por %p158, %p159
      %p161 = scmp.ne.s32.totalorder %s152, %s153
      %p162 = scmp.eq.s32.totalorder %s37, 0
      %p163 = por %p161, %p162
      %p164 = scmp.ne.s32.totalorder %s152, %s153
      %p165 = scmp.eq.s32.totalorder %s38, 1
      %p166 = por %p164, %p165
      %p168 = scmp.ne.s32.totalorder %s153, %s167
      %p169 = scmp.eq.s32.totalorder %s38, 0
      %p170 = por %p168, %p169
      %s172 = sadd.s32 %s171, 1
      %p175 = scmp.eq.s32.totalorder %s32, 1
      %p176 = scmp.ne.s32.totalorder %s171, %s173
      %p177 = scmp.eq.s32.totalorder %s32, 0
      %p178 = por %p176, %p177
      %p179 = scmp.ne.s32.totalorder %s171, %s173
      %p180 = scmp.eq.s32.totalorder %s37, 1
      %p181 = por %p179, %p180
      %p182 = scmp.ne.s32.totalorder %s173, %s174
      %p183 = scmp.eq.s32.totalorder %s37, 0
      %p184 = por %p182, %p183
      %p185 = scmp.ne.s32.totalorder %s173, %s174
      %p186 = scmp.eq.s32.totalorder %s38, 1
      %p187 = por %p185, %p186
      %p189 = scmp.ne.s32.totalorder %s174, %s188
      %p190 = scmp.eq.s32.totalorder %s38, 0
      %p191 = por %p189, %p190
      %s193 = sadd.s32 %s192, 1
      %p196 = scmp.eq.s32.totalorder %s32, 1
      %p197 = scmp.ne.s32.totalorder %s192, %s194
      %p198 = scmp.eq.s32.totalorder %s32, 0
      %p199 = por %p197, %p198
      %p200 = scmp.ne.s32.totalorder %s192, %s194
      %p201 = scmp.eq.s32.totalorder %s37, 1
      %p202 = por %p200, %p201
      %p203 = scmp.ne.s32.totalorder %s194, %s195
      %p204 = scmp.eq.s32.totalorder %s37, 0
      %p205 = por %p203, %p204
      %p206 = scmp.ne.s32.totalorder %s194, %s195
      %p207 = scmp.eq.s32.totalorder %s38, 1
      %p208 = por %p206, %p207
      %p210 = scmp.ne.s32.totalorder %s195, %s209
      %p211 = scmp.eq.s32.totalorder %s38, 0
      %p212 = por %p210, %p211
      %s214 = sadd.s32 %s213, 1
      %p217 = scmp.eq.s32.totalorder %s32, 1
      %p218 = scmp.ne.s32.totalorder %s213, %s215
      %p219 = scmp.eq.s32.totalorder %s32, 0
      %p220 = por %p218, %p219
      %p221 = scmp.ne.s32.totalorder %s213, %s215
      %p222 = scmp.eq.s32.totalorder %s37, 1
      %p223 = por %p221, %p222
      %p224 = scmp.ne.s32.totalorder %s215, %s216
      %p225 = scmp.eq.s32.totalorder %s37, 0
      %p226 = por %p224, %p225
      %p227 = scmp.ne.s32.totalorder %s215, %s216
      %p228 = scmp.eq.s32.totalorder %s38, 1
      %p229 = por %p227, %p228
      %p231 = scmp.ne.s32.totalorder %s216, %s230
      %p232 = scmp.eq.s32.totalorder %s38, 0
      %p233 = por %p231, %p232
      %s235 = sadd.s32 %s234, 1
      %p238 = scmp.eq.s32.totalorder %s32, 1
      %p239 = scmp.ne.s32.totalorder %s234, %s236
      %p240 = scmp.eq.s32.totalorder %s32, 0
      %p241 = por %p239, %p240
      %p242 = scmp.ne.s32.totalorder %s234, %s236
      %p243 = scmp.eq.s32.totalorder %s37, 1
      %p244 = por %p242, %p243
      %p245 = scmp.ne.s32.totalorder %s236, %s237
      %p246 = scmp.eq.s32.totalorder %s37, 0
      %p247 = por %p245, %p246
      %p248 = scmp.ne.s32.totalorder %s236, %s237
      %p249 = scmp.eq.s32.totalorder %s38, 1
      %p250 = por %p248, %p249
      %p252 = scmp.ne.s32.totalorder %s237, %s251
      %p253 = scmp.eq.s32.totalorder %s38, 0
      %p254 = por %p252, %p253
      %s256 = sadd.s32 %s255, 1
      %p259 = scmp.eq.s32.totalorder %s32, 1
      %p260 = scmp.ne.s32.totalorder %s255, %s257
      %p261 = scmp.eq.s32.totalorder %s32, 0
      %p262 = por %p260, %p261
      %p263 = scmp.ne.s32.totalorder %s255, %s257
      %p264 = scmp.eq.s32.totalorder %s37, 1
      %p265 = por %p263, %p264
      %p266 = scmp.ne.s32.totalorder %s257, %s258
      %p267 = scmp.eq.s32.totalorder %s37, 0
      %p268 = por %p266, %p267
      %p269 = scmp.ne.s32.totalorder %s257, %s258
      %p270 = scmp.eq.s32.totalorder %s38, 1
      %p271 = por %p269, %p270
      %p273 = scmp.ne.s32.totalorder %s258, %s272
      %p274 = scmp.eq.s32.totalorder %s38, 0
      %p275 = por %p273, %p274
      %s277 = sadd.s32 %s276, 1
      %p280 = scmp.eq.s32.totalorder %s32, 1
      %p281 = scmp.ne.s32.totalorder %s276, %s278
      %p282 = scmp.eq.s32.totalorder %s32, 0
      %p283 = por %p281, %p282
      %p284 = scmp.ne.s32.totalorder %s276, %s278
      %p285 = scmp.eq.s32.totalorder %s37, 1
      %p286 = por %p284, %p285
      %p287 = scmp.ne.s32.totalorder %s278, %s279
      %p288 = scmp.eq.s32.totalorder %s37, 0
      %p289 = por %p287, %p288
      %p290 = scmp.ne.s32.totalorder %s278, %s279
      %p291 = scmp.eq.s32.totalorder %s38, 1
      %p292 = por %p290, %p291
      %p294 = scmp.ne.s32.totalorder %s279, %s293
      %p295 = scmp.eq.s32.totalorder %s38, 0
      %p296 = por %p294, %p295
      %s298 = sadd.s32 %s297, 1
      %p301 = scmp.eq.s32.totalorder %s32, 1
      %p302 = scmp.ne.s32.totalorder %s297, %s299
      %p303 = scmp.eq.s32.totalorder %s32, 0
      %p304 = por %p302, %p303
      %p305 = scmp.ne.s32.totalorder %s297, %s299
      %p306 = scmp.eq.s32.totalorder %s37, 1
      %p307 = por %p305, %p306
      %p308 = scmp.ne.s32.totalorder %s299, %s300
      %p309 = scmp.eq.s32.totalorder %s37, 0
      %p310 = por %p308, %p309
      %p311 = scmp.ne.s32.totalorder %s299, %s300
      %p312 = scmp.eq.s32.totalorder %s38, 1
      %p313 = por %p311, %p312
      %p315 = scmp.ne.s32.totalorder %s300, %s314
      %p316 = scmp.eq.s32.totalorder %s38, 0
      %p317 = por %p315, %p316
      %s318 = ssub.s32 %s32, %s39
      %p319 = scmp.eq.s32.totalorder %s318, 0
      %s321 = sadd.s32 %s320, 1
      %s322 = scalar_select %p319, %s320, %s321
      %p325 = pneg %p319
      %p326 = scmp.eq.s32.totalorder %s32, 1
      %p327 = por %p325, %p326
      %p328 = scmp.ne.s32.totalorder %s320, %s323
      %p329 = scmp.eq.s32.totalorder %s32, 0
      %p330 = por %p328, %p329
      %p331 = scmp.ne.s32.totalorder %s320, %s323
      %p332 = scmp.eq.s32.totalorder %s37, 1
      %p333 = por %p331, %p332
      %p334 = scmp.ne.s32.totalorder %s323, %s324
      %p335 = scmp.eq.s32.totalorder %s37, 0
      %p336 = por %p334, %p335
      %p337 = scmp.ne.s32.totalorder %s323, %s324
      %p338 = scmp.eq.s32.totalorder %s38, 1
      %p339 = por %p337, %p338
      %p341 = scmp.ne.s32.totalorder %s324, %s340
      %p342 = scmp.eq.s32.totalorder %s38, 0
      %p343 = por %p341, %p342
      %p344 = scmp.le.s32.totalorder 1, %s32
      %p345 = scmp.lt.s32.totalorder %s32, 3
      %p346 = pnand %p344, %p345
      %p347 = pneg %p346
      // Predicated region
      $region9: #{tpu_custom_call.1} parent=5 // pred_check
        _
      $region10: #{tpu_custom_call.1} parent=5 // pred_check_branch
        %349 = sbr.rel (%p346) target = $region12
      $region11: #{tpu_custom_call.1} parent=5 // pred_region
        %s350 = ssub.s32 %s32, 1
        // Predicated region
        $region13: #{tpu_custom_call.1} parent=11 // pred_check
          %p351 = pneg %p79
        $region14: #{tpu_custom_call.1} parent=11 // pred_check_branch
          %353 = sbr.rel (%p351) target = $region16
        $region15: #{tpu_custom_call.1} parent=11 // pred_region
          _
        $region16: #{tpu_custom_call.1} parent=11 // pred_fallthru
          _
        // Predicated region
        $region17: #{tpu_custom_call.1} parent=11 // pred_check
          %p354 = pneg %p100
        $region18: #{tpu_custom_call.1} parent=11 // pred_check_branch
          %356 = sbr.rel (%p354) target = $region20
        $region19: #{tpu_custom_call.1} parent=11 // pred_region
          _
        $region20: #{tpu_custom_call.1} parent=11 // pred_fallthru
          _
        // Predicated region
        $region21: #{tpu_custom_call.1} parent=11 // pred_check
          %p357 = pneg %p121
        $region22: #{tpu_custom_call.1} parent=11 // pred_check_branch
          %359 = sbr.rel (%p357) target = $region24
        $region23: #{tpu_custom_call.1} parent=11 // pred_region
          %s361 = ssub.s32 6144, 6144
          %362 = vsyncadd [#allocation8], %s361
          %s363 = sshll.u32 [#allocation7], 4
          %s364 = int_to_ptr.vmem [resolvable:$true] %s363
          %369 = dma.hbm_to_vmem [thread:$0]  %s4, 6144, %s364, [#allocation8], 384, 384, 24
        $region24: #{tpu_custom_call.1} parent=11 // pred_fallthru
          _
        // Predicated region
        $region25: #{tpu_custom_call.1} parent=11 // pred_check
          %p370 = pneg %p142
        $region26: #{tpu_custom_call.1} parent=11 // pred_check_branch
          %372 = sbr.rel (%p370) target = $region28
        $region27: #{tpu_custom_call.1} parent=11 // pred_region
          _
        $region28: #{tpu_custom_call.1} parent=11 // pred_fallthru
          _
        // Predicated region
        $region29: #{tpu_custom_call.1} parent=11 // pred_check
          %p373 = pneg %p163
        $region30: #{tpu_custom_call.1} parent=11 // pred_check_branch
          %375 = sbr.rel (%p373) target = $region32
        $region31: #{tpu_custom_call.1} parent=11 // pred_region
          %s377 = ssub.s32 2048, 2048
          %378 = vsyncadd [#allocation8], %s377
          %s379 = sshll.u32 [#allocation9], 4
          %s380 = int_to_ptr.vmem [resolvable:$true] %s379
          %385 = dma.hbm_to_vmem [thread:$0]  %s6, 2048, %s380, [#allocation8], 128, 128, 8
        $region32: #{tpu_custom_call.1} parent=11 // pred_fallthru
          _
        // Predicated region
        $region33: #{tpu_custom_call.1} parent=11 // pred_check
          %p386 = pneg %p184
        $region34: #{tpu_custom_call.1} parent=11 // pred_check_branch
          %388 = sbr.rel (%p386) target = $region36
        $region35: #{tpu_custom_call.1} parent=11 // pred_region
          _
        $region36: #{tpu_custom_call.1} parent=11 // pred_fallthru
          _
        // Predicated region
        $region37: #{tpu_custom_call.1} parent=11 // pred_check
          %p389 = pneg %p205
        $region38: #{tpu_custom_call.1} parent=11 // pred_check_branch
          %391 = sbr.rel (%p389) target = $region40
        $region39: #{tpu_custom_call.1} parent=11 // pred_region
          _
        $region40: #{tpu_custom_call.1} parent=11 // pred_fallthru
          _
        // Predicated region
        $region41: #{tpu_custom_call.1} parent=11 // pred_check
          %p392 = pneg %p226
        $region42: #{tpu_custom_call.1} parent=11 // pred_check_branch
          %394 = sbr.rel (%p392) target = $region44
        $region43: #{tpu_custom_call.1} parent=11 // pred_region
          _
        $region44: #{tpu_custom_call.1} parent=11 // pred_fallthru
          _
        // Predicated region
        $region45: #{tpu_custom_call.1} parent=11 // pred_check
          %p395 = pneg %p247
        $region46: #{tpu_custom_call.1} parent=11 // pred_check_branch
          %397 = sbr.rel (%p395) target = $region48
        $region47: #{tpu_custom_call.1} parent=11 // pred_region
          %s399 = ssub.s32 4096, 4096
          %400 = vsyncadd [#allocation11], %s399
          %s401 = sshll.u32 [#allocation10], 4
          %s402 = int_to_ptr.vmem [resolvable:$true] %s401
          %407 = dma.hbm_to_vmem [thread:$0]  %s10, 4096, %s402, [#allocation11], 256, 256, 16
        $region48: #{tpu_custom_call.1} parent=11 // pred_fallthru
          _
        // Predicated region
        $region49: #{tpu_custom_call.1} parent=11 // pred_check
          %p408 = pneg %p268
        $region50: #{tpu_custom_call.1} parent=11 // pred_check_branch
          %410 = sbr.rel (%p408) target = $region52
        $region51: #{tpu_custom_call.1} parent=11 // pred_region
          _
        $region52: #{tpu_custom_call.1} parent=11 // pred_fallthru
          _
        // Predicated region
        $region53: #{tpu_custom_call.1} parent=11 // pred_check
          %p411 = pneg %p289
        $region54: #{tpu_custom_call.1} parent=11 // pred_check_branch
          %413 = sbr.rel (%p411) target = $region56
        $region55: #{tpu_custom_call.1} parent=11 // pred_region
          %s415 = ssub.s32 4096, 4096
          %416 = vsyncadd [#allocation11], %s415
          %s417 = sshll.u32 [#allocation12], 4
          %s418 = int_to_ptr.vmem [resolvable:$true] %s417
          %423 = dma.hbm_to_vmem [thread:$0]  %s12, 4096, %s418, [#allocation11], 128, 128, 8
        $region56: #{tpu_custom_call.1} parent=11 // pred_fallthru
          _
        // Predicated region
        $region57: #{tpu_custom_call.1} parent=11 // pred_check
          %p424 = pneg %p310
        $region58: #{tpu_custom_call.1} parent=11 // pred_check_branch
          %426 = sbr.rel (%p424) target = $region60
        $region59: #{tpu_custom_call.1} parent=11 // pred_region
          _
        $region60: #{tpu_custom_call.1} parent=11 // pred_fallthru
          _
      $region12: #{tpu_custom_call.1} parent=5 // pred_fallthru
        _
      %p427 = scmp.lt.s32.totalorder %s32, 2
      // Predicated region
      $region61: #{tpu_custom_call.1} parent=5 // pred_check
        %p428 = pneg %p427
      $region62: #{tpu_custom_call.1} parent=5 // pred_check_branch
        %430 = sbr.rel (%p428) target = $region64
      $region63: #{tpu_custom_call.1} parent=5 // pred_region
        // Predicated region
        $region65: #{tpu_custom_call.1} parent=63 // pred_check
          %p431 = pneg %p52
        $region66: #{tpu_custom_call.1} parent=63 // pred_check_branch
          %433 = sbr.rel (%p431) target = $region68
        $region67: #{tpu_custom_call.1} parent=63 // pred_region
          %s434 = sand.u32 %s42, 1
          %s435 = scalar_lea.sflag [#allocation5], %s434
          %s436 = sand.u32 %s42, 1
          %s437 = smul.addr %s436, 32
          %s438 = scalar_lea.vmem [#allocation4], %s437
          %s439 = smul.u32 4, %s32
          %s441 = ssub.s32 512, 512
          %442 = vsyncadd %s435, %s441
          %s443 = smul.addr %s439, 128
          %s444 = scalar_lea.hbm %s1, %s443
          %s445 = sshll.u32 %s438, 4
          %s446 = int_to_ptr.vmem [resolvable:$true] %s445
          %451 = dma.hbm_to_vmem [thread:$0]  %s444, 512, %s446, %s435, 128, 128, 8
        $region68: #{tpu_custom_call.1} parent=63 // pred_fallthru
          _
      $region64: #{tpu_custom_call.1} parent=5 // pred_fallthru
        _
      %p452 = scmp.le.s32.totalorder 1, %s32
      %p453 = scmp.lt.s32.totalorder %s32, 3
      %p454 = pnand %p452, %p453
      %p455 = pneg %p454
      // Predicated region
      $region69: #{tpu_custom_call.1} parent=5 // pred_check
        _
      $region70: #{tpu_custom_call.1} parent=5 // pred_check_branch
        %457 = sbr.rel (%p454) target = $region72
      $region71: #{tpu_custom_call.1} parent=5 // pred_region
        %s458 = ssub.s32 %s32, 1
        %s459 = sand.u32 %s45, 1
        %s460 = scalar_lea.sflag [#allocation5], %s459
        %s461 = sand.u32 %s45, 1
        %s462 = smul.addr %s461, 32
        %s463 = scalar_lea.vmem [#allocation4], %s462
        // Predicated region
        $region73: #{tpu_custom_call.1} parent=71 // pred_check
          %p464 = pneg %p58
        $region74: #{tpu_custom_call.1} parent=71 // pred_check_branch
          %466 = sbr.rel (%p464) target = $region76
        $region75: #{tpu_custom_call.1} parent=71 // pred_region
          %467 = dma.done %s460, 512
        $region76: #{tpu_custom_call.1} parent=71 // pred_fallthru
          _
        // Predicated region
        $region77: #{tpu_custom_call.1} parent=71 // pred_check
          %p468 = pneg %p121
        $region78: #{tpu_custom_call.1} parent=71 // pred_check_branch
          %470 = sbr.rel (%p468) target = $region80
        $region79: #{tpu_custom_call.1} parent=71 // pred_region
          %471 = dma.done [#allocation8], 6144
        $region80: #{tpu_custom_call.1} parent=71 // pred_fallthru
          _
        // Predicated region
        $region81: #{tpu_custom_call.1} parent=71 // pred_check
          %p472 = pneg %p163
        $region82: #{tpu_custom_call.1} parent=71 // pred_check_branch
          %474 = sbr.rel (%p472) target = $region84
        $region83: #{tpu_custom_call.1} parent=71 // pred_region
          %475 = dma.done [#allocation8], 2048
        $region84: #{tpu_custom_call.1} parent=71 // pred_fallthru
          _
        // Predicated region
        $region85: #{tpu_custom_call.1} parent=71 // pred_check
          %p476 = pneg %p247
        $region86: #{tpu_custom_call.1} parent=71 // pred_check_branch
          %478 = sbr.rel (%p476) target = $region88
        $region87: #{tpu_custom_call.1} parent=71 // pred_region
          %479 = dma.done [#allocation11], 4096
        $region88: #{tpu_custom_call.1} parent=71 // pred_fallthru
          _
        // Predicated region
        $region89: #{tpu_custom_call.1} parent=71 // pred_check
          %p480 = pneg %p289
        $region90: #{tpu_custom_call.1} parent=71 // pred_check_branch
          %482 = sbr.rel (%p480) target = $region92
        $region91: #{tpu_custom_call.1} parent=71 // pred_region
          %483 = dma.done [#allocation11], 4096
        $region92: #{tpu_custom_call.1} parent=71 // pred_fallthru
          _
        %s484 = sand.u32 %s45, 1
        %s485 = scalar_lea.sflag [#allocation5], %s484
        %s486 = sand.u32 %s45, 1
        %s487 = smul.addr %s486, 32
        %s488 = scalar_lea.vmem [#allocation4], %s487
        %p489 = pneg %p58
        %p490 = pneg %p55
        %p491 = pneg %p79
        %p492 = pneg %p76
        %p493 = pneg %p100
        %p494 = pneg %p97
        %p495 = pneg %p121
        %p496 = pneg %p118
        %p497 = pneg %p142
        %p498 = pneg %p139
        %p499 = pneg %p163
        %p500 = pneg %p160
        %p501 = pneg %p184
        %p502 = pneg %p181
        %p503 = pneg %p205
        %p504 = pneg %p202
        %p505 = pneg %p226
        %p506 = pneg %p223
        %p507 = pneg %p247
        %p508 = pneg %p244
        %p509 = pneg %p268
        %p510 = pneg %p265
        %p511 = pneg %p289
        %p512 = pneg %p286
        %p513 = pneg %p310
        %p514 = pneg %p307
        %p515 = pneg %p336
        %p516 = pneg %p333
        %s517 = sand.u32 %s323, 1
        %s518 = scalar_lea.sflag [#allocation6], %s517
        %s519 = sand.u32 %s323, 1
        %s520 = smul.addr %s519, 32
        %s521 = scalar_lea.vmem [#allocation13], %s520
        %s522 = smul.u32 4, %s37
        %s523 = smul.u32 4, %s37
        %v524 = vld [vmem:[%s463] sm:$0xff]
        %v525 = vld [vmem:[%s463 + $0x8] sm:$0xff]
        %v526 = vld [vmem:[%s463 + $0x10] sm:$0xff]
        %v527 = vld [vmem:[%s463 + $0x18] sm:$0xff]
        %v528 = vld [vmem:[%s2] sm:$0x1]
        %v529 = vld [vmem:[%s3] sm:$0x1]
        %530 = vadd.xlane.f32.xlu0 %v524
        %v531 = vpop.xlane.xlu0 %530
        %532 = vadd.xlane.f32.xlu0 %v525
        %v533 = vpop.xlane.xlu0 %532
        %534 = vadd.xlane.f32.xlu0 %v526
        %v535 = vpop.xlane.xlu0 %534
        %536 = vadd.xlane.f32.xlu0 %v527
        %v537 = vpop.xlane.xlu0 %536
        %v538 = vrcp.pop 128.0
        %v539 = vmul.f32 %v531, %v538
        %v540 = vmul.f32 %v533, %v538
        %v541 = vmul.f32 %v535, %v538
        %v542 = vmul.f32 %v537, %v538
        %v543 = vsub.f32 %v524, %v539
        %v544 = vsub.f32 %v525, %v540
        %v545 = vsub.f32 %v526, %v541
        %v546 = vsub.f32 %v527, %v542
        %v547 = vmul.f32 %v543, %v543
        %v548 = vmul.f32 %v544, %v544
        %v549 = vmul.f32 %v545, %v545
        %v550 = vmul.f32 %v546, %v546
        %551 = vadd.xlane.f32.xlu0 %v547
        %v552 = vpop.xlane.xlu0 %551
        %553 = vadd.xlane.f32.xlu0 %v548
        %v554 = vpop.xlane.xlu0 %553
        %555 = vadd.xlane.f32.xlu0 %v549
        %v556 = vpop.xlane.xlu0 %555
        %557 = vadd.xlane.f32.xlu0 %v550
        %v558 = vpop.xlane.xlu0 %557
        %v559 = vmul.f32 %v552, %v538
        %v560 = vmul.f32 %v554, %v538
        %v561 = vmul.f32 %v556, %v538
        %v562 = vmul.f32 %v558, %v538
        %v563 = vadd.f32 %v559, 1e-05
        %v564 = vadd.f32 %v560, 1e-05
        %v565 = vadd.f32 %v561, 1e-05
        %v566 = vadd.f32 %v562, 1e-05
        %v567 = vrsqrt.pop %v563
        %v568 = vrsqrt.pop %v564
        %v569 = vrsqrt.pop %v565
        %v570 = vrsqrt.pop %v566
        %v571 = vmul.f32 %v543, %v567
        %v572 = vmul.f32 %v544, %v568
        %v573 = vmul.f32 %v545, %v569
        %v574 = vmul.f32 %v546, %v570
        %v576 = vlaneseq
        %v577 = vshrl.u32 %v576, 7
        %v578 = vsub.s32 0, %v577
        %v579 = vrot.slane %v528, %v578
        %v581 = vmul.f32 %v571, %v579
        %v582 = vmul.f32 %v572, %v579
        %v583 = vmul.f32 %v573, %v579
        %v584 = vmul.f32 %v574, %v579
        %v586 = vlaneseq
        %v587 = vshrl.u32 %v586, 7
        %v588 = vsub.s32 0, %v587
        %v589 = vrot.slane %v529, %v588
        %v591 = vadd.f32 %v581, %v589
        %v592 = vadd.f32 %v582, %v589
        %v593 = vadd.f32 %v583, %v589
        %v594 = vadd.f32 %v584, %v589
        %v595 = vld [vmem:[#allocation7] sm:$0xff]
        %v596 = vld [vmem:[#allocation7 + $0x8] sm:$0xff]
        %v597 = vld [vmem:[#allocation7 + $0x10] sm:$0xff]
        %v598 = vld [vmem:[#allocation7 + $0x18] sm:$0xff]
        %v599 = vld [vmem:[#allocation7 + $0x20] sm:$0xff]
        %v600 = vld [vmem:[#allocation7 + $0x28] sm:$0xff]
        %v601 = vld [vmem:[#allocation7 + $0x30] sm:$0xff]
        %v602 = vld [vmem:[#allocation7 + $0x38] sm:$0xff]
        %v603 = vld [vmem:[#allocation7 + $0x40] sm:$0xff]
        %v604 = vld [vmem:[#allocation7 + $0x48] sm:$0xff]
        %v605 = vld [vmem:[#allocation7 + $0x50] sm:$0xff]
        %v606 = vld [vmem:[#allocation7 + $0x58] sm:$0xff]
        %v607 = vld [vmem:[#allocation7 + $0x60] sm:$0xff]
        %v608 = vld [vmem:[#allocation7 + $0x68] sm:$0xff]
        %v609 = vld [vmem:[#allocation7 + $0x70] sm:$0xff]
        %v610 = vld [vmem:[#allocation7 + $0x78] sm:$0xff]
        %v611 = vld [vmem:[#allocation7 + $0x80] sm:$0xff]
        %v612 = vld [vmem:[#allocation7 + $0x88] sm:$0xff]
        %v613 = vld [vmem:[#allocation7 + $0x90] sm:$0xff]
        %v614 = vld [vmem:[#allocation7 + $0x98] sm:$0xff]
        %v615 = vld [vmem:[#allocation7 + $0xa0] sm:$0xff]
        %v616 = vld [vmem:[#allocation7 + $0xa8] sm:$0xff]
        %v617 = vld [vmem:[#allocation7 + $0xb0] sm:$0xff]
        %v618 = vld [vmem:[#allocation7 + $0xb8] sm:$0xff]
        %v619 = vld [vmem:[#allocation7 + $0xc0] sm:$0xff]
        %v620 = vld [vmem:[#allocation7 + $0xc8] sm:$0xff]
        %v621 = vld [vmem:[#allocation7 + $0xd0] sm:$0xff]
        %v622 = vld [vmem:[#allocation7 + $0xd8] sm:$0xff]
        %v623 = vld [vmem:[#allocation7 + $0xe0] sm:$0xff]
        %v624 = vld [vmem:[#allocation7 + $0xe8] sm:$0xff]
        %v625 = vld [vmem:[#allocation7 + $0xf0] sm:$0xff]
        %v626 = vld [vmem:[#allocation7 + $0xf8] sm:$0xff]
        %v627 = vld [vmem:[#allocation7 + $0x100] sm:$0xff]
        %v628 = vld [vmem:[#allocation7 + $0x108] sm:$0xff]
        %v629 = vld [vmem:[#allocation7 + $0x110] sm:$0xff]
        %v630 = vld [vmem:[#allocation7 + $0x118] sm:$0xff]
        %v631 = vld [vmem:[#allocation7 + $0x120] sm:$0xff]
        %v632 = vld [vmem:[#allocation7 + $0x128] sm:$0xff]
        %v633 = vld [vmem:[#allocation7 + $0x130] sm:$0xff]
        %v634 = vld [vmem:[#allocation7 + $0x138] sm:$0xff]
        %v635 = vld [vmem:[#allocation7 + $0x140] sm:$0xff]
        %v636 = vld [vmem:[#allocation7 + $0x148] sm:$0xff]
        %v637 = vld [vmem:[#allocation7 + $0x150] sm:$0xff]
        %v638 = vld [vmem:[#allocation7 + $0x158] sm:$0xff]
        %v639 = vld [vmem:[#allocation7 + $0x160] sm:$0xff]
        %v640 = vld [vmem:[#allocation7 + $0x168] sm:$0xff]
        %v641 = vld [vmem:[#allocation7 + $0x170] sm:$0xff]
        %v642 = vld [vmem:[#allocation7 + $0x178] sm:$0xff]
        %v643 = vld [vmem:[%s5] sm:$0x7]
        %v645 = vlaneseq
        %v646 = vshrl.u32 %v645, 7
        %v647 = vsub.s32 0, %v646
        %v648 = vrot.slane %v643, %v647
        %v649 = vlaneseq
        %v650 = vshrl.u32 %v649, 7
        %v651 = vsub.s32 1, %v650
        %v652 = vrot.slane %v643, %v651
        %v653 = vlaneseq
        %v654 = vshrl.u32 %v653, 7
        %v655 = vsub.s32 2, %v654
        %v656 = vrot.slane %v643, %v655
        %660 = vmatprep.subr.mxu0 %v596
        %661 = vmatpush1.msra.mxu0 %v595
        %662 = vmatprep.subr.mxu0 %v599
        %663 = vmatpush1.msra.mxu0 %v598
        %664 = vmatprep.subr.mxu0 %v602
        %665 = vmatpush1.msra.mxu0 %v601
        %666 = vmatprep.subr.mxu0 %v605
        %667 = vmatpush1.msra.mxu0 %v604
        %668 = vmatprep.subr.mxu0 %v608
        %669 = vmatpush1.msra.mxu0 %v607
        %670 = vmatprep.subr.mxu0 %v611
        %671 = vmatpush1.msra.mxu0 %v610
        %672 = vmatprep.subr.mxu0 %v614
        %673 = vmatpush1.msra.mxu0 %v613
        %674 = vmatprep.subr.mxu0 %v617
        %675 = vmatpush1.msra.mxu0 %v616
        %676 = vmatprep.subr.mxu0 %v620
        %677 = vmatpush1.msra.mxu0 %v619
        %678 = vmatprep.subr.mxu0 %v623
        %679 = vmatpush1.msra.mxu0 %v622
        %680 = vmatprep.subr.mxu0 %v626
        %681 = vmatpush1.msra.mxu0 %v625
        %682 = vmatprep.subr.mxu0 %v629
        %683 = vmatpush1.msra.mxu0 %v628
        %684 = vmatprep.subr.mxu0 %v632
        %685 = vmatpush1.msra.mxu0 %v631
        %686 = vmatprep.subr.mxu0 %v635
        %687 = vmatpush1.msra.mxu0 %v634
        %688 = vmatprep.subr.mxu0 %v638
        %689 = vmatpush1.msra.mxu0 %v637
        %690 = vmatprep.subr.mxu0 %v641
        %691 = vmatpush1.msra.mxu0 %v640
        %692 = vmatprep.subr.mxu0 0.0
        %693 = vmatpush1.msra.mxu0 0.0
        %694 = vmatprep.subr.mxu0 0.0
        %695 = vmatpush1.msra.mxu0 0.0
        %696 = vmatprep.subr.mxu0 0.0
        %697 = vmatpush1.msra.mxu0 0.0
        %698 = vmatprep.subr.mxu0 0.0
        %699 = vmatpush1.msra.mxu0 0.0
        %700 = vmatprep.subr.mxu0 0.0
        %701 = vmatpush1.msra.mxu0 0.0
        %702 = vmatprep.subr.mxu0 0.0
        %703 = vmatpush1.msra.mxu0 0.0
        %704 = vmatprep.subr.mxu0 0.0
        %705 = vmatpush1.msra.mxu0 0.0
        %706 = vmatprep.subr.mxu0 0.0
        %707 = vmatpush1.msra.mxu0 0.0
        %708 = vmatprep.subr.mxu0 0.0
        %709 = vmatpush1.msra.mxu0 0.0
        %710 = vmatprep.subr.mxu0 0.0
        %711 = vmatpush1.msra.mxu0 0.0
        %712 = vmatprep.subr.mxu0 0.0
        %713 = vmatpush1.msra.mxu0 0.0
        %714 = vmatprep.subr.mxu0 0.0
        %715 = vmatpush1.msra.mxu0 0.0
        %716 = vmatprep.subr.mxu0 0.0
        %717 = vmatpush1.msra.mxu0 0.0
        %718 = vmatprep.subr.mxu0 0.0
        %719 = vmatpush1.msra.mxu0 0.0
        %720 = vmatprep.subr.mxu0 0.0
        %721 = vmatpush1.msra.mxu0 0.0
        %722 = vmatprep.subr.mxu0 0.0
        %723 = vmatpush1.msra.mxu0 0.0
        %724 = vmatprep.mubr.f32.mxu0 0.0
        %725 = vmatmul.mubr.f32.gmra.mrb[0].mxu0 %v591
        %v726 = vpop.f32.mrb[0].mxu0
        %v727 = vadd.f32 %v648, %v726
        %v728 = vpop.f32.mrb[0].mxu0
        %v729 = vadd.f32 %v652, %v728
        %730 = vmatprep.mubr.f32.mxu0 0.0
        %731 = vmatmul.mubr.f32.gmra.mrb[0].mxu0 %v592
        %v732 = vpop.f32.mrb[0].mxu0
        %v733 = vadd.f32 %v648, %v732
        %v734 = vpop.f32.mrb[0].mxu0
        %v735 = vadd.f32 %v652, %v734
        %736 = vmatprep.mubr.f32.mxu0 0.0
        %737 = vmatmul.mubr.f32.gmra.mrb[0].mxu0 %v593
        %v738 = vpop.f32.mrb[0].mxu0
        %v739 = vadd.f32 %v648, %v738
        %v740 = vpop.f32.mrb[0].mxu0
        %v741 = vadd.f32 %v652, %v740
        %742 = vmatprep.mubr.f32.mxu0 0.0
        %743 = vmatmul.mubr.f32.gmra.mrb[0].mxu0 %v594
        %v744 = vpop.f32.mrb[0].mxu0
        %v745 = vadd.f32 %v648, %v744
        %v746 = vpop.f32.mrb[0].mxu0
        %v747 = vadd.f32 %v652, %v746
        %748 = vdwg.mxu0
        %749 = vmatprep.subr.mxu0 0.0
        %750 = vmatpush1.msra.mxu0 %v597
        %751 = vmatprep.subr.mxu0 0.0
        %752 = vmatpush1.msra.mxu0 %v600
        %753 = vmatprep.subr.mxu0 0.0
        %754 = vmatpush1.msra.mxu0 %v603
        %755 = vmatprep.subr.mxu0 0.0
        %756 = vmatpush1.msra.mxu0 %v606
        %757 = vmatprep.subr.mxu0 0.0
        %758 = vmatpush1.msra.mxu0 %v609
        %759 = vmatprep.subr.mxu0 0.0
        %760 = vmatpush1.msra.mxu0 %v612
        %761 = vmatprep.subr.mxu0 0.0
        %762 = vmatpush1.msra.mxu0 %v615
        %763 = vmatprep.subr.mxu0 0.0
        %764 = vmatpush1.msra.mxu0 %v618
        %765 = vmatprep.subr.mxu0 0.0
        %766 = vmatpush1.msra.mxu0 %v621
        %767 = vmatprep.subr.mxu0 0.0
        %768 = vmatpush1.msra.mxu0 %v624
        %769 = vmatprep.subr.mxu0 0.0
        %770 = vmatpush1.msra.mxu0 %v627
        %771 = vmatprep.subr.mxu0 0.0
        %772 = vmatpush1.msra.mxu0 %v630
        %773 = vmatprep.subr.mxu0 0.0
        %774 = vmatpush1.msra.mxu0 %v633
        %775 = vmatprep.subr.mxu0 0.0
        %776 = vmatpush1.msra.mxu0 %v636
        %777 = vmatprep.subr.mxu0 0.0
        %778 = vmatpush1.msra.mxu0 %v639
        %779 = vmatprep.subr.mxu0 0.0
        %780 = vmatpush1.msra.mxu0 %v642
        %781 = vmatprep.subr.mxu0 0.0
        %782 = vmatpush1.msra.mxu0 0.0
        %783 = vmatprep.subr.mxu0 0.0
        %784 = vmatpush1.msra.mxu0 0.0
        %785 = vmatprep.subr.mxu0 0.0
        %786 = vmatpush1.msra.mxu0 0.0
        %787 = vmatprep.subr.mxu0 0.0
        %788 = vmatpush1.msra.mxu0 0.0
        %789 = vmatprep.subr.mxu0 0.0
        %790 = vmatpush1.msra.mxu0 0.0
        %791 = vmatprep.subr.mxu0 0.0
        %792 = vmatpush1.msra.mxu0 0.0
        %793 = vmatprep.subr.mxu0 0.0
        %794 = vmatpush1.msra.mxu0 0.0
        %795 = vmatprep.subr.mxu0 0.0
        %796 = vmatpush1.msra.mxu0 0.0
        %797 = vmatprep.subr.mxu0 0.0
        %798 = vmatpush1.msra.mxu0 0.0
        %799 = vmatprep.subr.mxu0 0.0
        %800 = vmatpush1.msra.mxu0 0.0
        %801 = vmatprep.subr.mxu0 0.0
        %802 = vmatpush1.msra.mxu0 0.0
        %803 = vmatprep.subr.mxu0 0.0
        %804 = vmatpush1.msra.mxu0 0.0
        %805 = vmatprep.subr.mxu0 0.0
        %806 = vmatpush1.msra.mxu0 0.0
        %807 = vmatprep.subr.mxu0 0.0
        %808 = vmatpush1.msra.mxu0 0.0
        %809 = vmatprep.subr.mxu0 0.0
        %810 = vmatpush1.msra.mxu0 0.0
        %811 = vmatprep.subr.mxu0 0.0
        %812 = vmatpush1.msra.mxu0 0.0
        %813 = vmatprep.mubr.f32.mxu0 0.0
        %814 = vmatmul.mubr.f32.gmra.mrb[0].mxu0 %v591
        %v815 = vpop.f32.mrb[0].mxu0
        %v816 = vadd.f32 %v656, %v815
        %v817 = vpop.f32.mrb[0].mxu0
        %818 = vmatprep.mubr.f32.mxu0 0.0
        %819 = vmatmul.mubr.f32.gmra.mrb[0].mxu0 %v592
        %v820 = vpop.f32.mrb[0].mxu0
        %v821 = vadd.f32 %v656, %v820
        %v822 = vpop.f32.mrb[0].mxu0
        %823 = vmatprep.mubr.f32.mxu0 0.0
        %824 = vmatmul.mubr.f32.gmra.mrb[0].mxu0 %v593
        %v825 = vpop.f32.mrb[0].mxu0
        %v826 = vadd.f32 %v656, %v825
        %v827 = vpop.f32.mrb[0].mxu0
        %828 = vmatprep.mubr.f32.mxu0 0.0
        %829 = vmatmul.mubr.f32.gmra.mrb[0].mxu0 %v594
        %v830 = vpop.f32.mrb[0].mxu0
        %v831 = vadd.f32 %v656, %v830
        %v832 = vpop.f32.mrb[0].mxu0
        %833 = vdwg.mxu0
        %s834 = smul.u32 %s37, 4
        %v835 = vlaneseq
        %v836 = vand.u32 %v835, 127
        %s837 = sld [smem:[#allocation3 + %s834]]
        %v838 = vstv %s837
        %s839 = sadd.s32 %s834, 1
        %s840 = sld [smem:[#allocation3 + %s839]]
        %v841 = vstv %s840
        %s842 = sadd.s32 %s834, 2
        %s843 = sld [smem:[#allocation3 + %s842]]
        %v844 = vstv %s843
        %s845 = sadd.s32 %s834, 3
        %s846 = sld [smem:[#allocation3 + %s845]]
        %v847 = vstv %s846
        %vm848 = vcmp.lt.s32.totalorder %v836, %v838
        %vm849 = vcmp.lt.s32.totalorder %v836, %v841
        %vm850 = vcmp.lt.s32.totalorder %v836, %v844
        %vm851 = vcmp.lt.s32.totalorder %v836, %v847
        %v852 = vsel %vm848, 0.0, -1e+30
        %v853 = vsel %vm849, 0.0, -1e+30
        %v854 = vsel %vm850, 0.0, -1e+30
        %v855 = vsel %vm851, 0.0, -1e+30
        %vm856 = vcmask 261120
        %v858 = vsel %vm856, %v727, 0
        %v861 = vsel %vm856, %v729, 0
        %863 = vmatprep.subr.mxu0 0.0
        %864 = vmatpush1.xpose.msra.mxu0 %v861
        %865 = vmatprep.subr.mxu0 0.0
        %866 = vmatpush1.xpose.msra.mxu0 0.0
        %867 = vmatprep.subr.mxu0 0.0
        %868 = vmatpush1.xpose.msra.mxu0 0.0
        %869 = vmatprep.subr.mxu0 0.0
        %870 = vmatpush1.xpose.msra.mxu0 0.0
        %871 = vmatprep.subr.mxu0 0.0
        %872 = vmatpush1.xpose.msra.mxu0 0.0
        %873 = vmatprep.subr.mxu0 0.0
        %874 = vmatpush1.xpose.msra.mxu0 0.0
        %875 = vmatprep.subr.mxu0 0.0
        %876 = vmatpush1.xpose.msra.mxu0 0.0
        %877 = vmatprep.subr.mxu0 0.0
        %878 = vmatpush1.xpose.msra.mxu0 0.0
        %879 = vmatprep.subr.mxu0 0.0
        %880 = vmatpush1.xpose.msra.mxu0 0.0
        %881 = vmatprep.subr.mxu0 0.0
        %882 = vmatpush1.xpose.msra.mxu0 0.0
        %883 = vmatprep.subr.mxu0 0.0
        %884 = vmatpush1.xpose.msra.mxu0 0.0
        %885 = vmatprep.subr.mxu0 0.0
        %886 = vmatpush1.xpose.msra.mxu0 0.0
        %887 = vmatprep.subr.mxu0 0.0
        %888 = vmatpush1.xpose.msra.mxu0 0.0
        %889 = vmatprep.subr.mxu0 0.0
        %890 = vmatpush1.xpose.msra.mxu0 0.0
        %891 = vmatprep.subr.mxu0 0.0
        %892 = vmatpush1.xpose.msra.mxu0 0.0
        %893 = vmatprep.subr.mxu0 0.0
        %894 = vmatpush1.xpose.msra.mxu0 0.0
        %895 = vmatprep.subr.mxu0 0.0
        %896 = vmatpush1.xpose.msra.mxu0 0.0
        %897 = vmatprep.subr.mxu0 0.0
        %898 = vmatpush1.xpose.msra.mxu0 0.0
        %899 = vmatprep.subr.mxu0 0.0
        %900 = vmatpush1.xpose.msra.mxu0 0.0
        %901 = vmatprep.subr.mxu0 0.0
        %902 = vmatpush1.xpose.msra.mxu0 0.0
        %903 = vmatprep.subr.mxu0 0.0
        %904 = vmatpush1.xpose.msra.mxu0 0.0
        %905 = vmatprep.subr.mxu0 0.0
        %906 = vmatpush1.xpose.msra.mxu0 0.0
        %907 = vmatprep.subr.mxu0 0.0
        %908 = vmatpush1.xpose.msra.mxu0 0.0
        %909 = vmatprep.subr.mxu0 0.0
        %910 = vmatpush1.xpose.msra.mxu0 0.0
        %911 = vmatprep.subr.mxu0 0.0
        %912 = vmatpush1.xpose.msra.mxu0 0.0
        %913 = vmatprep.subr.mxu0 0.0
        %914 = vmatpush1.xpose.msra.mxu0 0.0
        %915 = vmatprep.subr.mxu0 0.0
        %916 = vmatpush1.xpose.msra.mxu0 0.0
        %917 = vmatprep.subr.mxu0 0.0
        %918 = vmatpush1.xpose.msra.mxu0 0.0
        %919 = vmatprep.subr.mxu0 0.0
        %920 = vmatpush1.xpose.msra.mxu0 0.0
        %921 = vmatprep.subr.mxu0 0.0
        %922 = vmatpush1.xpose.msra.mxu0 0.0
        %923 = vmatprep.subr.mxu0 0.0
        %924 = vmatpush1.xpose.msra.mxu0 0.0
        %925 = vmatprep.subr.mxu0 0.0
        %926 = vmatpush1.xpose.msra.mxu0 0.0
        %927 = vmatprep.mubr.f32.mxu0 0.0
        %928 = vmatmul.mubr.f32.gmra.mrb[0].mxu0 %v858
        %v929 = vpop.f32.mrb[0].mxu0
        %v930 = vadd.f32 %v852, %v929
        %v931 = vpop.f32.mrb[0].mxu0
        %932 = vdwg.mxu0
        %v934 = vsel %vm856, %v733, 0
        %v937 = vsel %vm856, %v735, 0
        %939 = vmatprep.subr.mxu0 0.0
        %940 = vmatpush1.xpose.msra.mxu0 %v937
        %941 = vmatprep.subr.mxu0 0.0
        %942 = vmatpush1.xpose.msra.mxu0 0.0
        %943 = vmatprep.subr.mxu0 0.0
        %944 = vmatpush1.xpose.msra.mxu0 0.0
        %945 = vmatprep.subr.mxu0 0.0
        %946 = vmatpush1.xpose.msra.mxu0 0.0
        %947 = vmatprep.subr.mxu0 0.0
        %948 = vmatpush1.xpose.msra.mxu0 0.0
        %949 = vmatprep.subr.mxu0 0.0
        %950 = vmatpush1.xpose.msra.mxu0 0.0
        %951 = vmatprep.subr.mxu0 0.0
        %952 = vmatpush1.xpose.msra.mxu0 0.0
        %953 = vmatprep.subr.mxu0 0.0
        %954 = vmatpush1.xpose.msra.mxu0 0.0
        %955 = vmatprep.subr.mxu0 0.0
        %956 = vmatpush1.xpose.msra.mxu0 0.0
        %957 = vmatprep.subr.mxu0 0.0
        %958 = vmatpush1.xpose.msra.mxu0 0.0
        %959 = vmatprep.subr.mxu0 0.0
        %960 = vmatpush1.xpose.msra.mxu0 0.0
        %961 = vmatprep.subr.mxu0 0.0
        %962 = vmatpush1.xpose.msra.mxu0 0.0
        %963 = vmatprep.subr.mxu0 0.0
        %964 = vmatpush1.xpose.msra.mxu0 0.0
        %965 = vmatprep.subr.mxu0 0.0
        %966 = vmatpush1.xpose.msra.mxu0 0.0
        %967 = vmatprep.subr.mxu0 0.0
        %968 = vmatpush1.xpose.msra.mxu0 0.0
        %969 = vmatprep.subr.mxu0 0.0
        %970 = vmatpush1.xpose.msra.mxu0 0.0
        %971 = vmatprep.subr.mxu0 0.0
        %972 = vmatpush1.xpose.msra.mxu0 0.0
        %973 = vmatprep.subr.mxu0 0.0
        %974 = vmatpush1.xpose.msra.mxu0 0.0
        %975 = vmatprep.subr.mxu0 0.0
        %976 = vmatpush1.xpose.msra.mxu0 0.0
        %977 = vmatprep.subr.mxu0 0.0
        %978 = vmatpush1.xpose.msra.mxu0 0.0
        %979 = vmatprep.subr.mxu0 0.0
        %980 = vmatpush1.xpose.msra.mxu0 0.0
        %981 = vmatprep.subr.mxu0 0.0
        %982 = vmatpush1.xpose.msra.mxu0 0.0
        %983 = vmatprep.subr.mxu0 0.0
        %984 = vmatpush1.xpose.msra.mxu0 0.0
        %985 = vmatprep.subr.mxu0 0.0
        %986 = vmatpush1.xpose.msra.mxu0 0.0
        %987 = vmatprep.subr.mxu0 0.0
        %988 = vmatpush1.xpose.msra.mxu0 0.0
        %989 = vmatprep.subr.mxu0 0.0
        %990 = vmatpush1.xpose.msra.mxu0 0.0
        %991 = vmatprep.subr.mxu0 0.0
        %992 = vmatpush1.xpose.msra.mxu0 0.0
        %993 = vmatprep.subr.mxu0 0.0
        %994 = vmatpush1.xpose.msra.mxu0 0.0
        %995 = vmatprep.subr.mxu0 0.0
        %996 = vmatpush1.xpose.msra.mxu0 0.0
        %997 = vmatprep.subr.mxu0 0.0
        %998 = vmatpush1.xpose.msra.mxu0 0.0
        %999 = vmatprep.subr.mxu0 0.0
        %1000 = vmatpush1.xpose.msra.mxu0 0.0
        %1001 = vmatprep.subr.mxu0 0.0
        %1002 = vmatpush1.xpose.msra.mxu0 0.0
        %1003 = vmatprep.mubr.f32.mxu0 0.0
        %1004 = vmatmul.mubr.f32.gmra.mrb[0].mxu0 %v934
        %v1005 = vpop.f32.mrb[0].mxu0
        %v1006 = vadd.f32 %v853, %v1005
        %v1007 = vpop.f32.mrb[0].mxu0
        %1008 = vdwg.mxu0
        %v1010 = vsel %vm856, %v739, 0
        %v1013 = vsel %vm856, %v741, 0
        %1015 = vmatprep.subr.mxu0 0.0
        %1016 = vmatpush1.xpose.msra.mxu0 %v1013
        %1017 = vmatprep.subr.mxu0 0.0
        %1018 = vmatpush1.xpose.msra.mxu0 0.0
        %1019 = vmatprep.subr.mxu0 0.0
        %1020 = vmatpush1.xpose.msra.mxu0 0.0
        %1021 = vmatprep.subr.mxu0 0.0
        %1022 = vmatpush1.xpose.msra.mxu0 0.0
        %1023 = vmatprep.subr.mxu0 0.0
        %1024 = vmatpush1.xpose.msra.mxu0 0.0
        %1025 = vmatprep.subr.mxu0 0.0
        %1026 = vmatpush1.xpose.msra.mxu0 0.0
        %1027 = vmatprep.subr.mxu0 0.0
        %1028 = vmatpush1.xpose.msra.mxu0 0.0
        %1029 = vmatprep.subr.mxu0 0.0
        %1030 = vmatpush1.xpose.msra.mxu0 0.0
        %1031 = vmatprep.subr.mxu0 0.0
        %1032 = vmatpush1.xpose.msra.mxu0 0.0
        %1033 = vmatprep.subr.mxu0 0.0
        %1034 = vmatpush1.xpose.msra.mxu0 0.0
        %1035 = vmatprep.subr.mxu0 0.0
        %1036 = vmatpush1.xpose.msra.mxu0 0.0
        %1037 = vmatprep.subr.mxu0 0.0
        %1038 = vmatpush1.xpose.msra.mxu0 0.0
        %1039 = vmatprep.subr.mxu0 0.0
        %1040 = vmatpush1.xpose.msra.mxu0 0.0
        %1041 = vmatprep.subr.mxu0 0.0
        %1042 = vmatpush1.xpose.msra.mxu0 0.0
        %1043 = vmatprep.subr.mxu0 0.0
        %1044 = vmatpush1.xpose.msra.mxu0 0.0
        %1045 = vmatprep.subr.mxu0 0.0
        %1046 = vmatpush1.xpose.msra.mxu0 0.0
        %1047 = vmatprep.subr.mxu0 0.0
        %1048 = vmatpush1.xpose.msra.mxu0 0.0
        %1049 = vmatprep.subr.mxu0 0.0
        %1050 = vmatpush1.xpose.msra.mxu0 0.0
        %1051 = vmatprep.subr.mxu0 0.0
        %1052 = vmatpush1.xpose.msra.mxu0 0.0
        %1053 = vmatprep.subr.mxu0 0.0
        %1054 = vmatpush1.xpose.msra.mxu0 0.0
        %1055 = vmatprep.subr.mxu0 0.0
        %1056 = vmatpush1.xpose.msra.mxu0 0.0
        %1057 = vmatprep.subr.mxu0 0.0
        %1058 = vmatpush1.xpose.msra.mxu0 0.0
        %1059 = vmatprep.subr.mxu0 0.0
        %1060 = vmatpush1.xpose.msra.mxu0 0.0
        %1061 = vmatprep.subr.mxu0 0.0
        %1062 = vmatpush1.xpose.msra.mxu0 0.0
        %1063 = vmatprep.subr.mxu0 0.0
        %1064 = vmatpush1.xpose.msra.mxu0 0.0
        %1065 = vmatprep.subr.mxu0 0.0
        %1066 = vmatpush1.xpose.msra.mxu0 0.0
        %1067 = vmatprep.subr.mxu0 0.0
        %1068 = vmatpush1.xpose.msra.mxu0 0.0
        %1069 = vmatprep.subr.mxu0 0.0
        %1070 = vmatpush1.xpose.msra.mxu0 0.0
        %1071 = vmatprep.subr.mxu0 0.0
        %1072 = vmatpush1.xpose.msra.mxu0 0.0
        %1073 = vmatprep.subr.mxu0 0.0
        %1074 = vmatpush1.xpose.msra.mxu0 0.0
        %1075 = vmatprep.subr.mxu0 0.0
        %1076 = vmatpush1.xpose.msra.mxu0 0.0
        %1077 = vmatprep.subr.mxu0 0.0
        %1078 = vmatpush1.xpose.msra.mxu0 0.0
        %1079 = vmatprep.mubr.f32.mxu0 0.0
        %1080 = vmatmul.mubr.f32.gmra.mrb[0].mxu0 %v1010
        %v1081 = vpop.f32.mrb[0].mxu0
        %v1082 = vadd.f32 %v854, %v1081
        %v1083 = vpop.f32.mrb[0].mxu0
        %1084 = vdwg.mxu0
        %v1086 = vsel %vm856, %v745, 0
        %v1089 = vsel %vm856, %v747, 0
        %1091 = vmatprep.subr.mxu0 0.0
        %1092 = vmatpush1.xpose.msra.mxu0 %v1089
        %1093 = vmatprep.subr.mxu0 0.0
        %1094 = vmatpush1.xpose.msra.mxu0 0.0
        %1095 = vmatprep.subr.mxu0 0.0
        %1096 = vmatpush1.xpose.msra.mxu0 0.0
        %1097 = vmatprep.subr.mxu0 0.0
        %1098 = vmatpush1.xpose.msra.mxu0 0.0
        %1099 = vmatprep.subr.mxu0 0.0
        %1100 = vmatpush1.xpose.msra.mxu0 0.0
        %1101 = vmatprep.subr.mxu0 0.0
        %1102 = vmatpush1.xpose.msra.mxu0 0.0
        %1103 = vmatprep.subr.mxu0 0.0
        %1104 = vmatpush1.xpose.msra.mxu0 0.0
        %1105 = vmatprep.subr.mxu0 0.0
        %1106 = vmatpush1.xpose.msra.mxu0 0.0
        %1107 = vmatprep.subr.mxu0 0.0
        %1108 = vmatpush1.xpose.msra.mxu0 0.0
        %1109 = vmatprep.subr.mxu0 0.0
        %1110 = vmatpush1.xpose.msra.mxu0 0.0
        %1111 = vmatprep.subr.mxu0 0.0
        %1112 = vmatpush1.xpose.msra.mxu0 0.0
        %1113 = vmatprep.subr.mxu0 0.0
        %1114 = vmatpush1.xpose.msra.mxu0 0.0
        %1115 = vmatprep.subr.mxu0 0.0
        %1116 = vmatpush1.xpose.msra.mxu0 0.0
        %1117 = vmatprep.subr.mxu0 0.0
        %1118 = vmatpush1.xpose.msra.mxu0 0.0
        %1119 = vmatprep.subr.mxu0 0.0
        %1120 = vmatpush1.xpose.msra.mxu0 0.0
        %1121 = vmatprep.subr.mxu0 0.0
        %1122 = vmatpush1.xpose.msra.mxu0 0.0
        %1123 = vmatprep.subr.mxu0 0.0
        %1124 = vmatpush1.xpose.msra.mxu0 0.0
        %1125 = vmatprep.subr.mxu0 0.0
        %1126 = vmatpush1.xpose.msra.mxu0 0.0
        %1127 = vmatprep.subr.mxu0 0.0
        %1128 = vmatpush1.xpose.msra.mxu0 0.0
        %1129 = vmatprep.subr.mxu0 0.0
        %1130 = vmatpush1.xpose.msra.mxu0 0.0
        %1131 = vmatprep.subr.mxu0 0.0
        %1132 = vmatpush1.xpose.msra.mxu0 0.0
        %1133 = vmatprep.subr.mxu0 0.0
        %1134 = vmatpush1.xpose.msra.mxu0 0.0
        %1135 = vmatprep.subr.mxu0 0.0
        %1136 = vmatpush1.xpose.msra.mxu0 0.0
        %1137 = vmatprep.subr.mxu0 0.0
        %1138 = vmatpush1.xpose.msra.mxu0 0.0
        %1139 = vmatprep.subr.mxu0 0.0
        %1140 = vmatpush1.xpose.msra.mxu0 0.0
        %1141 = vmatprep.subr.mxu0 0.0
        %1142 = vmatpush1.xpose.msra.mxu0 0.0
        %1143 = vmatprep.subr.mxu0 0.0
        %1144 = vmatpush1.xpose.msra.mxu0 0.0
        %1145 = vmatprep.subr.mxu0 0.0
        %1146 = vmatpush1.xpose.msra.mxu0 0.0
        %1147 = vmatprep.subr.mxu0 0.0
        %1148 = vmatpush1.xpose.msra.mxu0 0.0
        %1149 = vmatprep.subr.mxu0 0.0
        %1150 = vmatpush1.xpose.msra.mxu0 0.0
        %1151 = vmatprep.subr.mxu0 0.0
        %1152 = vmatpush1.xpose.msra.mxu0 0.0
        %1153 = vmatprep.subr.mxu0 0.0
        %1154 = vmatpush1.xpose.msra.mxu0 0.0
        %1155 = vmatprep.mubr.f32.mxu0 0.0
        %1156 = vmatmul.mubr.f32.gmra.mrb[0].mxu0 %v1086
        %v1157 = vpop.f32.mrb[0].mxu0
        %v1158 = vadd.f32 %v855, %v1157
        %v1159 = vpop.f32.mrb[0].mxu0
        %1160 = vdwg.mxu0
        %vm1161 = vcmask 64512
        %v1162 = vsel %vm1161, %v930, -inf
        %1163 = vmax.xlane.f32.xlu0 %v1162
        %v1164 = vpop.xlane.xlu0 %1163
        %v1165 = vsel %vm1161, %v1006, -inf
        %1166 = vmax.xlane.f32.xlu0 %v1165
        %v1167 = vpop.xlane.xlu0 %1166
        %v1168 = vsel %vm1161, %v1082, -inf
        %1169 = vmax.xlane.f32.xlu0 %v1168
        %v1170 = vpop.xlane.xlu0 %1169
        %v1171 = vsel %vm1161, %v1158, -inf
        %1172 = vmax.xlane.f32.xlu0 %v1171
        %v1173 = vpop.xlane.xlu0 %1172
        %v1174 = vsub.f32 %v930, %v1164
        %v1175 = vsub.f32 %v1006, %v1167
        %v1176 = vsub.f32 %v1082, %v1170
        %v1177 = vsub.f32 %v1158, %v1173
        %v1178 = vmul.f32 %v1174, 1.442695
        %v1179 = vpow.pop %v1178
        %v1180 = vmul.f32 %v1175, 1.442695
        %v1181 = vpow.pop %v1180
        %v1182 = vmul.f32 %v1176, 1.442695
        %v1183 = vpow.pop %v1182
        %v1184 = vmul.f32 %v1177, 1.442695
        %v1185 = vpow.pop %v1184
        %v1186 = vsel %vm1161, %v1179, 0.0
        %1187 = vadd.xlane.f32.xlu0 %v1186
        %v1188 = vpop.xlane.xlu0 %1187
        %v1189 = vsel %vm1161, %v1181, 0.0
        %1190 = vadd.xlane.f32.xlu0 %v1189
        %v1191 = vpop.xlane.xlu0 %1190
        %v1192 = vsel %vm1161, %v1183, 0.0
        %1193 = vadd.xlane.f32.xlu0 %v1192
        %v1194 = vpop.xlane.xlu0 %1193
        %v1195 = vsel %vm1161, %v1185, 0.0
        %1196 = vadd.xlane.f32.xlu0 %v1195
        %v1197 = vpop.xlane.xlu0 %1196
        %v1198 = vrcp.pop %v1188
        %v1199 = vrcp.pop %v1191
        %v1200 = vrcp.pop %v1194
        %v1201 = vrcp.pop %v1197
        %v1202 = vmul.f32 %v1179, %v1198
        %v1203 = vmul.f32 %v1181, %v1199
        %v1204 = vmul.f32 %v1183, %v1200
        %v1205 = vmul.f32 %v1185, %v1201
        %v1207 = vsel %vm1161, %v1202, 0
        %1209 = vmatprep.subr.mxu0 0.0
        %1210 = vmatpush1.msra.mxu0 %v816
        %1211 = vmatprep.subr.mxu0 0.0
        %1212 = vmatpush1.msra.mxu0 0.0
        %1213 = vmatprep.subr.mxu0 0.0
        %1214 = vmatpush1.msra.mxu0 0.0
        %1215 = vmatprep.subr.mxu0 0.0
        %1216 = vmatpush1.msra.mxu0 0.0
        %1217 = vmatprep.subr.mxu0 0.0
        %1218 = vmatpush1.msra.mxu0 0.0
        %1219 = vmatprep.subr.mxu0 0.0
        %1220 = vmatpush1.msra.mxu0 0.0
        %1221 = vmatprep.subr.mxu0 0.0
        %1222 = vmatpush1.msra.mxu0 0.0
        %1223 = vmatprep.subr.mxu0 0.0
        %1224 = vmatpush1.msra.mxu0 0.0
        %1225 = vmatprep.subr.mxu0 0.0
        %1226 = vmatpush1.msra.mxu0 0.0
        %1227 = vmatprep.subr.mxu0 0.0
        %1228 = vmatpush1.msra.mxu0 0.0
        %1229 = vmatprep.subr.mxu0 0.0
        %1230 = vmatpush1.msra.mxu0 0.0
        %1231 = vmatprep.subr.mxu0 0.0
        %1232 = vmatpush1.msra.mxu0 0.0
        %1233 = vmatprep.subr.mxu0 0.0
        %1234 = vmatpush1.msra.mxu0 0.0
        %1235 = vmatprep.subr.mxu0 0.0
        %1236 = vmatpush1.msra.mxu0 0.0
        %1237 = vmatprep.subr.mxu0 0.0
        %1238 = vmatpush1.msra.mxu0 0.0
        %1239 = vmatprep.subr.mxu0 0.0
        %1240 = vmatpush1.msra.mxu0 0.0
        %1241 = vmatprep.subr.mxu0 0.0
        %1242 = vmatpush1.msra.mxu0 0.0
        %1243 = vmatprep.subr.mxu0 0.0
        %1244 = vmatpush1.msra.mxu0 0.0
        %1245 = vmatprep.subr.mxu0 0.0
        %1246 = vmatpush1.msra.mxu0 0.0
        %1247 = vmatprep.subr.mxu0 0.0
        %1248 = vmatpush1.msra.mxu0 0.0
        %1249 = vmatprep.subr.mxu0 0.0
        %1250 = vmatpush1.msra.mxu0 0.0
        %1251 = vmatprep.subr.mxu0 0.0
        %1252 = vmatpush1.msra.mxu0 0.0
        %1253 = vmatprep.subr.mxu0 0.0
        %1254 = vmatpush1.msra.mxu0 0.0
        %1255 = vmatprep.subr.mxu0 0.0
        %1256 = vmatpush1.msra.mxu0 0.0
        %1257 = vmatprep.subr.mxu0 0.0
        %1258 = vmatpush1.msra.mxu0 0.0
        %1259 = vmatprep.subr.mxu0 0.0
        %1260 = vmatpush1.msra.mxu0 0.0
        %1261 = vmatprep.subr.mxu0 0.0
        %1262 = vmatpush1.msra.mxu0 0.0
        %1263 = vmatprep.subr.mxu0 0.0
        %1264 = vmatpush1.msra.mxu0 0.0
        %1265 = vmatprep.subr.mxu0 0.0
        %1266 = vmatpush1.msra.mxu0 0.0
        %1267 = vmatprep.subr.mxu0 0.0
        %1268 = vmatpush1.msra.mxu0 0.0
        %1269 = vmatprep.subr.mxu0 0.0
        %1270 = vmatpush1.msra.mxu0 0.0
        %1271 = vmatprep.subr.mxu0 0.0
        %1272 = vmatpush1.msra.mxu0 0.0
        %1273 = vmatprep.mubr.f32.mxu0 0.0
        %1274 = vmatmul.mubr.f32.gmra.mrb[0].mxu0 %v1207
        %v1275 = vpop.f32.mrb[0].mxu0
        %v1276 = vadd.f32 0.0, %v1275
        %v1277 = vpop.f32.mrb[0].mxu0
        %1278 = vdwg.mxu0
        %v1280 = vsel %vm1161, %v1203, 0
        %1282 = vmatprep.subr.mxu0 0.0
        %1283 = vmatpush1.msra.mxu0 %v821
        %1284 = vmatprep.subr.mxu0 0.0
        %1285 = vmatpush1.msra.mxu0 0.0
        %1286 = vmatprep.subr.mxu0 0.0
        %1287 = vmatpush1.msra.mxu0 0.0
        %1288 = vmatprep.subr.mxu0 0.0
        %1289 = vmatpush1.msra.mxu0 0.0
        %1290 = vmatprep.subr.mxu0 0.0
        %1291 = vmatpush1.msra.mxu0 0.0
        %1292 = vmatprep.subr.mxu0 0.0
        %1293 = vmatpush1.msra.mxu0 0.0
        %1294 = vmatprep.subr.mxu0 0.0
        %1295 = vmatpush1.msra.mxu0 0.0
        %1296 = vmatprep.subr.mxu0 0.0
        %1297 = vmatpush1.msra.mxu0 0.0
        %1298 = vmatprep.subr.mxu0 0.0
        %1299 = vmatpush1.msra.mxu0 0.0
        %1300 = vmatprep.subr.mxu0 0.0
        %1301 = vmatpush1.msra.mxu0 0.0
        %1302 = vmatprep.subr.mxu0 0.0
        %1303 = vmatpush1.msra.mxu0 0.0
        %1304 = vmatprep.subr.mxu0 0.0
        %1305 = vmatpush1.msra.mxu0 0.0
        %1306 = vmatprep.subr.mxu0 0.0
        %1307 = vmatpush1.msra.mxu0 0.0
        %1308 = vmatprep.subr.mxu0 0.0
        %1309 = vmatpush1.msra.mxu0 0.0
        %1310 = vmatprep.subr.mxu0 0.0
        %1311 = vmatpush1.msra.mxu0 0.0
        %1312 = vmatprep.subr.mxu0 0.0
        %1313 = vmatpush1.msra.mxu0 0.0
        %1314 = vmatprep.subr.mxu0 0.0
        %1315 = vmatpush1.msra.mxu0 0.0
        %1316 = vmatprep.subr.mxu0 0.0
        %1317 = vmatpush1.msra.mxu0 0.0
        %1318 = vmatprep.subr.mxu0 0.0
        %1319 = vmatpush1.msra.mxu0 0.0
        %1320 = vmatprep.subr.mxu0 0.0
        %1321 = vmatpush1.msra.mxu0 0.0
        %1322 = vmatprep.subr.mxu0 0.0
        %1323 = vmatpush1.msra.mxu0 0.0
        %1324 = vmatprep.subr.mxu0 0.0
        %1325 = vmatpush1.msra.mxu0 0.0
        %1326 = vmatprep.subr.mxu0 0.0
        %1327 = vmatpush1.msra.mxu0 0.0
        %1328 = vmatprep.subr.mxu0 0.0
        %1329 = vmatpush1.msra.mxu0 0.0
        %1330 = vmatprep.subr.mxu0 0.0
        %1331 = vmatpush1.msra.mxu0 0.0
        %1332 = vmatprep.subr.mxu0 0.0
        %1333 = vmatpush1.msra.mxu0 0.0
        %1334 = vmatprep.subr.mxu0 0.0
        %1335 = vmatpush1.msra.mxu0 0.0
        %1336 = vmatprep.subr.mxu0 0.0
        %1337 = vmatpush1.msra.mxu0 0.0
        %1338 = vmatprep.subr.mxu0 0.0
        %1339 = vmatpush1.msra.mxu0 0.0
        %1340 = vmatprep.subr.mxu0 0.0
        %1341 = vmatpush1.msra.mxu0 0.0
        %1342 = vmatprep.subr.mxu0 0.0
        %1343 = vmatpush1.msra.mxu0 0.0
        %1344 = vmatprep.subr.mxu0 0.0
        %1345 = vmatpush1.msra.mxu0 0.0
        %1346 = vmatprep.mubr.f32.mxu0 0.0
        %1347 = vmatmul.mubr.f32.gmra.mrb[0].mxu0 %v1280
        %v1348 = vpop.f32.mrb[0].mxu0
        %v1349 = vadd.f32 0.0, %v1348
        %v1350 = vpop.f32.mrb[0].mxu0
        %1351 = vdwg.mxu0
        %v1353 = vsel %vm1161, %v1204, 0
        %1355 = vmatprep.subr.mxu0 0.0
        %1356 = vmatpush1.msra.mxu0 %v826
        %1357 = vmatprep.subr.mxu0 0.0
        %1358 = vmatpush1.msra.mxu0 0.0
        %1359 = vmatprep.subr.mxu0 0.0
        %1360 = vmatpush1.msra.mxu0 0.0
        %1361 = vmatprep.subr.mxu0 0.0
        %1362 = vmatpush1.msra.mxu0 0.0
        %1363 = vmatprep.subr.mxu0 0.0
        %1364 = vmatpush1.msra.mxu0 0.0
        %1365 = vmatprep.subr.mxu0 0.0
        %1366 = vmatpush1.msra.mxu0 0.0
        %1367 = vmatprep.subr.mxu0 0.0
        %1368 = vmatpush1.msra.mxu0 0.0
        %1369 = vmatprep.subr.mxu0 0.0
        %1370 = vmatpush1.msra.mxu0 0.0
        %1371 = vmatprep.subr.mxu0 0.0
        %1372 = vmatpush1.msra.mxu0 0.0
        %1373 = vmatprep.subr.mxu0 0.0
        %1374 = vmatpush1.msra.mxu0 0.0
        %1375 = vmatprep.subr.mxu0 0.0
        %1376 = vmatpush1.msra.mxu0 0.0
        %1377 = vmatprep.subr.mxu0 0.0
        %1378 = vmatpush1.msra.mxu0 0.0
        %1379 = vmatprep.subr.mxu0 0.0
        %1380 = vmatpush1.msra.mxu0 0.0
        %1381 = vmatprep.subr.mxu0 0.0
        %1382 = vmatpush1.msra.mxu0 0.0
        %1383 = vmatprep.subr.mxu0 0.0
        %1384 = vmatpush1.msra.mxu0 0.0
        %1385 = vmatprep.subr.mxu0 0.0
        %1386 = vmatpush1.msra.mxu0 0.0
        %1387 = vmatprep.subr.mxu0 0.0
        %1388 = vmatpush1.msra.mxu0 0.0
        %1389 = vmatprep.subr.mxu0 0.0
        %1390 = vmatpush1.msra.mxu0 0.0
        %1391 = vmatprep.subr.mxu0 0.0
        %1392 = vmatpush1.msra.mxu0 0.0
        %1393 = vmatprep.subr.mxu0 0.0
        %1394 = vmatpush1.msra.mxu0 0.0
        %1395 = vmatprep.subr.mxu0 0.0
        %1396 = vmatpush1.msra.mxu0 0.0
        %1397 = vmatprep.subr.mxu0 0.0
        %1398 = vmatpush1.msra.mxu0 0.0
        %1399 = vmatprep.subr.mxu0 0.0
        %1400 = vmatpush1.msra.mxu0 0.0
        %1401 = vmatprep.subr.mxu0 0.0
        %1402 = vmatpush1.msra.mxu0 0.0
        %1403 = vmatprep.subr.mxu0 0.0
        %1404 = vmatpush1.msra.mxu0 0.0
        %1405 = vmatprep.subr.mxu0 0.0
        %1406 = vmatpush1.msra.mxu0 0.0
        %1407 = vmatprep.subr.mxu0 0.0
        %1408 = vmatpush1.msra.mxu0 0.0
        %1409 = vmatprep.subr.mxu0 0.0
        %1410 = vmatpush1.msra.mxu0 0.0
        %1411 = vmatprep.subr.mxu0 0.0
        %1412 = vmatpush1.msra.mxu0 0.0
        %1413 = vmatprep.subr.mxu0 0.0
        %1414 = vmatpush1.msra.mxu0 0.0
        %1415 = vmatprep.subr.mxu0 0.0
        %1416 = vmatpush1.msra.mxu0 0.0
        %1417 = vmatprep.subr.mxu0 0.0
        %1418 = vmatpush1.msra.mxu0 0.0
        %1419 = vmatprep.mubr.f32.mxu0 0.0
        %1420 = vmatmul.mubr.f32.gmra.mrb[0].mxu0 %v1353
        %v1421 = vpop.f32.mrb[0].mxu0
        %v1422 = vadd.f32 0.0, %v1421
        %v1423 = vpop.f32.mrb[0].mxu0
        %1424 = vdwg.mxu0
        %v1426 = vsel %vm1161, %v1205, 0
        %1428 = vmatprep.subr.mxu0 0.0
        %1429 = vmatpush1.msra.mxu0 %v831
        %1430 = vmatprep.subr.mxu0 0.0
        %1431 = vmatpush1.msra.mxu0 0.0
        %1432 = vmatprep.subr.mxu0 0.0
        %1433 = vmatpush1.msra.mxu0 0.0
        %1434 = vmatprep.subr.mxu0 0.0
        %1435 = vmatpush1.msra.mxu0 0.0
        %1436 = vmatprep.subr.mxu0 0.0
        %1437 = vmatpush1.msra.mxu0 0.0
        %1438 = vmatprep.subr.mxu0 0.0
        %1439 = vmatpush1.msra.mxu0 0.0
        %1440 = vmatprep.subr.mxu0 0.0
        %1441 = vmatpush1.msra.mxu0 0.0
        %1442 = vmatprep.subr.mxu0 0.0
        %1443 = vmatpush1.msra.mxu0 0.0
        %1444 = vmatprep.subr.mxu0 0.0
        %1445 = vmatpush1.msra.mxu0 0.0
        %1446 = vmatprep.subr.mxu0 0.0
        %1447 = vmatpush1.msra.mxu0 0.0
        %1448 = vmatprep.subr.mxu0 0.0
        %1449 = vmatpush1.msra.mxu0 0.0
        %1450 = vmatprep.subr.mxu0 0.0
        %1451 = vmatpush1.msra.mxu0 0.0
        %1452 = vmatprep.subr.mxu0 0.0
        %1453 = vmatpush1.msra.mxu0 0.0
        %1454 = vmatprep.subr.mxu0 0.0
        %1455 = vmatpush1.msra.mxu0 0.0
        %1456 = vmatprep.subr.mxu0 0.0
        %1457 = vmatpush1.msra.mxu0 0.0
        %1458 = vmatprep.subr.mxu0 0.0
        %1459 = vmatpush1.msra.mxu0 0.0
        %1460 = vmatprep.subr.mxu0 0.0
        %1461 = vmatpush1.msra.mxu0 0.0
        %1462 = vmatprep.subr.mxu0 0.0
        %1463 = vmatpush1.msra.mxu0 0.0
        %1464 = vmatprep.subr.mxu0 0.0
        %1465 = vmatpush1.msra.mxu0 0.0
        %1466 = vmatprep.subr.mxu0 0.0
        %1467 = vmatpush1.msra.mxu0 0.0
        %1468 = vmatprep.subr.mxu0 0.0
        %1469 = vmatpush1.msra.mxu0 0.0
        %1470 = vmatprep.subr.mxu0 0.0
        %1471 = vmatpush1.msra.mxu0 0.0
        %1472 = vmatprep.subr.mxu0 0.0
        %1473 = vmatpush1.msra.mxu0 0.0
        %1474 = vmatprep.subr.mxu0 0.0
        %1475 = vmatpush1.msra.mxu0 0.0
        %1476 = vmatprep.subr.mxu0 0.0
        %1477 = vmatpush1.msra.mxu0 0.0
        %1478 = vmatprep.subr.mxu0 0.0
        %1479 = vmatpush1.msra.mxu0 0.0
        %1480 = vmatprep.subr.mxu0 0.0
        %1481 = vmatpush1.msra.mxu0 0.0
        %1482 = vmatprep.subr.mxu0 0.0
        %1483 = vmatpush1.msra.mxu0 0.0
        %1484 = vmatprep.subr.mxu0 0.0
        %1485 = vmatpush1.msra.mxu0 0.0
        %1486 = vmatprep.subr.mxu0 0.0
        %1487 = vmatpush1.msra.mxu0 0.0
        %1488 = vmatprep.subr.mxu0 0.0
        %1489 = vmatpush1.msra.mxu0 0.0
        %1490 = vmatprep.subr.mxu0 0.0
        %1491 = vmatpush1.msra.mxu0 0.0
        %1492 = vmatprep.mubr.f32.mxu0 0.0
        %1493 = vmatmul.mubr.f32.gmra.mrb[0].mxu0 %v1426
        %v1494 = vpop.f32.mrb[0].mxu0
        %v1495 = vadd.f32 0.0, %v1494
        %v1496 = vpop.f32.mrb[0].mxu0
        %1497 = vdwg.mxu0
        %v1498 = vld [vmem:[#allocation9] sm:$0xff]
        %v1499 = vld [vmem:[#allocation9 + $0x8] sm:$0xff]
        %v1500 = vld [vmem:[#allocation9 + $0x10] sm:$0xff]
        %v1501 = vld [vmem:[#allocation9 + $0x18] sm:$0xff]
        %1502 = vrot.lane.b32.xlu0 %v727, 96
        %v1503 = vpop.permute.xlu0 %1502
        %1504 = vrot.lane.b32.xlu0 %v729, 96
        %v1505 = vpop.permute.xlu0 %1504
        %v1506 = vsel %vm856, %v1503, 0
        %v1508 = vsel %vm856, %v1505, 0
        %1510 = vmatprep.subr.mxu0 0.0
        %1511 = vmatpush1.xpose.msra.mxu0 %v1508
        %1512 = vmatprep.subr.mxu0 0.0
        %1513 = vmatpush1.xpose.msra.mxu0 0.0
        %1514 = vmatprep.subr.mxu0 0.0
        %1515 = vmatpush1.xpose.msra.mxu0 0.0
        %1516 = vmatprep.subr.mxu0 0.0
        %1517 = vmatpush1.xpose.msra.mxu0 0.0
        %1518 = vmatprep.subr.mxu0 0.0
        %1519 = vmatpush1.xpose.msra.mxu0 0.0
        %1520 = vmatprep.subr.mxu0 0.0
        %1521 = vmatpush1.xpose.msra.mxu0 0.0
        %1522 = vmatprep.subr.mxu0 0.0
        %1523 = vmatpush1.xpose.msra.mxu0 0.0
        %1524 = vmatprep.subr.mxu0 0.0
        %1525 = vmatpush1.xpose.msra.mxu0 0.0
        %1526 = vmatprep.subr.mxu0 0.0
        %1527 = vmatpush1.xpose.msra.mxu0 0.0
        %1528 = vmatprep.subr.mxu0 0.0
        %1529 = vmatpush1.xpose.msra.mxu0 0.0
        %1530 = vmatprep.subr.mxu0 0.0
        %1531 = vmatpush1.xpose.msra.mxu0 0.0
        %1532 = vmatprep.subr.mxu0 0.0
        %1533 = vmatpush1.xpose.msra.mxu0 0.0
        %1534 = vmatprep.subr.mxu0 0.0
        %1535 = vmatpush1.xpose.msra.mxu0 0.0
        %1536 = vmatprep.subr.mxu0 0.0
        %1537 = vmatpush1.xpose.msra.mxu0 0.0
        %1538 = vmatprep.subr.mxu0 0.0
        %1539 = vmatpush1.xpose.msra.mxu0 0.0
        %1540 = vmatprep.subr.mxu0 0.0
        %1541 = vmatpush1.xpose.msra.mxu0 0.0
        %1542 = vmatprep.subr.mxu0 0.0
        %1543 = vmatpush1.xpose.msra.mxu0 0.0
        %1544 = vmatprep.subr.mxu0 0.0
        %1545 = vmatpush1.xpose.msra.mxu0 0.0
        %1546 = vmatprep.subr.mxu0 0.0
        %1547 = vmatpush1.xpose.msra.mxu0 0.0
        %1548 = vmatprep.subr.mxu0 0.0
        %1549 = vmatpush1.xpose.msra.mxu0 0.0
        %1550 = vmatprep.subr.mxu0 0.0
        %1551 = vmatpush1.xpose.msra.mxu0 0.0
        %1552 = vmatprep.subr.mxu0 0.0
        %1553 = vmatpush1.xpose.msra.mxu0 0.0
        %1554 = vmatprep.subr.mxu0 0.0
        %1555 = vmatpush1.xpose.msra.mxu0 0.0
        %1556 = vmatprep.subr.mxu0 0.0
        %1557 = vmatpush1.xpose.msra.mxu0 0.0
        %1558 = vmatprep.subr.mxu0 0.0
        %1559 = vmatpush1.xpose.msra.mxu0 0.0
        %1560 = vmatprep.subr.mxu0 0.0
        %1561 = vmatpush1.xpose.msra.mxu0 0.0
        %1562 = vmatprep.subr.mxu0 0.0
        %1563 = vmatpush1.xpose.msra.mxu0 0.0
        %1564 = vmatprep.subr.mxu0 0.0
        %1565 = vmatpush1.xpose.msra.mxu0 0.0
        %1566 = vmatprep.subr.mxu0 0.0
        %1567 = vmatpush1.xpose.msra.mxu0 0.0
        %1568 = vmatprep.subr.mxu0 0.0
        %1569 = vmatpush1.xpose.msra.mxu0 0.0
        %1570 = vmatprep.subr.mxu0 0.0
        %1571 = vmatpush1.xpose.msra.mxu0 0.0
        %1572 = vmatprep.subr.mxu0 0.0
        %1573 = vmatpush1.xpose.msra.mxu0 0.0
        %1574 = vmatprep.mubr.f32.mxu0 0.0
        %1575 = vmatmul.mubr.f32.gmra.mrb[0].mxu0 %v1506
        %v1576 = vpop.f32.mrb[0].mxu0
        %v1577 = vadd.f32 %v852, %v1576
        %v1578 = vpop.f32.mrb[0].mxu0
        %1579 = vdwg.mxu0
        %1580 = vrot.lane.b32.xlu0 %v733, 96
        %v1581 = vpop.permute.xlu0 %1580
        %1582 = vrot.lane.b32.xlu0 %v735, 96
        %v1583 = vpop.permute.xlu0 %1582
        %v1584 = vsel %vm856, %v1581, 0
        %v1586 = vsel %vm856, %v1583, 0
        %1588 = vmatprep.subr.mxu0 0.0
        %1589 = vmatpush1.xpose.msra.mxu0 %v1586
        %1590 = vmatprep.subr.mxu0 0.0
        %1591 = vmatpush1.xpose.msra.mxu0 0.0
        %1592 = vmatprep.subr.mxu0 0.0
        %1593 = vmatpush1.xpose.msra.mxu0 0.0
        %1594 = vmatprep.subr.mxu0 0.0
        %1595 = vmatpush1.xpose.msra.mxu0 0.0
        %1596 = vmatprep.subr.mxu0 0.0
        %1597 = vmatpush1.xpose.msra.mxu0 0.0
        %1598 = vmatprep.subr.mxu0 0.0
        %1599 = vmatpush1.xpose.msra.mxu0 0.0
        %1600 = vmatprep.subr.mxu0 0.0
        %1601 = vmatpush1.xpose.msra.mxu0 0.0
        %1602 = vmatprep.subr.mxu0 0.0
        %1603 = vmatpush1.xpose.msra.mxu0 0.0
        %1604 = vmatprep.subr.mxu0 0.0
        %1605 = vmatpush1.xpose.msra.mxu0 0.0
        %1606 = vmatprep.subr.mxu0 0.0
        %1607 = vmatpush1.xpose.msra.mxu0 0.0
        %1608 = vmatprep.subr.mxu0 0.0
        %1609 = vmatpush1.xpose.msra.mxu0 0.0
        %1610 = vmatprep.subr.mxu0 0.0
        %1611 = vmatpush1.xpose.msra.mxu0 0.0
        %1612 = vmatprep.subr.mxu0 0.0
        %1613 = vmatpush1.xpose.msra.mxu0 0.0
        %1614 = vmatprep.subr.mxu0 0.0
        %1615 = vmatpush1.xpose.msra.mxu0 0.0
        %1616 = vmatprep.subr.mxu0 0.0
        %1617 = vmatpush1.xpose.msra.mxu0 0.0
        %1618 = vmatprep.subr.mxu0 0.0
        %1619 = vmatpush1.xpose.msra.mxu0 0.0
        %1620 = vmatprep.subr.mxu0 0.0
        %1621 = vmatpush1.xpose.msra.mxu0 0.0
        %1622 = vmatprep.subr.mxu0 0.0
        %1623 = vmatpush1.xpose.msra.mxu0 0.0
        %1624 = vmatprep.subr.mxu0 0.0
        %1625 = vmatpush1.xpose.msra.mxu0 0.0
        %1626 = vmatprep.subr.mxu0 0.0
        %1627 = vmatpush1.xpose.msra.mxu0 0.0
        %1628 = vmatprep.subr.mxu0 0.0
        %1629 = vmatpush1.xpose.msra.mxu0 0.0
        %1630 = vmatprep.subr.mxu0 0.0
        %1631 = vmatpush1.xpose.msra.mxu0 0.0
        %1632 = vmatprep.subr.mxu0 0.0
        %1633 = vmatpush1.xpose.msra.mxu0 0.0
        %1634 = vmatprep.subr.mxu0 0.0
        %1635 = vmatpush1.xpose.msra.mxu0 0.0
        %1636 = vmatprep.subr.mxu0 0.0
        %1637 = vmatpush1.xpose.msra.mxu0 0.0
        %1638 = vmatprep.subr.mxu0 0.0
        %1639 = vmatpush1.xpose.msra.mxu0 0.0
        %1640 = vmatprep.subr.mxu0 0.0
        %1641 = vmatpush1.xpose.msra.mxu0 0.0
        %1642 = vmatprep.subr.mxu0 0.0
        %1643 = vmatpush1.xpose.msra.mxu0 0.0
        %1644 = vmatprep.subr.mxu0 0.0
        %1645 = vmatpush1.xpose.msra.mxu0 0.0
        %1646 = vmatprep.subr.mxu0 0.0
        %1647 = vmatpush1.xpose.msra.mxu0 0.0
        %1648 = vmatprep.subr.mxu0 0.0
        %1649 = vmatpush1.xpose.msra.mxu0 0.0
        %1650 = vmatprep.subr.mxu0 0.0
        %1651 = vmatpush1.xpose.msra.mxu0 0.0
        %1652 = vmatprep.mubr.f32.mxu0 0.0
        %1653 = vmatmul.mubr.f32.gmra.mrb[0].mxu0 %v1584
        %v1654 = vpop.f32.mrb[0].mxu0
        %v1655 = vadd.f32 %v853, %v1654
        %v1656 = vpop.f32.mrb[0].mxu0
        %1657 = vdwg.mxu0
        %1658 = vrot.lane.b32.xlu0 %v739, 96
        %v1659 = vpop.permute.xlu0 %1658
        %1660 = vrot.lane.b32.xlu0 %v741, 96
        %v1661 = vpop.permute.xlu0 %1660
        %v1662 = vsel %vm856, %v1659, 0
        %v1664 = vsel %vm856, %v1661, 0
        %1666 = vmatprep.subr.mxu0 0.0
        %1667 = vmatpush1.xpose.msra.mxu0 %v1664
        %1668 = vmatprep.subr.mxu0 0.0
        %1669 = vmatpush1.xpose.msra.mxu0 0.0
        %1670 = vmatprep.subr.mxu0 0.0
        %1671 = vmatpush1.xpose.msra.mxu0 0.0
        %1672 = vmatprep.subr.mxu0 0.0
        %1673 = vmatpush1.xpose.msra.mxu0 0.0
        %1674 = vmatprep.subr.mxu0 0.0
        %1675 = vmatpush1.xpose.msra.mxu0 0.0
        %1676 = vmatprep.subr.mxu0 0.0
        %1677 = vmatpush1.xpose.msra.mxu0 0.0
        %1678 = vmatprep.subr.mxu0 0.0
        %1679 = vmatpush1.xpose.msra.mxu0 0.0
        %1680 = vmatprep.subr.mxu0 0.0
        %1681 = vmatpush1.xpose.msra.mxu0 0.0
        %1682 = vmatprep.subr.mxu0 0.0
        %1683 = vmatpush1.xpose.msra.mxu0 0.0
        %1684 = vmatprep.subr.mxu0 0.0
        %1685 = vmatpush1.xpose.msra.mxu0 0.0
        %1686 = vmatprep.subr.mxu0 0.0
        %1687 = vmatpush1.xpose.msra.mxu0 0.0
        %1688 = vmatprep.subr.mxu0 0.0
        %1689 = vmatpush1.xpose.msra.mxu0 0.0
        %1690 = vmatprep.subr.mxu0 0.0
        %1691 = vmatpush1.xpose.msra.mxu0 0.0
        %1692 = vmatprep.subr.mxu0 0.0
        %1693 = vmatpush1.xpose.msra.mxu0 0.0
        %1694 = vmatprep.subr.mxu0 0.0
        %1695 = vmatpush1.xpose.msra.mxu0 0.0
        %1696 = vmatprep.subr.mxu0 0.0
        %1697 = vmatpush1.xpose.msra.mxu0 0.0
        %1698 = vmatprep.subr.mxu0 0.0
        %1699 = vmatpush1.xpose.msra.mxu0 0.0
        %1700 = vmatprep.subr.mxu0 0.0
        %1701 = vmatpush1.xpose.msra.mxu0 0.0
        %1702 = vmatprep.subr.mxu0 0.0
        %1703 = vmatpush1.xpose.msra.mxu0 0.0
        %1704 = vmatprep.subr.mxu0 0.0
        %1705 = vmatpush1.xpose.msra.mxu0 0.0
        %1706 = vmatprep.subr.mxu0 0.0
        %1707 = vmatpush1.xpose.msra.mxu0 0.0
        %1708 = vmatprep.subr.mxu0 0.0
        %1709 = vmatpush1.xpose.msra.mxu0 0.0
        %1710 = vmatprep.subr.mxu0 0.0
        %1711 = vmatpush1.xpose.msra.mxu0 0.0
        %1712 = vmatprep.subr.mxu0 0.0
        %1713 = vmatpush1.xpose.msra.mxu0 0.0
        %1714 = vmatprep.subr.mxu0 0.0
        %1715 = vmatpush1.xpose.msra.mxu0 0.0
        %1716 = vmatprep.subr.mxu0 0.0
        %1717 = vmatpush1.xpose.msra.mxu0 0.0
        %1718 = vmatprep.subr.mxu0 0.0
        %1719 = vmatpush1.xpose.msra.mxu0 0.0
        %1720 = vmatprep.subr.mxu0 0.0
        %1721 = vmatpush1.xpose.msra.mxu0 0.0
        %1722 = vmatprep.subr.mxu0 0.0
        %1723 = vmatpush1.xpose.msra.mxu0 0.0
        %1724 = vmatprep.subr.mxu0 0.0
        %1725 = vmatpush1.xpose.msra.mxu0 0.0
        %1726 = vmatprep.subr.mxu0 0.0
        %1727 = vmatpush1.xpose.msra.mxu0 0.0
        %1728 = vmatprep.subr.mxu0 0.0
        %1729 = vmatpush1.xpose.msra.mxu0 0.0
        %1730 = vmatprep.mubr.f32.mxu0 0.0
        %1731 = vmatmul.mubr.f32.gmra.mrb[0].mxu0 %v1662
        %v1732 = vpop.f32.mrb[0].mxu0
        %v1733 = vadd.f32 %v854, %v1732
        %v1734 = vpop.f32.mrb[0].mxu0
        %1735 = vdwg.mxu0
        %1736 = vrot.lane.b32.xlu0 %v745, 96
        %v1737 = vpop.permute.xlu0 %1736
        %1738 = vrot.lane.b32.xlu0 %v747, 96
        %v1739 = vpop.permute.xlu0 %1738
        %v1740 = vsel %vm856, %v1737, 0
        %v1742 = vsel %vm856, %v1739, 0
        %1744 = vmatprep.subr.mxu0 0.0
        %1745 = vmatpush1.xpose.msra.mxu0 %v1742
        %1746 = vmatprep.subr.mxu0 0.0
        %1747 = vmatpush1.xpose.msra.mxu0 0.0
        %1748 = vmatprep.subr.mxu0 0.0
        %1749 = vmatpush1.xpose.msra.mxu0 0.0
        %1750 = vmatprep.subr.mxu0 0.0
        %1751 = vmatpush1.xpose.msra.mxu0 0.0
        %1752 = vmatprep.subr.mxu0 0.0
        %1753 = vmatpush1.xpose.msra.mxu0 0.0
        %1754 = vmatprep.subr.mxu0 0.0
        %1755 = vmatpush1.xpose.msra.mxu0 0.0
        %1756 = vmatprep.subr.mxu0 0.0
        %1757 = vmatpush1.xpose.msra.mxu0 0.0
        %1758 = vmatprep.subr.mxu0 0.0
        %1759 = vmatpush1.xpose.msra.mxu0 0.0
        %1760 = vmatprep.subr.mxu0 0.0
        %1761 = vmatpush1.xpose.msra.mxu0 0.0
        %1762 = vmatprep.subr.mxu0 0.0
        %1763 = vmatpush1.xpose.msra.mxu0 0.0
        %1764 = vmatprep.subr.mxu0 0.0
        %1765 = vmatpush1.xpose.msra.mxu0 0.0
        %1766 = vmatprep.subr.mxu0 0.0
        %1767 = vmatpush1.xpose.msra.mxu0 0.0
        %1768 = vmatprep.subr.mxu0 0.0
        %1769 = vmatpush1.xpose.msra.mxu0 0.0
        %1770 = vmatprep.subr.mxu0 0.0
        %1771 = vmatpush1.xpose.msra.mxu0 0.0
        %1772 = vmatprep.subr.mxu0 0.0
        %1773 = vmatpush1.xpose.msra.mxu0 0.0
        %1774 = vmatprep.subr.mxu0 0.0
        %1775 = vmatpush1.xpose.msra.mxu0 0.0
        %1776 = vmatprep.subr.mxu0 0.0
        %1777 = vmatpush1.xpose.msra.mxu0 0.0
        %1778 = vmatprep.subr.mxu0 0.0
        %1779 = vmatpush1.xpose.msra.mxu0 0.0
        %1780 = vmatprep.subr.mxu0 0.0
        %1781 = vmatpush1.xpose.msra.mxu0 0.0
        %1782 = vmatprep.subr.mxu0 0.0
        %1783 = vmatpush1.xpose.msra.mxu0 0.0
        %1784 = vmatprep.subr.mxu0 0.0
        %1785 = vmatpush1.xpose.msra.mxu0 0.0
        %1786 = vmatprep.subr.mxu0 0.0
        %1787 = vmatpush1.xpose.msra.mxu0 0.0
        %1788 = vmatprep.subr.mxu0 0.0
        %1789 = vmatpush1.xpose.msra.mxu0 0.0
        %1790 = vmatprep.subr.mxu0 0.0
        %1791 = vmatpush1.xpose.msra.mxu0 0.0
        %1792 = vmatprep.subr.mxu0 0.0
        %1793 = vmatpush1.xpose.msra.mxu0 0.0
        %1794 = vmatprep.subr.mxu0 0.0
        %1795 = vmatpush1.xpose.msra.mxu0 0.0
        %1796 = vmatprep.subr.mxu0 0.0
        %1797 = vmatpush1.xpose.msra.mxu0 0.0
        %1798 = vmatprep.subr.mxu0 0.0
        %1799 = vmatpush1.xpose.msra.mxu0 0.0
        %1800 = vmatprep.subr.mxu0 0.0
        %1801 = vmatpush1.xpose.msra.mxu0 0.0
        %1802 = vmatprep.subr.mxu0 0.0
        %1803 = vmatpush1.xpose.msra.mxu0 0.0
        %1804 = vmatprep.subr.mxu0 0.0
        %1805 = vmatpush1.xpose.msra.mxu0 0.0
        %1806 = vmatprep.subr.mxu0 0.0
        %1807 = vmatpush1.xpose.msra.mxu0 0.0
        %1808 = vmatprep.mubr.f32.mxu0 0.0
        %1809 = vmatmul.mubr.f32.gmra.mrb[0].mxu0 %v1740
        %v1810 = vpop.f32.mrb[0].mxu0
        %v1811 = vadd.f32 %v855, %v1810
        %v1812 = vpop.f32.mrb[0].mxu0
        %1813 = vdwg.mxu0
        %v1814 = vsel %vm1161, %v1577, -inf
        %1815 = vmax.xlane.f32.xlu0 %v1814
        %v1816 = vpop.xlane.xlu0 %1815
        %v1817 = vsel %vm1161, %v1655, -inf
        %1818 = vmax.xlane.f32.xlu0 %v1817
        %v1819 = vpop.xlane.xlu0 %1818
        %v1820 = vsel %vm1161, %v1733, -inf
        %1821 = vmax.xlane.f32.xlu0 %v1820
        %v1822 = vpop.xlane.xlu0 %1821
        %v1823 = vsel %vm1161, %v1811, -inf
        %1824 = vmax.xlane.f32.xlu0 %v1823
        %v1825 = vpop.xlane.xlu0 %1824
        %v1826 = vsub.f32 %v1577, %v1816
        %v1827 = vsub.f32 %v1655, %v1819
        %v1828 = vsub.f32 %v1733, %v1822
        %v1829 = vsub.f32 %v1811, %v1825
        %v1830 = vmul.f32 %v1826, 1.442695
        %v1831 = vpow.pop %v1830
        %v1832 = vmul.f32 %v1827, 1.442695
        %v1833 = vpow.pop %v1832
        %v1834 = vmul.f32 %v1828, 1.442695
        %v1835 = vpow.pop %v1834
        %v1836 = vmul.f32 %v1829, 1.442695
        %v1837 = vpow.pop %v1836
        %v1838 = vsel %vm1161, %v1831, 0.0
        %1839 = vadd.xlane.f32.xlu0 %v1838
        %v1840 = vpop.xlane.xlu0 %1839
        %v1841 = vsel %vm1161, %v1833, 0.0
        %1842 = vadd.xlane.f32.xlu0 %v1841
        %v1843 = vpop.xlane.xlu0 %1842
        %v1844 = vsel %vm1161, %v1835, 0.0
        %1845 = vadd.xlane.f32.xlu0 %v1844
        %v1846 = vpop.xlane.xlu0 %1845
        %v1847 = vsel %vm1161, %v1837, 0.0
        %1848 = vadd.xlane.f32.xlu0 %v1847
        %v1849 = vpop.xlane.xlu0 %1848
        %v1850 = vrcp.pop %v1840
        %v1851 = vrcp.pop %v1843
        %v1852 = vrcp.pop %v1846
        %v1853 = vrcp.pop %v1849
        %v1854 = vmul.f32 %v1831, %v1850
        %v1855 = vmul.f32 %v1833, %v1851
        %v1856 = vmul.f32 %v1835, %v1852
        %v1857 = vmul.f32 %v1837, %v1853
        %1859 = vrot.lane.b32.xlu0 %v816, 96
        %v1860 = vpop.permute.xlu0 %1859
        %v1863 = vsel %vm1161, %v1854, 0
        %1865 = vmatprep.subr.mxu0 0.0
        %1866 = vmatpush1.msra.mxu0 %v1860
        %1867 = vmatprep.subr.mxu0 0.0
        %1868 = vmatpush1.msra.mxu0 0.0
        %1869 = vmatprep.subr.mxu0 0.0
        %1870 = vmatpush1.msra.mxu0 0.0
        %1871 = vmatprep.subr.mxu0 0.0
        %1872 = vmatpush1.msra.mxu0 0.0
        %1873 = vmatprep.subr.mxu0 0.0
        %1874 = vmatpush1.msra.mxu0 0.0
        %1875 = vmatprep.subr.mxu0 0.0
        %1876 = vmatpush1.msra.mxu0 0.0
        %1877 = vmatprep.subr.mxu0 0.0
        %1878 = vmatpush1.msra.mxu0 0.0
        %1879 = vmatprep.subr.mxu0 0.0
        %1880 = vmatpush1.msra.mxu0 0.0
        %1881 = vmatprep.subr.mxu0 0.0
        %1882 = vmatpush1.msra.mxu0 0.0
        %1883 = vmatprep.subr.mxu0 0.0
        %1884 = vmatpush1.msra.mxu0 0.0
        %1885 = vmatprep.subr.mxu0 0.0
        %1886 = vmatpush1.msra.mxu0 0.0
        %1887 = vmatprep.subr.mxu0 0.0
        %1888 = vmatpush1.msra.mxu0 0.0
        %1889 = vmatprep.subr.mxu0 0.0
        %1890 = vmatpush1.msra.mxu0 0.0
        %1891 = vmatprep.subr.mxu0 0.0
        %1892 = vmatpush1.msra.mxu0 0.0
        %1893 = vmatprep.subr.mxu0 0.0
        %1894 = vmatpush1.msra.mxu0 0.0
        %1895 = vmatprep.subr.mxu0 0.0
        %1896 = vmatpush1.msra.mxu0 0.0
        %1897 = vmatprep.subr.mxu0 0.0
        %1898 = vmatpush1.msra.mxu0 0.0
        %1899 = vmatprep.subr.mxu0 0.0
        %1900 = vmatpush1.msra.mxu0 0.0
        %1901 = vmatprep.subr.mxu0 0.0
        %1902 = vmatpush1.msra.mxu0 0.0
        %1903 = vmatprep.subr.mxu0 0.0
        %1904 = vmatpush1.msra.mxu0 0.0
        %1905 = vmatprep.subr.mxu0 0.0
        %1906 = vmatpush1.msra.mxu0 0.0
        %1907 = vmatprep.subr.mxu0 0.0
        %1908 = vmatpush1.msra.mxu0 0.0
        %1909 = vmatprep.subr.mxu0 0.0
        %1910 = vmatpush1.msra.mxu0 0.0
        %1911 = vmatprep.subr.mxu0 0.0
        %1912 = vmatpush1.msra.mxu0 0.0
        %1913 = vmatprep.subr.mxu0 0.0
        %1914 = vmatpush1.msra.mxu0 0.0
        %1915 = vmatprep.subr.mxu0 0.0
        %1916 = vmatpush1.msra.mxu0 0.0
        %1917 = vmatprep.subr.mxu0 0.0
        %1918 = vmatpush1.msra.mxu0 0.0
        %1919 = vmatprep.subr.mxu0 0.0
        %1920 = vmatpush1.msra.mxu0 0.0
        %1921 = vmatprep.subr.mxu0 0.0
        %1922 = vmatpush1.msra.mxu0 0.0
        %1923 = vmatprep.subr.mxu0 0.0
        %1924 = vmatpush1.msra.mxu0 0.0
        %1925 = vmatprep.subr.mxu0 0.0
        %1926 = vmatpush1.msra.mxu0 0.0
        %1927 = vmatprep.subr.mxu0 0.0
        %1928 = vmatpush1.msra.mxu0 0.0
        %1929 = vmatprep.mubr.f32.mxu0 0.0
        %1930 = vmatmul.mubr.f32.gmra.mrb[0].mxu0 %v1863
        %v1931 = vpop.f32.mrb[0].mxu0
        %v1932 = vadd.f32 0.0, %v1931
        %v1933 = vpop.f32.mrb[0].mxu0
        %1934 = vdwg.mxu0
        %1936 = vrot.lane.b32.xlu0 %v821, 96
        %v1937 = vpop.permute.xlu0 %1936
        %v1940 = vsel %vm1161, %v1855, 0
        %1942 = vmatprep.subr.mxu0 0.0
        %1943 = vmatpush1.msra.mxu0 %v1937
        %1944 = vmatprep.subr.mxu0 0.0
        %1945 = vmatpush1.msra.mxu0 0.0
        %1946 = vmatprep.subr.mxu0 0.0
        %1947 = vmatpush1.msra.mxu0 0.0
        %1948 = vmatprep.subr.mxu0 0.0
        %1949 = vmatpush1.msra.mxu0 0.0
        %1950 = vmatprep.subr.mxu0 0.0
        %1951 = vmatpush1.msra.mxu0 0.0
        %1952 = vmatprep.subr.mxu0 0.0
        %1953 = vmatpush1.msra.mxu0 0.0
        %1954 = vmatprep.subr.mxu0 0.0
        %1955 = vmatpush1.msra.mxu0 0.0
        %1956 = vmatprep.subr.mxu0 0.0
        %1957 = vmatpush1.msra.mxu0 0.0
        %1958 = vmatprep.subr.mxu0 0.0
        %1959 = vmatpush1.msra.mxu0 0.0
        %1960 = vmatprep.subr.mxu0 0.0
        %1961 = vmatpush1.msra.mxu0 0.0
        %1962 = vmatprep.subr.mxu0 0.0
        %1963 = vmatpush1.msra.mxu0 0.0
        %1964 = vmatprep.subr.mxu0 0.0
        %1965 = vmatpush1.msra.mxu0 0.0
        %1966 = vmatprep.subr.mxu0 0.0
        %1967 = vmatpush1.msra.mxu0 0.0
        %1968 = vmatprep.subr.mxu0 0.0
        %1969 = vmatpush1.msra.mxu0 0.0
        %1970 = vmatprep.subr.mxu0 0.0
        %1971 = vmatpush1.msra.mxu0 0.0
        %1972 = vmatprep.subr.mxu0 0.0
        %1973 = vmatpush1.msra.mxu0 0.0
        %1974 = vmatprep.subr.mxu0 0.0
        %1975 = vmatpush1.msra.mxu0 0.0
        %1976 = vmatprep.subr.mxu0 0.0
        %1977 = vmatpush1.msra.mxu0 0.0
        %1978 = vmatprep.subr.mxu0 0.0
        %1979 = vmatpush1.msra.mxu0 0.0
        %1980 = vmatprep.subr.mxu0 0.0
        %1981 = vmatpush1.msra.mxu0 0.0
        %1982 = vmatprep.subr.mxu0 0.0
        %1983 = vmatpush1.msra.mxu0 0.0
        %1984 = vmatprep.subr.mxu0 0.0
        %1985 = vmatpush1.msra.mxu0 0.0
        %1986 = vmatprep.subr.mxu0 0.0
        %1987 = vmatpush1.msra.mxu0 0.0
        %1988 = vmatprep.subr.mxu0 0.0
        %1989 = vmatpush1.msra.mxu0 0.0
        %1990 = vmatprep.subr.mxu0 0.0
        %1991 = vmatpush1.msra.mxu0 0.0
        %1992 = vmatprep.subr.mxu0 0.0
        %1993 = vmatpush1.msra.mxu0 0.0
        %1994 = vmatprep.subr.mxu0 0.0
        %1995 = vmatpush1.msra.mxu0 0.0
        %1996 = vmatprep.subr.mxu0 0.0
        %1997 = vmatpush1.msra.mxu0 0.0
        %1998 = vmatprep.subr.mxu0 0.0
        %1999 = vmatpush1.msra.mxu0 0.0
        %2000 = vmatprep.subr.mxu0 0.0
        %2001 = vmatpush1.msra.mxu0 0.0
        %2002 = vmatprep.subr.mxu0 0.0
        %2003 = vmatpush1.msra.mxu0 0.0
        %2004 = vmatprep.subr.mxu0 0.0
        %2005 = vmatpush1.msra.mxu0 0.0
        %2006 = vmatprep.mubr.f32.mxu0 0.0
        %2007 = vmatmul.mubr.f32.gmra.mrb[0].mxu0 %v1940
        %v2008 = vpop.f32.mrb[0].mxu0
        %v2009 = vadd.f32 0.0, %v2008
        %v2010 = vpop.f32.mrb[0].mxu0
        %2011 = vdwg.mxu0
        %2013 = vrot.lane.b32.xlu0 %v826, 96
        %v2014 = vpop.permute.xlu0 %2013
        %v2017 = vsel %vm1161, %v1856, 0
        %2019 = vmatprep.subr.mxu0 0.0
        %2020 = vmatpush1.msra.mxu0 %v2014
        %2021 = vmatprep.subr.mxu0 0.0
        %2022 = vmatpush1.msra.mxu0 0.0
        %2023 = vmatprep.subr.mxu0 0.0
        %2024 = vmatpush1.msra.mxu0 0.0
        %2025 = vmatprep.subr.mxu0 0.0
        %2026 = vmatpush1.msra.mxu0 0.0
        %2027 = vmatprep.subr.mxu0 0.0
        %2028 = vmatpush1.msra.mxu0 0.0
        %2029 = vmatprep.subr.mxu0 0.0
        %2030 = vmatpush1.msra.mxu0 0.0
        %2031 = vmatprep.subr.mxu0 0.0
        %2032 = vmatpush1.msra.mxu0 0.0
        %2033 = vmatprep.subr.mxu0 0.0
        %2034 = vmatpush1.msra.mxu0 0.0
        %2035 = vmatprep.subr.mxu0 0.0
        %2036 = vmatpush1.msra.mxu0 0.0
        %2037 = vmatprep.subr.mxu0 0.0
        %2038 = vmatpush1.msra.mxu0 0.0
        %2039 = vmatprep.subr.mxu0 0.0
        %2040 = vmatpush1.msra.mxu0 0.0
        %2041 = vmatprep.subr.mxu0 0.0
        %2042 = vmatpush1.msra.mxu0 0.0
        %2043 = vmatprep.subr.mxu0 0.0
        %2044 = vmatpush1.msra.mxu0 0.0
        %2045 = vmatprep.subr.mxu0 0.0
        %2046 = vmatpush1.msra.mxu0 0.0
        %2047 = vmatprep.subr.mxu0 0.0
        %2048 = vmatpush1.msra.mxu0 0.0
        %2049 = vmatprep.subr.mxu0 0.0
        %2050 = vmatpush1.msra.mxu0 0.0
        %2051 = vmatprep.subr.mxu0 0.0
        %2052 = vmatpush1.msra.mxu0 0.0
        %2053 = vmatprep.subr.mxu0 0.0
        %2054 = vmatpush1.msra.mxu0 0.0
        %2055 = vmatprep.subr.mxu0 0.0
        %2056 = vmatpush1.msra.mxu0 0.0
        %2057 = vmatprep.subr.mxu0 0.0
        %2058 = vmatpush1.msra.mxu0 0.0
        %2059 = vmatprep.subr.mxu0 0.0
        %2060 = vmatpush1.msra.mxu0 0.0
        %2061 = vmatprep.subr.mxu0 0.0
        %2062 = vmatpush1.msra.mxu0 0.0
        %2063 = vmatprep.subr.mxu0 0.0
        %2064 = vmatpush1.msra.mxu0 0.0
        %2065 = vmatprep.subr.mxu0 0.0
        %2066 = vmatpush1.msra.mxu0 0.0
        %2067 = vmatprep.subr.mxu0 0.0
        %2068 = vmatpush1.msra.mxu0 0.0
        %2069 = vmatprep.subr.mxu0 0.0
        %2070 = vmatpush1.msra.mxu0 0.0
        %2071 = vmatprep.subr.mxu0 0.0
        %2072 = vmatpush1.msra.mxu0 0.0
        %2073 = vmatprep.subr.mxu0 0.0
        %2074 = vmatpush1.msra.mxu0 0.0
        %2075 = vmatprep.subr.mxu0 0.0
        %2076 = vmatpush1.msra.mxu0 0.0
        %2077 = vmatprep.subr.mxu0 0.0
        %2078 = vmatpush1.msra.mxu0 0.0
        %2079 = vmatprep.subr.mxu0 0.0
        %2080 = vmatpush1.msra.mxu0 0.0
        %2081 = vmatprep.subr.mxu0 0.0
        %2082 = vmatpush1.msra.mxu0 0.0
        %2083 = vmatprep.mubr.f32.mxu0 0.0
        %2084 = vmatmul.mubr.f32.gmra.mrb[0].mxu0 %v2017
        %v2085 = vpop.f32.mrb[0].mxu0
        %v2086 = vadd.f32 0.0, %v2085
        %v2087 = vpop.f32.mrb[0].mxu0
        %2088 = vdwg.mxu0
        %2090 = vrot.lane.b32.xlu0 %v831, 96
        %v2091 = vpop.permute.xlu0 %2090
        %v2094 = vsel %vm1161, %v1857, 0
        %2096 = vmatprep.subr.mxu0 0.0
        %2097 = vmatpush1.msra.mxu0 %v2091
        %2098 = vmatprep.subr.mxu0 0.0
        %2099 = vmatpush1.msra.mxu0 0.0
        %2100 = vmatprep.subr.mxu0 0.0
        %2101 = vmatpush1.msra.mxu0 0.0
        %2102 = vmatprep.subr.mxu0 0.0
        %2103 = vmatpush1.msra.mxu0 0.0
        %2104 = vmatprep.subr.mxu0 0.0
        %2105 = vmatpush1.msra.mxu0 0.0
        %2106 = vmatprep.subr.mxu0 0.0
        %2107 = vmatpush1.msra.mxu0 0.0
        %2108 = vmatprep.subr.mxu0 0.0
        %2109 = vmatpush1.msra.mxu0 0.0
        %2110 = vmatprep.subr.mxu0 0.0
        %2111 = vmatpush1.msra.mxu0 0.0
        %2112 = vmatprep.subr.mxu0 0.0
        %2113 = vmatpush1.msra.mxu0 0.0
        %2114 = vmatprep.subr.mxu0 0.0
        %2115 = vmatpush1.msra.mxu0 0.0
        %2116 = vmatprep.subr.mxu0 0.0
        %2117 = vmatpush1.msra.mxu0 0.0
        %2118 = vmatprep.subr.mxu0 0.0
        %2119 = vmatpush1.msra.mxu0 0.0
        %2120 = vmatprep.subr.mxu0 0.0
        %2121 = vmatpush1.msra.mxu0 0.0
        %2122 = vmatprep.subr.mxu0 0.0
        %2123 = vmatpush1.msra.mxu0 0.0
        %2124 = vmatprep.subr.mxu0 0.0
        %2125 = vmatpush1.msra.mxu0 0.0
        %2126 = vmatprep.subr.mxu0 0.0
        %2127 = vmatpush1.msra.mxu0 0.0
        %2128 = vmatprep.subr.mxu0 0.0
        %2129 = vmatpush1.msra.mxu0 0.0
        %2130 = vmatprep.subr.mxu0 0.0
        %2131 = vmatpush1.msra.mxu0 0.0
        %2132 = vmatprep.subr.mxu0 0.0
        %2133 = vmatpush1.msra.mxu0 0.0
        %2134 = vmatprep.subr.mxu0 0.0
        %2135 = vmatpush1.msra.mxu0 0.0
        %2136 = vmatprep.subr.mxu0 0.0
        %2137 = vmatpush1.msra.mxu0 0.0
        %2138 = vmatprep.subr.mxu0 0.0
        %2139 = vmatpush1.msra.mxu0 0.0
        %2140 = vmatprep.subr.mxu0 0.0
        %2141 = vmatpush1.msra.mxu0 0.0
        %2142 = vmatprep.subr.mxu0 0.0
        %2143 = vmatpush1.msra.mxu0 0.0
        %2144 = vmatprep.subr.mxu0 0.0
        %2145 = vmatpush1.msra.mxu0 0.0
        %2146 = vmatprep.subr.mxu0 0.0
        %2147 = vmatpush1.msra.mxu0 0.0
        %2148 = vmatprep.subr.mxu0 0.0
        %2149 = vmatpush1.msra.mxu0 0.0
        %2150 = vmatprep.subr.mxu0 0.0
        %2151 = vmatpush1.msra.mxu0 0.0
        %2152 = vmatprep.subr.mxu0 0.0
        %2153 = vmatpush1.msra.mxu0 0.0
        %2154 = vmatprep.subr.mxu0 0.0
        %2155 = vmatpush1.msra.mxu0 0.0
        %2156 = vmatprep.subr.mxu0 0.0
        %2157 = vmatpush1.msra.mxu0 0.0
        %2158 = vmatprep.subr.mxu0 0.0
        %2159 = vmatpush1.msra.mxu0 0.0
        %2160 = vmatprep.mubr.f32.mxu0 0.0
        %2161 = vmatmul.mubr.f32.gmra.mrb[0].mxu0 %v2094
        %v2162 = vpop.f32.mrb[0].mxu0
        %v2163 = vadd.f32 0.0, %v2162
        %v2164 = vpop.f32.mrb[0].mxu0
        %2165 = vdwg.mxu0
        %s2166 = scalar_lea.vmem [#allocation9], 32
        %v2167 = vld [vmem:[%s2166] sm:$0xff]
        %v2168 = vld [vmem:[%s2166 + $0x8] sm:$0xff]
        %v2169 = vld [vmem:[%s2166 + $0x10] sm:$0xff]
        %v2170 = vld [vmem:[%s2166 + $0x18] sm:$0xff]
        %v2172 = vsel %vm856, %v1932, 0
        %v2175 = vsel %vm856, %v2009, 0
        %v2178 = vsel %vm856, %v2086, 0
        %v2181 = vsel %vm856, %v2163, 0
        %2183 = vmatprep.subr.mxu0 0.0
        %2184 = vmatpush1.msra.mxu0 %v2167
        %2185 = vmatprep.subr.mxu0 0.0
        %2186 = vmatpush1.msra.mxu0 %v2168
        %2187 = vmatprep.subr.mxu0 0.0
        %2188 = vmatpush1.msra.mxu0 %v2169
        %2189 = vmatprep.subr.mxu0 0.0
        %2190 = vmatpush1.msra.mxu0 %v2170
        %2191 = vmatprep.subr.mxu0 0.0
        %2192 = vmatpush1.msra.mxu0 0.0
        %2193 = vmatprep.subr.mxu0 0.0
        %2194 = vmatpush1.msra.mxu0 0.0
        %2195 = vmatprep.subr.mxu0 0.0
        %2196 = vmatpush1.msra.mxu0 0.0
        %2197 = vmatprep.subr.mxu0 0.0
        %2198 = vmatpush1.msra.mxu0 0.0
        %2199 = vmatprep.subr.mxu0 0.0
        %2200 = vmatpush1.msra.mxu0 0.0
        %2201 = vmatprep.subr.mxu0 0.0
        %2202 = vmatpush1.msra.mxu0 0.0
        %2203 = vmatprep.subr.mxu0 0.0
        %2204 = vmatpush1.msra.mxu0 0.0
        %2205 = vmatprep.subr.mxu0 0.0
        %2206 = vmatpush1.msra.mxu0 0.0
        %2207 = vmatprep.subr.mxu0 0.0
        %2208 = vmatpush1.msra.mxu0 0.0
        %2209 = vmatprep.subr.mxu0 0.0
        %2210 = vmatpush1.msra.mxu0 0.0
        %2211 = vmatprep.subr.mxu0 0.0
        %2212 = vmatpush1.msra.mxu0 0.0
        %2213 = vmatprep.subr.mxu0 0.0
        %2214 = vmatpush1.msra.mxu0 0.0
        %2215 = vmatprep.subr.mxu0 0.0
        %2216 = vmatpush1.msra.mxu0 0.0
        %2217 = vmatprep.subr.mxu0 0.0
        %2218 = vmatpush1.msra.mxu0 0.0
        %2219 = vmatprep.subr.mxu0 0.0
        %2220 = vmatpush1.msra.mxu0 0.0
        %2221 = vmatprep.subr.mxu0 0.0
        %2222 = vmatpush1.msra.mxu0 0.0
        %2223 = vmatprep.subr.mxu0 0.0
        %2224 = vmatpush1.msra.mxu0 0.0
        %2225 = vmatprep.subr.mxu0 0.0
        %2226 = vmatpush1.msra.mxu0 0.0
        %2227 = vmatprep.subr.mxu0 0.0
        %2228 = vmatpush1.msra.mxu0 0.0
        %2229 = vmatprep.subr.mxu0 0.0
        %2230 = vmatpush1.msra.mxu0 0.0
        %2231 = vmatprep.subr.mxu0 0.0
        %2232 = vmatpush1.msra.mxu0 0.0
        %2233 = vmatprep.subr.mxu0 0.0
        %2234 = vmatpush1.msra.mxu0 0.0
        %2235 = vmatprep.subr.mxu0 0.0
        %2236 = vmatpush1.msra.mxu0 0.0
        %2237 = vmatprep.subr.mxu0 0.0
        %2238 = vmatpush1.msra.mxu0 0.0
        %2239 = vmatprep.subr.mxu0 0.0
        %2240 = vmatpush1.msra.mxu0 0.0
        %2241 = vmatprep.subr.mxu0 0.0
        %2242 = vmatpush1.msra.mxu0 0.0
        %2243 = vmatprep.subr.mxu0 0.0
        %2244 = vmatpush1.msra.mxu0 0.0
        %2245 = vmatprep.subr.mxu0 0.0
        %2246 = vmatpush1.msra.mxu0 0.0
        %2247 = vmatprep.mubr.f32.mxu0 0.0
        %2248 = vmatmul.mubr.f32.gmra.mrb[0].mxu0 %v2172
        %v2249 = vpop.f32.mrb[0].mxu0
        %v2250 = vadd.f32 0.0, %v2249
        %v2251 = vpop.f32.mrb[0].mxu0
        %2252 = vmatprep.mubr.f32.mxu0 0.0
        %2253 = vmatmul.mubr.f32.gmra.mrb[0].mxu0 %v2175
        %v2254 = vpop.f32.mrb[0].mxu0
        %v2255 = vadd.f32 0.0, %v2254
        %v2256 = vpop.f32.mrb[0].mxu0
        %2257 = vmatprep.mubr.f32.mxu0 0.0
        %2258 = vmatmul.mubr.f32.gmra.mrb[0].mxu0 %v2178
        %v2259 = vpop.f32.mrb[0].mxu0
        %v2260 = vadd.f32 0.0, %v2259
        %v2261 = vpop.f32.mrb[0].mxu0
        %2262 = vmatprep.mubr.f32.mxu0 0.0
        %2263 = vmatmul.mubr.f32.gmra.mrb[0].mxu0 %v2181
        %v2264 = vpop.f32.mrb[0].mxu0
        %v2265 = vadd.f32 0.0, %v2264
        %v2266 = vpop.f32.mrb[0].mxu0
        %2267 = vdwg.mxu0
        %v2269 = vsel %vm856, %v1276, 0
        %v2272 = vsel %vm856, %v1349, 0
        %v2275 = vsel %vm856, %v1422, 0
        %v2278 = vsel %vm856, %v1495, 0
        %2280 = vmatprep.subr.mxu0 0.0
        %2281 = vmatpush1.msra.mxu0 %v1498
        %2282 = vmatprep.subr.mxu0 0.0
        %2283 = vmatpush1.msra.mxu0 %v1499
        %2284 = vmatprep.subr.mxu0 0.0
        %2285 = vmatpush1.msra.mxu0 %v1500
        %2286 = vmatprep.subr.mxu0 0.0
        %2287 = vmatpush1.msra.mxu0 %v1501
        %2288 = vmatprep.subr.mxu0 0.0
        %2289 = vmatpush1.msra.mxu0 0.0
        %2290 = vmatprep.subr.mxu0 0.0
        %2291 = vmatpush1.msra.mxu0 0.0
        %2292 = vmatprep.subr.mxu0 0.0
        %2293 = vmatpush1.msra.mxu0 0.0
        %2294 = vmatprep.subr.mxu0 0.0
        %2295 = vmatpush1.msra.mxu0 0.0
        %2296 = vmatprep.subr.mxu0 0.0
        %2297 = vmatpush1.msra.mxu0 0.0
        %2298 = vmatprep.subr.mxu0 0.0
        %2299 = vmatpush1.msra.mxu0 0.0
        %2300 = vmatprep.subr.mxu0 0.0
        %2301 = vmatpush1.msra.mxu0 0.0
        %2302 = vmatprep.subr.mxu0 0.0
        %2303 = vmatpush1.msra.mxu0 0.0
        %2304 = vmatprep.subr.mxu0 0.0
        %2305 = vmatpush1.msra.mxu0 0.0
        %2306 = vmatprep.subr.mxu0 0.0
        %2307 = vmatpush1.msra.mxu0 0.0
        %2308 = vmatprep.subr.mxu0 0.0
        %2309 = vmatpush1.msra.mxu0 0.0
        %2310 = vmatprep.subr.mxu0 0.0
        %2311 = vmatpush1.msra.mxu0 0.0
        %2312 = vmatprep.subr.mxu0 0.0
        %2313 = vmatpush1.msra.mxu0 0.0
        %2314 = vmatprep.subr.mxu0 0.0
        %2315 = vmatpush1.msra.mxu0 0.0
        %2316 = vmatprep.subr.mxu0 0.0
        %2317 = vmatpush1.msra.mxu0 0.0
        %2318 = vmatprep.subr.mxu0 0.0
        %2319 = vmatpush1.msra.mxu0 0.0
        %2320 = vmatprep.subr.mxu0 0.0
        %2321 = vmatpush1.msra.mxu0 0.0
        %2322 = vmatprep.subr.mxu0 0.0
        %2323 = vmatpush1.msra.mxu0 0.0
        %2324 = vmatprep.subr.mxu0 0.0
        %2325 = vmatpush1.msra.mxu0 0.0
        %2326 = vmatprep.subr.mxu0 0.0
        %2327 = vmatpush1.msra.mxu0 0.0
        %2328 = vmatprep.subr.mxu0 0.0
        %2329 = vmatpush1.msra.mxu0 0.0
        %2330 = vmatprep.subr.mxu0 0.0
        %2331 = vmatpush1.msra.mxu0 0.0
        %2332 = vmatprep.subr.mxu0 0.0
        %2333 = vmatpush1.msra.mxu0 0.0
        %2334 = vmatprep.subr.mxu0 0.0
        %2335 = vmatpush1.msra.mxu0 0.0
        %2336 = vmatprep.subr.mxu0 0.0
        %2337 = vmatpush1.msra.mxu0 0.0
        %2338 = vmatprep.subr.mxu0 0.0
        %2339 = vmatpush1.msra.mxu0 0.0
        %2340 = vmatprep.subr.mxu0 0.0
        %2341 = vmatpush1.msra.mxu0 0.0
        %2342 = vmatprep.subr.mxu0 0.0
        %2343 = vmatpush1.msra.mxu0 0.0
        %2344 = vmatprep.mubr.f32.mxu0 0.0
        %2345 = vmatmul.mubr.f32.gmra.mrb[0].mxu0 %v2269
        %v2346 = vpop.f32.mrb[0].mxu0
        %v2347 = vadd.f32 %v2250, %v2346
        %v2348 = vpop.f32.mrb[0].mxu0
        %2349 = vmatprep.mubr.f32.mxu0 0.0
        %2350 = vmatmul.mubr.f32.gmra.mrb[0].mxu0 %v2272
        %v2351 = vpop.f32.mrb[0].mxu0
        %v2352 = vadd.f32 %v2255, %v2351
        %v2353 = vpop.f32.mrb[0].mxu0
        %2354 = vmatprep.mubr.f32.mxu0 0.0
        %2355 = vmatmul.mubr.f32.gmra.mrb[0].mxu0 %v2275
        %v2356 = vpop.f32.mrb[0].mxu0
        %v2357 = vadd.f32 %v2260, %v2356
        %v2358 = vpop.f32.mrb[0].mxu0
        %2359 = vmatprep.mubr.f32.mxu0 0.0
        %2360 = vmatmul.mubr.f32.gmra.mrb[0].mxu0 %v2278
        %v2361 = vpop.f32.mrb[0].mxu0
        %v2362 = vadd.f32 %v2265, %v2361
        %v2363 = vpop.f32.mrb[0].mxu0
        %2364 = vdwg.mxu0
        %2365 = vrot.lane.b32.xlu0 %v727, 64
        %v2366 = vpop.permute.xlu0 %2365
        %2367 = vrot.lane.b32.xlu0 %v729, 64
        %v2368 = vpop.permute.xlu0 %2367
        %v2369 = vsel %vm856, %v2366, 0
        %v2371 = vsel %vm856, %v2368, 0
        %2373 = vmatprep.subr.mxu0 0.0
        %2374 = vmatpush1.xpose.msra.mxu0 %v2371
        %2375 = vmatprep.subr.mxu0 0.0
        %2376 = vmatpush1.xpose.msra.mxu0 0.0
        %2377 = vmatprep.subr.mxu0 0.0
        %2378 = vmatpush1.xpose.msra.mxu0 0.0
        %2379 = vmatprep.subr.mxu0 0.0
        %2380 = vmatpush1.xpose.msra.mxu0 0.0
        %2381 = vmatprep.subr.mxu0 0.0
        %2382 = vmatpush1.xpose.msra.mxu0 0.0
        %2383 = vmatprep.subr.mxu0 0.0
        %2384 = vmatpush1.xpose.msra.mxu0 0.0
        %2385 = vmatprep.subr.mxu0 0.0
        %2386 = vmatpush1.xpose.msra.mxu0 0.0
        %2387 = vmatprep.subr.mxu0 0.0
        %2388 = vmatpush1.xpose.msra.mxu0 0.0
        %2389 = vmatprep.subr.mxu0 0.0
        %2390 = vmatpush1.xpose.msra.mxu0 0.0
        %2391 = vmatprep.subr.mxu0 0.0
        %2392 = vmatpush1.xpose.msra.mxu0 0.0
        %2393 = vmatprep.subr.mxu0 0.0
        %2394 = vmatpush1.xpose.msra.mxu0 0.0
        %2395 = vmatprep.subr.mxu0 0.0
        %2396 = vmatpush1.xpose.msra.mxu0 0.0
        %2397 = vmatprep.subr.mxu0 0.0
        %2398 = vmatpush1.xpose.msra.mxu0 0.0
        %2399 = vmatprep.subr.mxu0 0.0
        %2400 = vmatpush1.xpose.msra.mxu0 0.0
        %2401 = vmatprep.subr.mxu0 0.0
        %2402 = vmatpush1.xpose.msra.mxu0 0.0
        %2403 = vmatprep.subr.mxu0 0.0
        %2404 = vmatpush1.xpose.msra.mxu0 0.0
        %2405 = vmatprep.subr.mxu0 0.0
        %2406 = vmatpush1.xpose.msra.mxu0 0.0
        %2407 = vmatprep.subr.mxu0 0.0
        %2408 = vmatpush1.xpose.msra.mxu0 0.0
        %2409 = vmatprep.subr.mxu0 0.0
        %2410 = vmatpush1.xpose.msra.mxu0 0.0
        %2411 = vmatprep.subr.mxu0 0.0
        %2412 = vmatpush1.xpose.msra.mxu0 0.0
        %2413 = vmatprep.subr.mxu0 0.0
        %2414 = vmatpush1.xpose.msra.mxu0 0.0
        %2415 = vmatprep.subr.mxu0 0.0
        %2416 = vmatpush1.xpose.msra.mxu0 0.0
        %2417 = vmatprep.subr.mxu0 0.0
        %2418 = vmatpush1.xpose.msra.mxu0 0.0
        %2419 = vmatprep.subr.mxu0 0.0
        %2420 = vmatpush1.xpose.msra.mxu0 0.0
        %2421 = vmatprep.subr.mxu0 0.0
        %2422 = vmatpush1.xpose.msra.mxu0 0.0
        %2423 = vmatprep.subr.mxu0 0.0
        %2424 = vmatpush1.xpose.msra.mxu0 0.0
        %2425 = vmatprep.subr.mxu0 0.0
        %2426 = vmatpush1.xpose.msra.mxu0 0.0
        %2427 = vmatprep.subr.mxu0 0.0
        %2428 = vmatpush1.xpose.msra.mxu0 0.0
        %2429 = vmatprep.subr.mxu0 0.0
        %2430 = vmatpush1.xpose.msra.mxu0 0.0
        %2431 = vmatprep.subr.mxu0 0.0
        %2432 = vmatpush1.xpose.msra.mxu0 0.0
        %2433 = vmatprep.subr.mxu0 0.0
        %2434 = vmatpush1.xpose.msra.mxu0 0.0
        %2435 = vmatprep.subr.mxu0 0.0
        %2436 = vmatpush1.xpose.msra.mxu0 0.0
        %2437 = vmatprep.mubr.f32.mxu0 0.0
        %2438 = vmatmul.mubr.f32.gmra.mrb[0].mxu0 %v2369
        %v2439 = vpop.f32.mrb[0].mxu0
        %v2440 = vadd.f32 %v852, %v2439
        %v2441 = vpop.f32.mrb[0].mxu0
        %2442 = vdwg.mxu0
        %2443 = vrot.lane.b32.xlu0 %v733, 64
        %v2444 = vpop.permute.xlu0 %2443
        %2445 = vrot.lane.b32.xlu0 %v735, 64
        %v2446 = vpop.permute.xlu0 %2445
        %v2447 = vsel %vm856, %v2444, 0
        %v2449 = vsel %vm856, %v2446, 0
        %2451 = vmatprep.subr.mxu0 0.0
        %2452 = vmatpush1.xpose.msra.mxu0 %v2449
        %2453 = vmatprep.subr.mxu0 0.0
        %2454 = vmatpush1.xpose.msra.mxu0 0.0
        %2455 = vmatprep.subr.mxu0 0.0
        %2456 = vmatpush1.xpose.msra.mxu0 0.0
        %2457 = vmatprep.subr.mxu0 0.0
        %2458 = vmatpush1.xpose.msra.mxu0 0.0
        %2459 = vmatprep.subr.mxu0 0.0
        %2460 = vmatpush1.xpose.msra.mxu0 0.0
        %2461 = vmatprep.subr.mxu0 0.0
        %2462 = vmatpush1.xpose.msra.mxu0 0.0
        %2463 = vmatprep.subr.mxu0 0.0
        %2464 = vmatpush1.xpose.msra.mxu0 0.0
        %2465 = vmatprep.subr.mxu0 0.0
        %2466 = vmatpush1.xpose.msra.mxu0 0.0
        %2467 = vmatprep.subr.mxu0 0.0
        %2468 = vmatpush1.xpose.msra.mxu0 0.0
        %2469 = vmatprep.subr.mxu0 0.0
        %2470 = vmatpush1.xpose.msra.mxu0 0.0
        %2471 = vmatprep.subr.mxu0 0.0
        %2472 = vmatpush1.xpose.msra.mxu0 0.0
        %2473 = vmatprep.subr.mxu0 0.0
        %2474 = vmatpush1.xpose.msra.mxu0 0.0
        %2475 = vmatprep.subr.mxu0 0.0
        %2476 = vmatpush1.xpose.msra.mxu0 0.0
        %2477 = vmatprep.subr.mxu0 0.0
        %2478 = vmatpush1.xpose.msra.mxu0 0.0
        %2479 = vmatprep.subr.mxu0 0.0
        %2480 = vmatpush1.xpose.msra.mxu0 0.0
        %2481 = vmatprep.subr.mxu0 0.0
        %2482 = vmatpush1.xpose.msra.mxu0 0.0
        %2483 = vmatprep.subr.mxu0 0.0
        %2484 = vmatpush1.xpose.msra.mxu0 0.0
        %2485 = vmatprep.subr.mxu0 0.0
        %2486 = vmatpush1.xpose.msra.mxu0 0.0
        %2487 = vmatprep.subr.mxu0 0.0
        %2488 = vmatpush1.xpose.msra.mxu0 0.0
        %2489 = vmatprep.subr.mxu0 0.0
        %2490 = vmatpush1.xpose.msra.mxu0 0.0
        %2491 = vmatprep.subr.mxu0 0.0
        %2492 = vmatpush1.xpose.msra.mxu0 0.0
        %2493 = vmatprep.subr.mxu0 0.0
        %2494 = vmatpush1.xpose.msra.mxu0 0.0
        %2495 = vmatprep.subr.mxu0 0.0
        %2496 = vmatpush1.xpose.msra.mxu0 0.0
        %2497 = vmatprep.subr.mxu0 0.0
        %2498 = vmatpush1.xpose.msra.mxu0 0.0
        %2499 = vmatprep.subr.mxu0 0.0
        %2500 = vmatpush1.xpose.msra.mxu0 0.0
        %2501 = vmatprep.subr.mxu0 0.0
        %2502 = vmatpush1.xpose.msra.mxu0 0.0
        %2503 = vmatprep.subr.mxu0 0.0
        %2504 = vmatpush1.xpose.msra.mxu0 0.0
        %2505 = vmatprep.subr.mxu0 0.0
        %2506 = vmatpush1.xpose.msra.mxu0 0.0
        %2507 = vmatprep.subr.mxu0 0.0
        %2508 = vmatpush1.xpose.msra.mxu0 0.0
        %2509 = vmatprep.subr.mxu0 0.0
        %2510 = vmatpush1.xpose.msra.mxu0 0.0
        %2511 = vmatprep.subr.mxu0 0.0
        %2512 = vmatpush1.xpose.msra.mxu0 0.0
        %2513 = vmatprep.subr.mxu0 0.0
        %2514 = vmatpush1.xpose.msra.mxu0 0.0
        %2515 = vmatprep.mubr.f32.mxu0 0.0
        %2516 = vmatmul.mubr.f32.gmra.mrb[0].mxu0 %v2447
        %v2517 = vpop.f32.mrb[0].mxu0
        %v2518 = vadd.f32 %v853, %v2517
        %v2519 = vpop.f32.mrb[0].mxu0
        %2520 = vdwg.mxu0
        %2521 = vrot.lane.b32.xlu0 %v739, 64
        %v2522 = vpop.permute.xlu0 %2521
        %2523 = vrot.lane.b32.xlu0 %v741, 64
        %v2524 = vpop.permute.xlu0 %2523
        %v2525 = vsel %vm856, %v2522, 0
        %v2527 = vsel %vm856, %v2524, 0
        %2529 = vmatprep.subr.mxu0 0.0
        %2530 = vmatpush1.xpose.msra.mxu0 %v2527
        %2531 = vmatprep.subr.mxu0 0.0
        %2532 = vmatpush1.xpose.msra.mxu0 0.0
        %2533 = vmatprep.subr.mxu0 0.0
        %2534 = vmatpush1.xpose.msra.mxu0 0.0
        %2535 = vmatprep.subr.mxu0 0.0
        %2536 = vmatpush1.xpose.msra.mxu0 0.0
        %2537 = vmatprep.subr.mxu0 0.0
        %2538 = vmatpush1.xpose.msra.mxu0 0.0
        %2539 = vmatprep.subr.mxu0 0.0
        %2540 = vmatpush1.xpose.msra.mxu0 0.0
        %2541 = vmatprep.subr.mxu0 0.0
        %2542 = vmatpush1.xpose.msra.mxu0 0.0
        %2543 = vmatprep.subr.mxu0 0.0
        %2544 = vmatpush1.xpose.msra.mxu0 0.0
        %2545 = vmatprep.subr.mxu0 0.0
        %2546 = vmatpush1.xpose.msra.mxu0 0.0
        %2547 = vmatprep.subr.mxu0 0.0
        %2548 = vmatpush1.xpose.msra.mxu0 0.0
        %2549 = vmatprep.subr.mxu0 0.0
        %2550 = vmatpush1.xpose.msra.mxu0 0.0
        %2551 = vmatprep.subr.mxu0 0.0
        %2552 = vmatpush1.xpose.msra.mxu0 0.0
        %2553 = vmatprep.subr.mxu0 0.0
        %2554 = vmatpush1.xpose.msra.mxu0 0.0
        %2555 = vmatprep.subr.mxu0 0.0
        %2556 = vmatpush1.xpose.msra.mxu0 0.0
        %2557 = vmatprep.subr.mxu0 0.0
        %2558 = vmatpush1.xpose.msra.mxu0 0.0
        %2559 = vmatprep.subr.mxu0 0.0
        %2560 = vmatpush1.xpose.msra.mxu0 0.0
        %2561 = vmatprep.subr.mxu0 0.0
        %2562 = vmatpush1.xpose.msra.mxu0 0.0
        %2563 = vmatprep.subr.mxu0 0.0
        %2564 = vmatpush1.xpose.msra.mxu0 0.0
        %2565 = vmatprep.subr.mxu0 0.0
        %2566 = vmatpush1.xpose.msra.mxu0 0.0
        %2567 = vmatprep.subr.mxu0 0.0
        %2568 = vmatpush1.xpose.msra.mxu0 0.0
        %2569 = vmatprep.subr.mxu0 0.0
        %2570 = vmatpush1.xpose.msra.mxu0 0.0
        %2571 = vmatprep.subr.mxu0 0.0
        %2572 = vmatpush1.xpose.msra.mxu0 0.0
        %2573 = vmatprep.subr.mxu0 0.0
        %2574 = vmatpush1.xpose.msra.mxu0 0.0
        %2575 = vmatprep.subr.mxu0 0.0
        %2576 = vmatpush1.xpose.msra.mxu0 0.0
        %2577 = vmatprep.subr.mxu0 0.0
        %2578 = vmatpush1.xpose.msra.mxu0 0.0
        %2579 = vmatprep.subr.mxu0 0.0
        %2580 = vmatpush1.xpose.msra.mxu0 0.0
        %2581 = vmatprep.subr.mxu0 0.0
        %2582 = vmatpush1.xpose.msra.mxu0 0.0
        %2583 = vmatprep.subr.mxu0 0.0
        %2584 = vmatpush1.xpose.msra.mxu0 0.0
        %2585 = vmatprep.subr.mxu0 0.0
        %2586 = vmatpush1.xpose.msra.mxu0 0.0
        %2587 = vmatprep.subr.mxu0 0.0
        %2588 = vmatpush1.xpose.msra.mxu0 0.0
        %2589 = vmatprep.subr.mxu0 0.0
        %2590 = vmatpush1.xpose.msra.mxu0 0.0
        %2591 = vmatprep.subr.mxu0 0.0
        %2592 = vmatpush1.xpose.msra.mxu0 0.0
        %2593 = vmatprep.mubr.f32.mxu0 0.0
        %2594 = vmatmul.mubr.f32.gmra.mrb[0].mxu0 %v2525
        %v2595 = vpop.f32.mrb[0].mxu0
        %v2596 = vadd.f32 %v854, %v2595
        %v2597 = vpop.f32.mrb[0].mxu0
        %2598 = vdwg.mxu0
        %2599 = vrot.lane.b32.xlu0 %v745, 64
        %v2600 = vpop.permute.xlu0 %2599
        %2601 = vrot.lane.b32.xlu0 %v747, 64
        %v2602 = vpop.permute.xlu0 %2601
        %v2603 = vsel %vm856, %v2600, 0
        %v2605 = vsel %vm856, %v2602, 0
        %2607 = vmatprep.subr.mxu0 0.0
        %2608 = vmatpush1.xpose.msra.mxu0 %v2605
        %2609 = vmatprep.subr.mxu0 0.0
        %2610 = vmatpush1.xpose.msra.mxu0 0.0
        %2611 = vmatprep.subr.mxu0 0.0
        %2612 = vmatpush1.xpose.msra.mxu0 0.0
        %2613 = vmatprep.subr.mxu0 0.0
        %2614 = vmatpush1.xpose.msra.mxu0 0.0
        %2615 = vmatprep.subr.mxu0 0.0
        %2616 = vmatpush1.xpose.msra.mxu0 0.0
        %2617 = vmatprep.subr.mxu0 0.0
        %2618 = vmatpush1.xpose.msra.mxu0 0.0
        %2619 = vmatprep.subr.mxu0 0.0
        %2620 = vmatpush1.xpose.msra.mxu0 0.0
        %2621 = vmatprep.subr.mxu0 0.0
        %2622 = vmatpush1.xpose.msra.mxu0 0.0
        %2623 = vmatprep.subr.mxu0 0.0
        %2624 = vmatpush1.xpose.msra.mxu0 0.0
        %2625 = vmatprep.subr.mxu0 0.0
        %2626 = vmatpush1.xpose.msra.mxu0 0.0
        %2627 = vmatprep.subr.mxu0 0.0
        %2628 = vmatpush1.xpose.msra.mxu0 0.0
        %2629 = vmatprep.subr.mxu0 0.0
        %2630 = vmatpush1.xpose.msra.mxu0 0.0
        %2631 = vmatprep.subr.mxu0 0.0
        %2632 = vmatpush1.xpose.msra.mxu0 0.0
        %2633 = vmatprep.subr.mxu0 0.0
        %2634 = vmatpush1.xpose.msra.mxu0 0.0
        %2635 = vmatprep.subr.mxu0 0.0
        %2636 = vmatpush1.xpose.msra.mxu0 0.0
        %2637 = vmatprep.subr.mxu0 0.0
        %2638 = vmatpush1.xpose.msra.mxu0 0.0
        %2639 = vmatprep.subr.mxu0 0.0
        %2640 = vmatpush1.xpose.msra.mxu0 0.0
        %2641 = vmatprep.subr.mxu0 0.0
        %2642 = vmatpush1.xpose.msra.mxu0 0.0
        %2643 = vmatprep.subr.mxu0 0.0
        %2644 = vmatpush1.xpose.msra.mxu0 0.0
        %2645 = vmatprep.subr.mxu0 0.0
        %2646 = vmatpush1.xpose.msra.mxu0 0.0
        %2647 = vmatprep.subr.mxu0 0.0
        %2648 = vmatpush1.xpose.msra.mxu0 0.0
        %2649 = vmatprep.subr.mxu0 0.0
        %2650 = vmatpush1.xpose.msra.mxu0 0.0
        %2651 = vmatprep.subr.mxu0 0.0
        %2652 = vmatpush1.xpose.msra.mxu0 0.0
        %2653 = vmatprep.subr.mxu0 0.0
        %2654 = vmatpush1.xpose.msra.mxu0 0.0
        %2655 = vmatprep.subr.mxu0 0.0
        %2656 = vmatpush1.xpose.msra.mxu0 0.0
        %2657 = vmatprep.subr.mxu0 0.0
        %2658 = vmatpush1.xpose.msra.mxu0 0.0
        %2659 = vmatprep.subr.mxu0 0.0
        %2660 = vmatpush1.xpose.msra.mxu0 0.0
        %2661 = vmatprep.subr.mxu0 0.0
        %2662 = vmatpush1.xpose.msra.mxu0 0.0
        %2663 = vmatprep.subr.mxu0 0.0
        %2664 = vmatpush1.xpose.msra.mxu0 0.0
        %2665 = vmatprep.subr.mxu0 0.0
        %2666 = vmatpush1.xpose.msra.mxu0 0.0
        %2667 = vmatprep.subr.mxu0 0.0
        %2668 = vmatpush1.xpose.msra.mxu0 0.0
        %2669 = vmatprep.subr.mxu0 0.0
        %2670 = vmatpush1.xpose.msra.mxu0 0.0
        %2671 = vmatprep.mubr.f32.mxu0 0.0
        %2672 = vmatmul.mubr.f32.gmra.mrb[0].mxu0 %v2603
        %v2673 = vpop.f32.mrb[0].mxu0
        %v2674 = vadd.f32 %v855, %v2673
        %v2675 = vpop.f32.mrb[0].mxu0
        %2676 = vdwg.mxu0
        %v2677 = vsel %vm1161, %v2440, -inf
        %2678 = vmax.xlane.f32.xlu0 %v2677
        %v2679 = vpop.xlane.xlu0 %2678
        %v2680 = vsel %vm1161, %v2518, -inf
        %2681 = vmax.xlane.f32.xlu0 %v2680
        %v2682 = vpop.xlane.xlu0 %2681
        %v2683 = vsel %vm1161, %v2596, -inf
        %2684 = vmax.xlane.f32.xlu0 %v2683
        %v2685 = vpop.xlane.xlu0 %2684
        %v2686 = vsel %vm1161, %v2674, -inf
        %2687 = vmax.xlane.f32.xlu0 %v2686
        %v2688 = vpop.xlane.xlu0 %2687
        %v2689 = vsub.f32 %v2440, %v2679
        %v2690 = vsub.f32 %v2518, %v2682
        %v2691 = vsub.f32 %v2596, %v2685
        %v2692 = vsub.f32 %v2674, %v2688
        %v2693 = vmul.f32 %v2689, 1.442695
        %v2694 = vpow.pop %v2693
        %v2695 = vmul.f32 %v2690, 1.442695
        %v2696 = vpow.pop %v2695
        %v2697 = vmul.f32 %v2691, 1.442695
        %v2698 = vpow.pop %v2697
        %v2699 = vmul.f32 %v2692, 1.442695
        %v2700 = vpow.pop %v2699
        %v2701 = vsel %vm1161, %v2694, 0.0
        %2702 = vadd.xlane.f32.xlu0 %v2701
        %v2703 = vpop.xlane.xlu0 %2702
        %v2704 = vsel %vm1161, %v2696, 0.0
        %2705 = vadd.xlane.f32.xlu0 %v2704
        %v2706 = vpop.xlane.xlu0 %2705
        %v2707 = vsel %vm1161, %v2698, 0.0
        %2708 = vadd.xlane.f32.xlu0 %v2707
        %v2709 = vpop.xlane.xlu0 %2708
        %v2710 = vsel %vm1161, %v2700, 0.0
        %2711 = vadd.xlane.f32.xlu0 %v2710
        %v2712 = vpop.xlane.xlu0 %2711
        %v2713 = vrcp.pop %v2703
        %v2714 = vrcp.pop %v2706
        %v2715 = vrcp.pop %v2709
        %v2716 = vrcp.pop %v2712
        %v2717 = vmul.f32 %v2694, %v2713
        %v2718 = vmul.f32 %v2696, %v2714
        %v2719 = vmul.f32 %v2698, %v2715
        %v2720 = vmul.f32 %v2700, %v2716
        %2721 = vrot.lane.b32.xlu0 %v816, 64
        %v2722 = vpop.permute.xlu0 %2721
        %v2725 = vsel %vm1161, %v2717, 0
        %2727 = vmatprep.subr.mxu0 0.0
        %2728 = vmatpush1.msra.mxu0 %v2722
        %2729 = vmatprep.subr.mxu0 0.0
        %2730 = vmatpush1.msra.mxu0 0.0
        %2731 = vmatprep.subr.mxu0 0.0
        %2732 = vmatpush1.msra.mxu0 0.0
        %2733 = vmatprep.subr.mxu0 0.0
        %2734 = vmatpush1.msra.mxu0 0.0
        %2735 = vmatprep.subr.mxu0 0.0
        %2736 = vmatpush1.msra.mxu0 0.0
        %2737 = vmatprep.subr.mxu0 0.0
        %2738 = vmatpush1.msra.mxu0 0.0
        %2739 = vmatprep.subr.mxu0 0.0
        %2740 = vmatpush1.msra.mxu0 0.0
        %2741 = vmatprep.subr.mxu0 0.0
        %2742 = vmatpush1.msra.mxu0 0.0
        %2743 = vmatprep.subr.mxu0 0.0
        %2744 = vmatpush1.msra.mxu0 0.0
        %2745 = vmatprep.subr.mxu0 0.0
        %2746 = vmatpush1.msra.mxu0 0.0
        %2747 = vmatprep.subr.mxu0 0.0
        %2748 = vmatpush1.msra.mxu0 0.0
        %2749 = vmatprep.subr.mxu0 0.0
        %2750 = vmatpush1.msra.mxu0 0.0
        %2751 = vmatprep.subr.mxu0 0.0
        %2752 = vmatpush1.msra.mxu0 0.0
        %2753 = vmatprep.subr.mxu0 0.0
        %2754 = vmatpush1.msra.mxu0 0.0
        %2755 = vmatprep.subr.mxu0 0.0
        %2756 = vmatpush1.msra.mxu0 0.0
        %2757 = vmatprep.subr.mxu0 0.0
        %2758 = vmatpush1.msra.mxu0 0.0
        %2759 = vmatprep.subr.mxu0 0.0
        %2760 = vmatpush1.msra.mxu0 0.0
        %2761 = vmatprep.subr.mxu0 0.0
        %2762 = vmatpush1.msra.mxu0 0.0
        %2763 = vmatprep.subr.mxu0 0.0
        %2764 = vmatpush1.msra.mxu0 0.0
        %2765 = vmatprep.subr.mxu0 0.0
        %2766 = vmatpush1.msra.mxu0 0.0
        %2767 = vmatprep.subr.mxu0 0.0
        %2768 = vmatpush1.msra.mxu0 0.0
        %2769 = vmatprep.subr.mxu0 0.0
        %2770 = vmatpush1.msra.mxu0 0.0
        %2771 = vmatprep.subr.mxu0 0.0
        %2772 = vmatpush1.msra.mxu0 0.0
        %2773 = vmatprep.subr.mxu0 0.0
        %2774 = vmatpush1.msra.mxu0 0.0
        %2775 = vmatprep.subr.mxu0 0.0
        %2776 = vmatpush1.msra.mxu0 0.0
        %2777 = vmatprep.subr.mxu0 0.0
        %2778 = vmatpush1.msra.mxu0 0.0
        %2779 = vmatprep.subr.mxu0 0.0
        %2780 = vmatpush1.msra.mxu0 0.0
        %2781 = vmatprep.subr.mxu0 0.0
        %2782 = vmatpush1.msra.mxu0 0.0
        %2783 = vmatprep.subr.mxu0 0.0
        %2784 = vmatpush1.msra.mxu0 0.0
        %2785 = vmatprep.subr.mxu0 0.0
        %2786 = vmatpush1.msra.mxu0 0.0
        %2787 = vmatprep.subr.mxu0 0.0
        %2788 = vmatpush1.msra.mxu0 0.0
        %2789 = vmatprep.subr.mxu0 0.0
        %2790 = vmatpush1.msra.mxu0 0.0
        %2791 = vmatprep.mubr.f32.mxu0 0.0
        %2792 = vmatmul.mubr.f32.gmra.mrb[0].mxu0 %v2725
        %v2793 = vpop.f32.mrb[0].mxu0
        %v2794 = vadd.f32 0.0, %v2793
        %v2795 = vpop.f32.mrb[0].mxu0
        %2796 = vdwg.mxu0
        %2797 = vrot.lane.b32.xlu0 %v821, 64
        %v2798 = vpop.permute.xlu0 %2797
        %v2801 = vsel %vm1161, %v2718, 0
        %2803 = vmatprep.subr.mxu0 0.0
        %2804 = vmatpush1.msra.mxu0 %v2798
        %2805 = vmatprep.subr.mxu0 0.0
        %2806 = vmatpush1.msra.mxu0 0.0
        %2807 = vmatprep.subr.mxu0 0.0
        %2808 = vmatpush1.msra.mxu0 0.0
        %2809 = vmatprep.subr.mxu0 0.0
        %2810 = vmatpush1.msra.mxu0 0.0
        %2811 = vmatprep.subr.mxu0 0.0
        %2812 = vmatpush1.msra.mxu0 0.0
        %2813 = vmatprep.subr.mxu0 0.0
        %2814 = vmatpush1.msra.mxu0 0.0
        %2815 = vmatprep.subr.mxu0 0.0
        %2816 = vmatpush1.msra.mxu0 0.0
        %2817 = vmatprep.subr.mxu0 0.0
        %2818 = vmatpush1.msra.mxu0 0.0
        %2819 = vmatprep.subr.mxu0 0.0
        %2820 = vmatpush1.msra.mxu0 0.0
        %2821 = vmatprep.subr.mxu0 0.0
        %2822 = vmatpush1.msra.mxu0 0.0
        %2823 = vmatprep.subr.mxu0 0.0
        %2824 = vmatpush1.msra.mxu0 0.0
        %2825 = vmatprep.subr.mxu0 0.0
        %2826 = vmatpush1.msra.mxu0 0.0
        %2827 = vmatprep.subr.mxu0 0.0
        %2828 = vmatpush1.msra.mxu0 0.0
        %2829 = vmatprep.subr.mxu0 0.0
        %2830 = vmatpush1.msra.mxu0 0.0
        %2831 = vmatprep.subr.mxu0 0.0
        %2832 = vmatpush1.msra.mxu0 0.0
        %2833 = vmatprep.subr.mxu0 0.0
        %2834 = vmatpush1.msra.mxu0 0.0
        %2835 = vmatprep.subr.mxu0 0.0
        %2836 = vmatpush1.msra.mxu0 0.0
        %2837 = vmatprep.subr.mxu0 0.0
        %2838 = vmatpush1.msra.mxu0 0.0
        %2839 = vmatprep.subr.mxu0 0.0
        %2840 = vmatpush1.msra.mxu0 0.0
        %2841 = vmatprep.subr.mxu0 0.0
        %2842 = vmatpush1.msra.mxu0 0.0
        %2843 = vmatprep.subr.mxu0 0.0
        %2844 = vmatpush1.msra.mxu0 0.0
        %2845 = vmatprep.subr.mxu0 0.0
        %2846 = vmatpush1.msra.mxu0 0.0
        %2847 = vmatprep.subr.mxu0 0.0
        %2848 = vmatpush1.msra.mxu0 0.0
        %2849 = vmatprep.subr.mxu0 0.0
        %2850 = vmatpush1.msra.mxu0 0.0
        %2851 = vmatprep.subr.mxu0 0.0
        %2852 = vmatpush1.msra.mxu0 0.0
        %2853 = vmatprep.subr.mxu0 0.0
        %2854 = vmatpush1.msra.mxu0 0.0
        %2855 = vmatprep.subr.mxu0 0.0
        %2856 = vmatpush1.msra.mxu0 0.0
        %2857 = vmatprep.subr.mxu0 0.0
        %2858 = vmatpush1.msra.mxu0 0.0
        %2859 = vmatprep.subr.mxu0 0.0
        %2860 = vmatpush1.msra.mxu0 0.0
        %2861 = vmatprep.subr.mxu0 0.0
        %2862 = vmatpush1.msra.mxu0 0.0
        %2863 = vmatprep.subr.mxu0 0.0
        %2864 = vmatpush1.msra.mxu0 0.0
        %2865 = vmatprep.subr.mxu0 0.0
        %2866 = vmatpush1.msra.mxu0 0.0
        %2867 = vmatprep.mubr.f32.mxu0 0.0
        %2868 = vmatmul.mubr.f32.gmra.mrb[0].mxu0 %v2801
        %v2869 = vpop.f32.mrb[0].mxu0
        %v2870 = vadd.f32 0.0, %v2869
        %v2871 = vpop.f32.mrb[0].mxu0
        %2872 = vdwg.mxu0
        %2873 = vrot.lane.b32.xlu0 %v826, 64
        %v2874 = vpop.permute.xlu0 %2873
        %v2877 = vsel %vm1161, %v2719, 0
        %2879 = vmatprep.subr.mxu0 0.0
        %2880 = vmatpush1.msra.mxu0 %v2874
        %2881 = vmatprep.subr.mxu0 0.0
        %2882 = vmatpush1.msra.mxu0 0.0
        %2883 = vmatprep.subr.mxu0 0.0
        %2884 = vmatpush1.msra.mxu0 0.0
        %2885 = vmatprep.subr.mxu0 0.0
        %2886 = vmatpush1.msra.mxu0 0.0
        %2887 = vmatprep.subr.mxu0 0.0
        %2888 = vmatpush1.msra.mxu0 0.0
        %2889 = vmatprep.subr.mxu0 0.0
        %2890 = vmatpush1.msra.mxu0 0.0
        %2891 = vmatprep.subr.mxu0 0.0
        %2892 = vmatpush1.msra.mxu0 0.0
        %2893 = vmatprep.subr.mxu0 0.0
        %2894 = vmatpush1.msra.mxu0 0.0
        %2895 = vmatprep.subr.mxu0 0.0
        %2896 = vmatpush1.msra.mxu0 0.0
        %2897 = vmatprep.subr.mxu0 0.0
        %2898 = vmatpush1.msra.mxu0 0.0
        %2899 = vmatprep.subr.mxu0 0.0
        %2900 = vmatpush1.msra.mxu0 0.0
        %2901 = vmatprep.subr.mxu0 0.0
        %2902 = vmatpush1.msra.mxu0 0.0
        %2903 = vmatprep.subr.mxu0 0.0
        %2904 = vmatpush1.msra.mxu0 0.0
        %2905 = vmatprep.subr.mxu0 0.0
        %2906 = vmatpush1.msra.mxu0 0.0
        %2907 = vmatprep.subr.mxu0 0.0
        %2908 = vmatpush1.msra.mxu0 0.0
        %2909 = vmatprep.subr.mxu0 0.0
        %2910 = vmatpush1.msra.mxu0 0.0
        %2911 = vmatprep.subr.mxu0 0.0
        %2912 = vmatpush1.msra.mxu0 0.0
        %2913 = vmatprep.subr.mxu0 0.0
        %2914 = vmatpush1.msra.mxu0 0.0
        %2915 = vmatprep.subr.mxu0 0.0
        %2916 = vmatpush1.msra.mxu0 0.0
        %2917 = vmatprep.subr.mxu0 0.0
        %2918 = vmatpush1.msra.mxu0 0.0
        %2919 = vmatprep.subr.mxu0 0.0
        %2920 = vmatpush1.msra.mxu0 0.0
        %2921 = vmatprep.subr.mxu0 0.0
        %2922 = vmatpush1.msra.mxu0 0.0
        %2923 = vmatprep.subr.mxu0 0.0
        %2924 = vmatpush1.msra.mxu0 0.0
        %2925 = vmatprep.subr.mxu0 0.0
        %2926 = vmatpush1.msra.mxu0 0.0
        %2927 = vmatprep.subr.mxu0 0.0
        %2928 = vmatpush1.msra.mxu0 0.0
        %2929 = vmatprep.subr.mxu0 0.0
        %2930 = vmatpush1.msra.mxu0 0.0
        %2931 = vmatprep.subr.mxu0 0.0
        %2932 = vmatpush1.msra.mxu0 0.0
        %2933 = vmatprep.subr.mxu0 0.0
        %2934 = vmatpush1.msra.mxu0 0.0
        %2935 = vmatprep.subr.mxu0 0.0
        %2936 = vmatpush1.msra.mxu0 0.0
        %2937 = vmatprep.subr.mxu0 0.0
        %2938 = vmatpush1.msra.mxu0 0.0
        %2939 = vmatprep.subr.mxu0 0.0
        %2940 = vmatpush1.msra.mxu0 0.0
        %2941 = vmatprep.subr.mxu0 0.0
        %2942 = vmatpush1.msra.mxu0 0.0
        %2943 = vmatprep.mubr.f32.mxu0 0.0
        %2944 = vmatmul.mubr.f32.gmra.mrb[0].mxu0 %v2877
        %v2945 = vpop.f32.mrb[0].mxu0
        %v2946 = vadd.f32 0.0, %v2945
        %v2947 = vpop.f32.mrb[0].mxu0
        %2948 = vdwg.mxu0
        %2949 = vrot.lane.b32.xlu0 %v831, 64
        %v2950 = vpop.permute.xlu0 %2949
        %v2953 = vsel %vm1161, %v2720, 0
        %2955 = vmatprep.subr.mxu0 0.0
        %2956 = vmatpush1.msra.mxu0 %v2950
        %2957 = vmatprep.subr.mxu0 0.0
        %2958 = vmatpush1.msra.mxu0 0.0
        %2959 = vmatprep.subr.mxu0 0.0
        %2960 = vmatpush1.msra.mxu0 0.0
        %2961 = vmatprep.subr.mxu0 0.0
        %2962 = vmatpush1.msra.mxu0 0.0
        %2963 = vmatprep.subr.mxu0 0.0
        %2964 = vmatpush1.msra.mxu0 0.0
        %2965 = vmatprep.subr.mxu0 0.0
        %2966 = vmatpush1.msra.mxu0 0.0
        %2967 = vmatprep.subr.mxu0 0.0
        %2968 = vmatpush1.msra.mxu0 0.0
        %2969 = vmatprep.subr.mxu0 0.0
        %2970 = vmatpush1.msra.mxu0 0.0
        %2971 = vmatprep.subr.mxu0 0.0
        %2972 = vmatpush1.msra.mxu0 0.0
        %2973 = vmatprep.subr.mxu0 0.0
        %2974 = vmatpush1.msra.mxu0 0.0
        %2975 = vmatprep.subr.mxu0 0.0
        %2976 = vmatpush1.msra.mxu0 0.0
        %2977 = vmatprep.subr.mxu0 0.0
        %2978 = vmatpush1.msra.mxu0 0.0
        %2979 = vmatprep.subr.mxu0 0.0
        %2980 = vmatpush1.msra.mxu0 0.0
        %2981 = vmatprep.subr.mxu0 0.0
        %2982 = vmatpush1.msra.mxu0 0.0
        %2983 = vmatprep.subr.mxu0 0.0
        %2984 = vmatpush1.msra.mxu0 0.0
        %2985 = vmatprep.subr.mxu0 0.0
        %2986 = vmatpush1.msra.mxu0 0.0
        %2987 = vmatprep.subr.mxu0 0.0
        %2988 = vmatpush1.msra.mxu0 0.0
        %2989 = vmatprep.subr.mxu0 0.0
        %2990 = vmatpush1.msra.mxu0 0.0
        %2991 = vmatprep.subr.mxu0 0.0
        %2992 = vmatpush1.msra.mxu0 0.0
        %2993 = vmatprep.subr.mxu0 0.0
        %2994 = vmatpush1.msra.mxu0 0.0
        %2995 = vmatprep.subr.mxu0 0.0
        %2996 = vmatpush1.msra.mxu0 0.0
        %2997 = vmatprep.subr.mxu0 0.0
        %2998 = vmatpush1.msra.mxu0 0.0
        %2999 = vmatprep.subr.mxu0 0.0
        %3000 = vmatpush1.msra.mxu0 0.0
        %3001 = vmatprep.subr.mxu0 0.0
        %3002 = vmatpush1.msra.mxu0 0.0
        %3003 = vmatprep.subr.mxu0 0.0
        %3004 = vmatpush1.msra.mxu0 0.0
        %3005 = vmatprep.subr.mxu0 0.0
        %3006 = vmatpush1.msra.mxu0 0.0
        %3007 = vmatprep.subr.mxu0 0.0
        %3008 = vmatpush1.msra.mxu0 0.0
        %3009 = vmatprep.subr.mxu0 0.0
        %3010 = vmatpush1.msra.mxu0 0.0
        %3011 = vmatprep.subr.mxu0 0.0
        %3012 = vmatpush1.msra.mxu0 0.0
        %3013 = vmatprep.subr.mxu0 0.0
        %3014 = vmatpush1.msra.mxu0 0.0
        %3015 = vmatprep.subr.mxu0 0.0
        %3016 = vmatpush1.msra.mxu0 0.0
        %3017 = vmatprep.subr.mxu0 0.0
        %3018 = vmatpush1.msra.mxu0 0.0
        %3019 = vmatprep.mubr.f32.mxu0 0.0
        %3020 = vmatmul.mubr.f32.gmra.mrb[0].mxu0 %v2953
        %v3021 = vpop.f32.mrb[0].mxu0
        %v3022 = vadd.f32 0.0, %v3021
        %v3023 = vpop.f32.mrb[0].mxu0
        %3024 = vdwg.mxu0
        %s3025 = scalar_lea.vmem [#allocation9], 64
        %v3026 = vld [vmem:[%s3025] sm:$0xff]
        %v3027 = vld [vmem:[%s3025 + $0x8] sm:$0xff]
        %v3028 = vld [vmem:[%s3025 + $0x10] sm:$0xff]
        %v3029 = vld [vmem:[%s3025 + $0x18] sm:$0xff]
        %v3031 = vsel %vm856, %v2794, 0
        %v3034 = vsel %vm856, %v2870, 0
        %v3037 = vsel %vm856, %v2946, 0
        %v3040 = vsel %vm856, %v3022, 0
        %3042 = vmatprep.subr.mxu0 0.0
        %3043 = vmatpush1.msra.mxu0 %v3026
        %3044 = vmatprep.subr.mxu0 0.0
        %3045 = vmatpush1.msra.mxu0 %v3027
        %3046 = vmatprep.subr.mxu0 0.0
        %3047 = vmatpush1.msra.mxu0 %v3028
        %3048 = vmatprep.subr.mxu0 0.0
        %3049 = vmatpush1.msra.mxu0 %v3029
        %3050 = vmatprep.subr.mxu0 0.0
        %3051 = vmatpush1.msra.mxu0 0.0
        %3052 = vmatprep.subr.mxu0 0.0
        %3053 = vmatpush1.msra.mxu0 0.0
        %3054 = vmatprep.subr.mxu0 0.0
        %3055 = vmatpush1.msra.mxu0 0.0
        %3056 = vmatprep.subr.mxu0 0.0
        %3057 = vmatpush1.msra.mxu0 0.0
        %3058 = vmatprep.subr.mxu0 0.0
        %3059 = vmatpush1.msra.mxu0 0.0
        %3060 = vmatprep.subr.mxu0 0.0
        %3061 = vmatpush1.msra.mxu0 0.0
        %3062 = vmatprep.subr.mxu0 0.0
        %3063 = vmatpush1.msra.mxu0 0.0
        %3064 = vmatprep.subr.mxu0 0.0
        %3065 = vmatpush1.msra.mxu0 0.0
        %3066 = vmatprep.subr.mxu0 0.0
        %3067 = vmatpush1.msra.mxu0 0.0
        %3068 = vmatprep.subr.mxu0 0.0
        %3069 = vmatpush1.msra.mxu0 0.0
        %3070 = vmatprep.subr.mxu0 0.0
        %3071 = vmatpush1.msra.mxu0 0.0
        %3072 = vmatprep.subr.mxu0 0.0
        %3073 = vmatpush1.msra.mxu0 0.0
        %3074 = vmatprep.subr.mxu0 0.0
        %3075 = vmatpush1.msra.mxu0 0.0
        %3076 = vmatprep.subr.mxu0 0.0
        %3077 = vmatpush1.msra.mxu0 0.0
        %3078 = vmatprep.subr.mxu0 0.0
        %3079 = vmatpush1.msra.mxu0 0.0
        %3080 = vmatprep.subr.mxu0 0.0
        %3081 = vmatpush1.msra.mxu0 0.0
        %3082 = vmatprep.subr.mxu0 0.0
        %3083 = vmatpush1.msra.mxu0 0.0
        %3084 = vmatprep.subr.mxu0 0.0
        %3085 = vmatpush1.msra.mxu0 0.0
        %3086 = vmatprep.subr.mxu0 0.0
        %3087 = vmatpush1.msra.mxu0 0.0
        %3088 = vmatprep.subr.mxu0 0.0
        %3089 = vmatpush1.msra.mxu0 0.0
        %3090 = vmatprep.subr.mxu0 0.0
        %3091 = vmatpush1.msra.mxu0 0.0
        %3092 = vmatprep.subr.mxu0 0.0
        %3093 = vmatpush1.msra.mxu0 0.0
        %3094 = vmatprep.subr.mxu0 0.0
        %3095 = vmatpush1.msra.mxu0 0.0
        %3096 = vmatprep.subr.mxu0 0.0
        %3097 = vmatpush1.msra.mxu0 0.0
        %3098 = vmatprep.subr.mxu0 0.0
        %3099 = vmatpush1.msra.mxu0 0.0
        %3100 = vmatprep.subr.mxu0 0.0
        %3101 = vmatpush1.msra.mxu0 0.0
        %3102 = vmatprep.subr.mxu0 0.0
        %3103 = vmatpush1.msra.mxu0 0.0
        %3104 = vmatprep.subr.mxu0 0.0
        %3105 = vmatpush1.msra.mxu0 0.0
        %3106 = vmatprep.mubr.f32.mxu0 0.0
        %3107 = vmatmul.mubr.f32.gmra.mrb[0].mxu0 %v3031
        %v3108 = vpop.f32.mrb[0].mxu0
        %v3109 = vadd.f32 0.0, %v3108
        %v3110 = vpop.f32.mrb[0].mxu0
        %3111 = vmatprep.mubr.f32.mxu0 0.0
        %3112 = vmatmul.mubr.f32.gmra.mrb[0].mxu0 %v3034
        %v3113 = vpop.f32.mrb[0].mxu0
        %v3114 = vadd.f32 0.0, %v3113
        %v3115 = vpop.f32.mrb[0].mxu0
        %3116 = vmatprep.mubr.f32.mxu0 0.0
        %3117 = vmatmul.mubr.f32.gmra.mrb[0].mxu0 %v3037
        %v3118 = vpop.f32.mrb[0].mxu0
        %v3119 = vadd.f32 0.0, %v3118
        %v3120 = vpop.f32.mrb[0].mxu0
        %3121 = vmatprep.mubr.f32.mxu0 0.0
        %3122 = vmatmul.mubr.f32.gmra.mrb[0].mxu0 %v3040
        %v3123 = vpop.f32.mrb[0].mxu0
        %v3124 = vadd.f32 0.0, %v3123
        %v3125 = vpop.f32.mrb[0].mxu0
        %3126 = vdwg.mxu0
        %v3127 = vadd.f32 %v2347, %v3109
        %v3128 = vadd.f32 %v2352, %v3114
        %v3129 = vadd.f32 %v2357, %v3119
        %v3130 = vadd.f32 %v2362, %v3124
        %3131 = vrot.lane.b32.xlu0 %v727, 32
        %v3132 = vpop.permute.xlu0 %3131
        %3133 = vrot.lane.b32.xlu0 %v729, 32
        %v3134 = vpop.permute.xlu0 %3133
        %v3135 = vsel %vm856, %v3132, 0
        %v3137 = vsel %vm856, %v3134, 0
        %3139 = vmatprep.subr.mxu0 0.0
        %3140 = vmatpush1.xpose.msra.mxu0 %v3137
        %3141 = vmatprep.subr.mxu0 0.0
        %3142 = vmatpush1.xpose.msra.mxu0 0.0
        %3143 = vmatprep.subr.mxu0 0.0
        %3144 = vmatpush1.xpose.msra.mxu0 0.0
        %3145 = vmatprep.subr.mxu0 0.0
        %3146 = vmatpush1.xpose.msra.mxu0 0.0
        %3147 = vmatprep.subr.mxu0 0.0
        %3148 = vmatpush1.xpose.msra.mxu0 0.0
        %3149 = vmatprep.subr.mxu0 0.0
        %3150 = vmatpush1.xpose.msra.mxu0 0.0
        %3151 = vmatprep.subr.mxu0 0.0
        %3152 = vmatpush1.xpose.msra.mxu0 0.0
        %3153 = vmatprep.subr.mxu0 0.0
        %3154 = vmatpush1.xpose.msra.mxu0 0.0
        %3155 = vmatprep.subr.mxu0 0.0
        %3156 = vmatpush1.xpose.msra.mxu0 0.0
        %3157 = vmatprep.subr.mxu0 0.0
        %3158 = vmatpush1.xpose.msra.mxu0 0.0
        %3159 = vmatprep.subr.mxu0 0.0
        %3160 = vmatpush1.xpose.msra.mxu0 0.0
        %3161 = vmatprep.subr.mxu0 0.0
        %3162 = vmatpush1.xpose.msra.mxu0 0.0
        %3163 = vmatprep.subr.mxu0 0.0
        %3164 = vmatpush1.xpose.msra.mxu0 0.0
        %3165 = vmatprep.subr.mxu0 0.0
        %3166 = vmatpush1.xpose.msra.mxu0 0.0
        %3167 = vmatprep.subr.mxu0 0.0
        %3168 = vmatpush1.xpose.msra.mxu0 0.0
        %3169 = vmatprep.subr.mxu0 0.0
        %3170 = vmatpush1.xpose.msra.mxu0 0.0
        %3171 = vmatprep.subr.mxu0 0.0
        %3172 = vmatpush1.xpose.msra.mxu0 0.0
        %3173 = vmatprep.subr.mxu0 0.0
        %3174 = vmatpush1.xpose.msra.mxu0 0.0
        %3175 = vmatprep.subr.mxu0 0.0
        %3176 = vmatpush1.xpose.msra.mxu0 0.0
        %3177 = vmatprep.subr.mxu0 0.0
        %3178 = vmatpush1.xpose.msra.mxu0 0.0
        %3179 = vmatprep.subr.mxu0 0.0
        %3180 = vmatpush1.xpose.msra.mxu0 0.0
        %3181 = vmatprep.subr.mxu0 0.0
        %3182 = vmatpush1.xpose.msra.mxu0 0.0
        %3183 = vmatprep.subr.mxu0 0.0
        %3184 = vmatpush1.xpose.msra.mxu0 0.0
        %3185 = vmatprep.subr.mxu0 0.0
        %3186 = vmatpush1.xpose.msra.mxu0 0.0
        %3187 = vmatprep.subr.mxu0 0.0
        %3188 = vmatpush1.xpose.msra.mxu0 0.0
        %3189 = vmatprep.subr.mxu0 0.0
        %3190 = vmatpush1.xpose.msra.mxu0 0.0
        %3191 = vmatprep.subr.mxu0 0.0
        %3192 = vmatpush1.xpose.msra.mxu0 0.0
        %3193 = vmatprep.subr.mxu0 0.0
        %3194 = vmatpush1.xpose.msra.mxu0 0.0
        %3195 = vmatprep.subr.mxu0 0.0
        %3196 = vmatpush1.xpose.msra.mxu0 0.0
        %3197 = vmatprep.subr.mxu0 0.0
        %3198 = vmatpush1.xpose.msra.mxu0 0.0
        %3199 = vmatprep.subr.mxu0 0.0
        %3200 = vmatpush1.xpose.msra.mxu0 0.0
        %3201 = vmatprep.subr.mxu0 0.0
        %3202 = vmatpush1.xpose.msra.mxu0 0.0
        %3203 = vmatprep.mubr.f32.mxu0 0.0
        %3204 = vmatmul.mubr.f32.gmra.mrb[0].mxu0 %v3135
        %v3205 = vpop.f32.mrb[0].mxu0
        %v3206 = vadd.f32 %v852, %v3205
        %v3207 = vpop.f32.mrb[0].mxu0
        %3208 = vdwg.mxu0
        %3209 = vrot.lane.b32.xlu0 %v733, 32
        %v3210 = vpop.permute.xlu0 %3209
        %3211 = vrot.lane.b32.xlu0 %v735, 32
        %v3212 = vpop.permute.xlu0 %3211
        %v3213 = vsel %vm856, %v3210, 0
        %v3215 = vsel %vm856, %v3212, 0
        %3217 = vmatprep.subr.mxu0 0.0
        %3218 = vmatpush1.xpose.msra.mxu0 %v3215
        %3219 = vmatprep.subr.mxu0 0.0
        %3220 = vmatpush1.xpose.msra.mxu0 0.0
        %3221 = vmatprep.subr.mxu0 0.0
        %3222 = vmatpush1.xpose.msra.mxu0 0.0
        %3223 = vmatprep.subr.mxu0 0.0
        %3224 = vmatpush1.xpose.msra.mxu0 0.0
        %3225 = vmatprep.subr.mxu0 0.0
        %3226 = vmatpush1.xpose.msra.mxu0 0.0
        %3227 = vmatprep.subr.mxu0 0.0
        %3228 = vmatpush1.xpose.msra.mxu0 0.0
        %3229 = vmatprep.subr.mxu0 0.0
        %3230 = vmatpush1.xpose.msra.mxu0 0.0
        %3231 = vmatprep.subr.mxu0 0.0
        %3232 = vmatpush1.xpose.msra.mxu0 0.0
        %3233 = vmatprep.subr.mxu0 0.0
        %3234 = vmatpush1.xpose.msra.mxu0 0.0
        %3235 = vmatprep.subr.mxu0 0.0
        %3236 = vmatpush1.xpose.msra.mxu0 0.0
        %3237 = vmatprep.subr.mxu0 0.0
        %3238 = vmatpush1.xpose.msra.mxu0 0.0
        %3239 = vmatprep.subr.mxu0 0.0
        %3240 = vmatpush1.xpose.msra.mxu0 0.0
        %3241 = vmatprep.subr.mxu0 0.0
        %3242 = vmatpush1.xpose.msra.mxu0 0.0
        %3243 = vmatprep.subr.mxu0 0.0
        %3244 = vmatpush1.xpose.msra.mxu0 0.0
        %3245 = vmatprep.subr.mxu0 0.0
        %3246 = vmatpush1.xpose.msra.mxu0 0.0
        %3247 = vmatprep.subr.mxu0 0.0
        %3248 = vmatpush1.xpose.msra.mxu0 0.0
        %3249 = vmatprep.subr.mxu0 0.0
        %3250 = vmatpush1.xpose.msra.mxu0 0.0
        %3251 = vmatprep.subr.mxu0 0.0
        %3252 = vmatpush1.xpose.msra.mxu0 0.0
        %3253 = vmatprep.subr.mxu0 0.0
        %3254 = vmatpush1.xpose.msra.mxu0 0.0
        %3255 = vmatprep.subr.mxu0 0.0
        %3256 = vmatpush1.xpose.msra.mxu0 0.0
        %3257 = vmatprep.subr.mxu0 0.0
        %3258 = vmatpush1.xpose.msra.mxu0 0.0
        %3259 = vmatprep.subr.mxu0 0.0
        %3260 = vmatpush1.xpose.msra.mxu0 0.0
        %3261 = vmatprep.subr.mxu0 0.0
        %3262 = vmatpush1.xpose.msra.mxu0 0.0
        %3263 = vmatprep.subr.mxu0 0.0
        %3264 = vmatpush1.xpose.msra.mxu0 0.0
        %3265 = vmatprep.subr.mxu0 0.0
        %3266 = vmatpush1.xpose.msra.mxu0 0.0
        %3267 = vmatprep.subr.mxu0 0.0
        %3268 = vmatpush1.xpose.msra.mxu0 0.0
        %3269 = vmatprep.subr.mxu0 0.0
        %3270 = vmatpush1.xpose.msra.mxu0 0.0
        %3271 = vmatprep.subr.mxu0 0.0
        %3272 = vmatpush1.xpose.msra.mxu0 0.0
        %3273 = vmatprep.subr.mxu0 0.0
        %3274 = vmatpush1.xpose.msra.mxu0 0.0
        %3275 = vmatprep.subr.mxu0 0.0
        %3276 = vmatpush1.xpose.msra.mxu0 0.0
        %3277 = vmatprep.subr.mxu0 0.0
        %3278 = vmatpush1.xpose.msra.mxu0 0.0
        %3279 = vmatprep.subr.mxu0 0.0
        %3280 = vmatpush1.xpose.msra.mxu0 0.0
        %3281 = vmatprep.mubr.f32.mxu0 0.0
        %3282 = vmatmul.mubr.f32.gmra.mrb[0].mxu0 %v3213
        %v3283 = vpop.f32.mrb[0].mxu0
        %v3284 = vadd.f32 %v853, %v3283
        %v3285 = vpop.f32.mrb[0].mxu0
        %3286 = vdwg.mxu0
        %3287 = vrot.lane.b32.xlu0 %v739, 32
        %v3288 = vpop.permute.xlu0 %3287
        %3289 = vrot.lane.b32.xlu0 %v741, 32
        %v3290 = vpop.permute.xlu0 %3289
        %v3291 = vsel %vm856, %v3288, 0
        %v3293 = vsel %vm856, %v3290, 0
        %3295 = vmatprep.subr.mxu0 0.0
        %3296 = vmatpush1.xpose.msra.mxu0 %v3293
        %3297 = vmatprep.subr.mxu0 0.0
        %3298 = vmatpush1.xpose.msra.mxu0 0.0
        %3299 = vmatprep.subr.mxu0 0.0
        %3300 = vmatpush1.xpose.msra.mxu0 0.0
        %3301 = vmatprep.subr.mxu0 0.0
        %3302 = vmatpush1.xpose.msra.mxu0 0.0
        %3303 = vmatprep.subr.mxu0 0.0
        %3304 = vmatpush1.xpose.msra.mxu0 0.0
        %3305 = vmatprep.subr.mxu0 0.0
        %3306 = vmatpush1.xpose.msra.mxu0 0.0
        %3307 = vmatprep.subr.mxu0 0.0
        %3308 = vmatpush1.xpose.msra.mxu0 0.0
        %3309 = vmatprep.subr.mxu0 0.0
        %3310 = vmatpush1.xpose.msra.mxu0 0.0
        %3311 = vmatprep.subr.mxu0 0.0
        %3312 = vmatpush1.xpose.msra.mxu0 0.0
        %3313 = vmatprep.subr.mxu0 0.0
        %3314 = vmatpush1.xpose.msra.mxu0 0.0
        %3315 = vmatprep.subr.mxu0 0.0
        %3316 = vmatpush1.xpose.msra.mxu0 0.0
        %3317 = vmatprep.subr.mxu0 0.0
        %3318 = vmatpush1.xpose.msra.mxu0 0.0
        %3319 = vmatprep.subr.mxu0 0.0
        %3320 = vmatpush1.xpose.msra.mxu0 0.0
        %3321 = vmatprep.subr.mxu0 0.0
        %3322 = vmatpush1.xpose.msra.mxu0 0.0
        %3323 = vmatprep.subr.mxu0 0.0
        %3324 = vmatpush1.xpose.msra.mxu0 0.0
        %3325 = vmatprep.subr.mxu0 0.0
        %3326 = vmatpush1.xpose.msra.mxu0 0.0
        %3327 = vmatprep.subr.mxu0 0.0
        %3328 = vmatpush1.xpose.msra.mxu0 0.0
        %3329 = vmatprep.subr.mxu0 0.0
        %3330 = vmatpush1.xpose.msra.mxu0 0.0
        %3331 = vmatprep.subr.mxu0 0.0
        %3332 = vmatpush1.xpose.msra.mxu0 0.0
        %3333 = vmatprep.subr.mxu0 0.0
        %3334 = vmatpush1.xpose.msra.mxu0 0.0
        %3335 = vmatprep.subr.mxu0 0.0
        %3336 = vmatpush1.xpose.msra.mxu0 0.0
        %3337 = vmatprep.subr.mxu0 0.0
        %3338 = vmatpush1.xpose.msra.mxu0 0.0
        %3339 = vmatprep.subr.mxu0 0.0
        %3340 = vmatpush1.xpose.msra.mxu0 0.0
        %3341 = vmatprep.subr.mxu0 0.0
        %3342 = vmatpush1.xpose.msra.mxu0 0.0
        %3343 = vmatprep.subr.mxu0 0.0
        %3344 = vmatpush1.xpose.msra.mxu0 0.0
        %3345 = vmatprep.subr.mxu0 0.0
        %3346 = vmatpush1.xpose.msra.mxu0 0.0
        %3347 = vmatprep.subr.mxu0 0.0
        %3348 = vmatpush1.xpose.msra.mxu0 0.0
        %3349 = vmatprep.subr.mxu0 0.0
        %3350 = vmatpush1.xpose.msra.mxu0 0.0
        %3351 = vmatprep.subr.mxu0 0.0
        %3352 = vmatpush1.xpose.msra.mxu0 0.0
        %3353 = vmatprep.subr.mxu0 0.0
        %3354 = vmatpush1.xpose.msra.mxu0 0.0
        %3355 = vmatprep.subr.mxu0 0.0
        %3356 = vmatpush1.xpose.msra.mxu0 0.0
        %3357 = vmatprep.subr.mxu0 0.0
        %3358 = vmatpush1.xpose.msra.mxu0 0.0
        %3359 = vmatprep.mubr.f32.mxu0 0.0
        %3360 = vmatmul.mubr.f32.gmra.mrb[0].mxu0 %v3291
        %v3361 = vpop.f32.mrb[0].mxu0
        %v3362 = vadd.f32 %v854, %v3361
        %v3363 = vpop.f32.mrb[0].mxu0
        %3364 = vdwg.mxu0
        %3365 = vrot.lane.b32.xlu0 %v745, 32
        %v3366 = vpop.permute.xlu0 %3365
        %3367 = vrot.lane.b32.xlu0 %v747, 32
        %v3368 = vpop.permute.xlu0 %3367
        %v3369 = vsel %vm856, %v3366, 0
        %v3371 = vsel %vm856, %v3368, 0
        %3373 = vmatprep.subr.mxu0 0.0
        %3374 = vmatpush1.xpose.msra.mxu0 %v3371
        %3375 = vmatprep.subr.mxu0 0.0
        %3376 = vmatpush1.xpose.msra.mxu0 0.0
        %3377 = vmatprep.subr.mxu0 0.0
        %3378 = vmatpush1.xpose.msra.mxu0 0.0
        %3379 = vmatprep.subr.mxu0 0.0
        %3380 = vmatpush1.xpose.msra.mxu0 0.0
        %3381 = vmatprep.subr.mxu0 0.0
        %3382 = vmatpush1.xpose.msra.mxu0 0.0
        %3383 = vmatprep.subr.mxu0 0.0
        %3384 = vmatpush1.xpose.msra.mxu0 0.0
        %3385 = vmatprep.subr.mxu0 0.0
        %3386 = vmatpush1.xpose.msra.mxu0 0.0
        %3387 = vmatprep.subr.mxu0 0.0
        %3388 = vmatpush1.xpose.msra.mxu0 0.0
        %3389 = vmatprep.subr.mxu0 0.0
        %3390 = vmatpush1.xpose.msra.mxu0 0.0
        %3391 = vmatprep.subr.mxu0 0.0
        %3392 = vmatpush1.xpose.msra.mxu0 0.0
        %3393 = vmatprep.subr.mxu0 0.0
        %3394 = vmatpush1.xpose.msra.mxu0 0.0
        %3395 = vmatprep.subr.mxu0 0.0
        %3396 = vmatpush1.xpose.msra.mxu0 0.0
        %3397 = vmatprep.subr.mxu0 0.0
        %3398 = vmatpush1.xpose.msra.mxu0 0.0
        %3399 = vmatprep.subr.mxu0 0.0
        %3400 = vmatpush1.xpose.msra.mxu0 0.0
        %3401 = vmatprep.subr.mxu0 0.0
        %3402 = vmatpush1.xpose.msra.mxu0 0.0
        %3403 = vmatprep.subr.mxu0 0.0
        %3404 = vmatpush1.xpose.msra.mxu0 0.0
        %3405 = vmatprep.subr.mxu0 0.0
        %3406 = vmatpush1.xpose.msra.mxu0 0.0
        %3407 = vmatprep.subr.mxu0 0.0
        %3408 = vmatpush1.xpose.msra.mxu0 0.0
        %3409 = vmatprep.subr.mxu0 0.0
        %3410 = vmatpush1.xpose.msra.mxu0 0.0
        %3411 = vmatprep.subr.mxu0 0.0
        %3412 = vmatpush1.xpose.msra.mxu0 0.0
        %3413 = vmatprep.subr.mxu0 0.0
        %3414 = vmatpush1.xpose.msra.mxu0 0.0
        %3415 = vmatprep.subr.mxu0 0.0
        %3416 = vmatpush1.xpose.msra.mxu0 0.0
        %3417 = vmatprep.subr.mxu0 0.0
        %3418 = vmatpush1.xpose.msra.mxu0 0.0
        %3419 = vmatprep.subr.mxu0 0.0
        %3420 = vmatpush1.xpose.msra.mxu0 0.0
        %3421 = vmatprep.subr.mxu0 0.0
        %3422 = vmatpush1.xpose.msra.mxu0 0.0
        %3423 = vmatprep.subr.mxu0 0.0
        %3424 = vmatpush1.xpose.msra.mxu0 0.0
        %3425 = vmatprep.subr.mxu0 0.0
        %3426 = vmatpush1.xpose.msra.mxu0 0.0
        %3427 = vmatprep.subr.mxu0 0.0
        %3428 = vmatpush1.xpose.msra.mxu0 0.0
        %3429 = vmatprep.subr.mxu0 0.0
        %3430 = vmatpush1.xpose.msra.mxu0 0.0
        %3431 = vmatprep.subr.mxu0 0.0
        %3432 = vmatpush1.xpose.msra.mxu0 0.0
        %3433 = vmatprep.subr.mxu0 0.0
        %3434 = vmatpush1.xpose.msra.mxu0 0.0
        %3435 = vmatprep.subr.mxu0 0.0
        %3436 = vmatpush1.xpose.msra.mxu0 0.0
        %3437 = vmatprep.mubr.f32.mxu0 0.0
        %3438 = vmatmul.mubr.f32.gmra.mrb[0].mxu0 %v3369
        %v3439 = vpop.f32.mrb[0].mxu0
        %v3440 = vadd.f32 %v855, %v3439
        %v3441 = vpop.f32.mrb[0].mxu0
        %3442 = vdwg.mxu0
        %v3443 = vsel %vm1161, %v3206, -inf
        %3444 = vmax.xlane.f32.xlu0 %v3443
        %v3445 = vpop.xlane.xlu0 %3444
        %v3446 = vsel %vm1161, %v3284, -inf
        %3447 = vmax.xlane.f32.xlu0 %v3446
        %v3448 = vpop.xlane.xlu0 %3447
        %v3449 = vsel %vm1161, %v3362, -inf
        %3450 = vmax.xlane.f32.xlu0 %v3449
        %v3451 = vpop.xlane.xlu0 %3450
        %v3452 = vsel %vm1161, %v3440, -inf
        %3453 = vmax.xlane.f32.xlu0 %v3452
        %v3454 = vpop.xlane.xlu0 %3453
        %v3455 = vsub.f32 %v3206, %v3445
        %v3456 = vsub.f32 %v3284, %v3448
        %v3457 = vsub.f32 %v3362, %v3451
        %v3458 = vsub.f32 %v3440, %v3454
        %v3459 = vmul.f32 %v3455, 1.442695
        %v3460 = vpow.pop %v3459
        %v3461 = vmul.f32 %v3456, 1.442695
        %v3462 = vpow.pop %v3461
        %v3463 = vmul.f32 %v3457, 1.442695
        %v3464 = vpow.pop %v3463
        %v3465 = vmul.f32 %v3458, 1.442695
        %v3466 = vpow.pop %v3465
        %v3467 = vsel %vm1161, %v3460, 0.0
        %3468 = vadd.xlane.f32.xlu0 %v3467
        %v3469 = vpop.xlane.xlu0 %3468
        %v3470 = vsel %vm1161, %v3462, 0.0
        %3471 = vadd.xlane.f32.xlu0 %v3470
        %v3472 = vpop.xlane.xlu0 %3471
        %v3473 = vsel %vm1161, %v3464, 0.0
        %3474 = vadd.xlane.f32.xlu0 %v3473
        %v3475 = vpop.xlane.xlu0 %3474
        %v3476 = vsel %vm1161, %v3466, 0.0
        %3477 = vadd.xlane.f32.xlu0 %v3476
        %v3478 = vpop.xlane.xlu0 %3477
        %v3479 = vrcp.pop %v3469
        %v3480 = vrcp.pop %v3472
        %v3481 = vrcp.pop %v3475
        %v3482 = vrcp.pop %v3478
        %v3483 = vmul.f32 %v3460, %v3479
        %v3484 = vmul.f32 %v3462, %v3480
        %v3485 = vmul.f32 %v3464, %v3481
        %v3486 = vmul.f32 %v3466, %v3482
        %3487 = vrot.lane.b32.xlu0 %v816, 32
        %v3488 = vpop.permute.xlu0 %3487
        %v3491 = vsel %vm1161, %v3483, 0
        %3493 = vmatprep.subr.mxu0 0.0
        %3494 = vmatpush1.msra.mxu0 %v3488
        %3495 = vmatprep.subr.mxu0 0.0
        %3496 = vmatpush1.msra.mxu0 0.0
        %3497 = vmatprep.subr.mxu0 0.0
        %3498 = vmatpush1.msra.mxu0 0.0
        %3499 = vmatprep.subr.mxu0 0.0
        %3500 = vmatpush1.msra.mxu0 0.0
        %3501 = vmatprep.subr.mxu0 0.0
        %3502 = vmatpush1.msra.mxu0 0.0
        %3503 = vmatprep.subr.mxu0 0.0
        %3504 = vmatpush1.msra.mxu0 0.0
        %3505 = vmatprep.subr.mxu0 0.0
        %3506 = vmatpush1.msra.mxu0 0.0
        %3507 = vmatprep.subr.mxu0 0.0
        %3508 = vmatpush1.msra.mxu0 0.0
        %3509 = vmatprep.subr.mxu0 0.0
        %3510 = vmatpush1.msra.mxu0 0.0
        %3511 = vmatprep.subr.mxu0 0.0
        %3512 = vmatpush1.msra.mxu0 0.0
        %3513 = vmatprep.subr.mxu0 0.0
        %3514 = vmatpush1.msra.mxu0 0.0
        %3515 = vmatprep.subr.mxu0 0.0
        %3516 = vmatpush1.msra.mxu0 0.0
        %3517 = vmatprep.subr.mxu0 0.0
        %3518 = vmatpush1.msra.mxu0 0.0
        %3519 = vmatprep.subr.mxu0 0.0
        %3520 = vmatpush1.msra.mxu0 0.0
        %3521 = vmatprep.subr.mxu0 0.0
        %3522 = vmatpush1.msra.mxu0 0.0
        %3523 = vmatprep.subr.mxu0 0.0
        %3524 = vmatpush1.msra.mxu0 0.0
        %3525 = vmatprep.subr.mxu0 0.0
        %3526 = vmatpush1.msra.mxu0 0.0
        %3527 = vmatprep.subr.mxu0 0.0
        %3528 = vmatpush1.msra.mxu0 0.0
        %3529 = vmatprep.subr.mxu0 0.0
        %3530 = vmatpush1.msra.mxu0 0.0
        %3531 = vmatprep.subr.mxu0 0.0
        %3532 = vmatpush1.msra.mxu0 0.0
        %3533 = vmatprep.subr.mxu0 0.0
        %3534 = vmatpush1.msra.mxu0 0.0
        %3535 = vmatprep.subr.mxu0 0.0
        %3536 = vmatpush1.msra.mxu0 0.0
        %3537 = vmatprep.subr.mxu0 0.0
        %3538 = vmatpush1.msra.mxu0 0.0
        %3539 = vmatprep.subr.mxu0 0.0
        %3540 = vmatpush1.msra.mxu0 0.0
        %3541 = vmatprep.subr.mxu0 0.0
        %3542 = vmatpush1.msra.mxu0 0.0
        %3543 = vmatprep.subr.mxu0 0.0
        %3544 = vmatpush1.msra.mxu0 0.0
        %3545 = vmatprep.subr.mxu0 0.0
        %3546 = vmatpush1.msra.mxu0 0.0
        %3547 = vmatprep.subr.mxu0 0.0
        %3548 = vmatpush1.msra.mxu0 0.0
        %3549 = vmatprep.subr.mxu0 0.0
        %3550 = vmatpush1.msra.mxu0 0.0
        %3551 = vmatprep.subr.mxu0 0.0
        %3552 = vmatpush1.msra.mxu0 0.0
        %3553 = vmatprep.subr.mxu0 0.0
        %3554 = vmatpush1.msra.mxu0 0.0
        %3555 = vmatprep.subr.mxu0 0.0
        %3556 = vmatpush1.msra.mxu0 0.0
        %3557 = vmatprep.mubr.f32.mxu0 0.0
        %3558 = vmatmul.mubr.f32.gmra.mrb[0].mxu0 %v3491
        %v3559 = vpop.f32.mrb[0].mxu0
        %v3560 = vadd.f32 0.0, %v3559
        %v3561 = vpop.f32.mrb[0].mxu0
        %3562 = vdwg.mxu0
        %3563 = vrot.lane.b32.xlu0 %v821, 32
        %v3564 = vpop.permute.xlu0 %3563
        %v3567 = vsel %vm1161, %v3484, 0
        %3569 = vmatprep.subr.mxu0 0.0
        %3570 = vmatpush1.msra.mxu0 %v3564
        %3571 = vmatprep.subr.mxu0 0.0
        %3572 = vmatpush1.msra.mxu0 0.0
        %3573 = vmatprep.subr.mxu0 0.0
        %3574 = vmatpush1.msra.mxu0 0.0
        %3575 = vmatprep.subr.mxu0 0.0
        %3576 = vmatpush1.msra.mxu0 0.0
        %3577 = vmatprep.subr.mxu0 0.0
        %3578 = vmatpush1.msra.mxu0 0.0
        %3579 = vmatprep.subr.mxu0 0.0
        %3580 = vmatpush1.msra.mxu0 0.0
        %3581 = vmatprep.subr.mxu0 0.0
        %3582 = vmatpush1.msra.mxu0 0.0
        %3583 = vmatprep.subr.mxu0 0.0
        %3584 = vmatpush1.msra.mxu0 0.0
        %3585 = vmatprep.subr.mxu0 0.0
        %3586 = vmatpush1.msra.mxu0 0.0
        %3587 = vmatprep.subr.mxu0 0.0
        %3588 = vmatpush1.msra.mxu0 0.0
        %3589 = vmatprep.subr.mxu0 0.0
        %3590 = vmatpush1.msra.mxu0 0.0
        %3591 = vmatprep.subr.mxu0 0.0
        %3592 = vmatpush1.msra.mxu0 0.0
        %3593 = vmatprep.subr.mxu0 0.0
        %3594 = vmatpush1.msra.mxu0 0.0
        %3595 = vmatprep.subr.mxu0 0.0
        %3596 = vmatpush1.msra.mxu0 0.0
        %3597 = vmatprep.subr.mxu0 0.0
        %3598 = vmatpush1.msra.mxu0 0.0
        %3599 = vmatprep.subr.mxu0 0.0
        %3600 = vmatpush1.msra.mxu0 0.0
        %3601 = vmatprep.subr.mxu0 0.0
        %3602 = vmatpush1.msra.mxu0 0.0
        %3603 = vmatprep.subr.mxu0 0.0
        %3604 = vmatpush1.msra.mxu0 0.0
        %3605 = vmatprep.subr.mxu0 0.0
        %3606 = vmatpush1.msra.mxu0 0.0
        %3607 = vmatprep.subr.mxu0 0.0
        %3608 = vmatpush1.msra.mxu0 0.0
        %3609 = vmatprep.subr.mxu0 0.0
        %3610 = vmatpush1.msra.mxu0 0.0
        %3611 = vmatprep.subr.mxu0 0.0
        %3612 = vmatpush1.msra.mxu0 0.0
        %3613 = vmatprep.subr.mxu0 0.0
        %3614 = vmatpush1.msra.mxu0 0.0
        %3615 = vmatprep.subr.mxu0 0.0
        %3616 = vmatpush1.msra.mxu0 0.0
        %3617 = vmatprep.subr.mxu0 0.0
        %3618 = vmatpush1.msra.mxu0 0.0
        %3619 = vmatprep.subr.mxu0 0.0
        %3620 = vmatpush1.msra.mxu0 0.0
        %3621 = vmatprep.subr.mxu0 0.0
        %3622 = vmatpush1.msra.mxu0 0.0
        %3623 = vmatprep.subr.mxu0 0.0
        %3624 = vmatpush1.msra.mxu0 0.0
        %3625 = vmatprep.subr.mxu0 0.0
        %3626 = vmatpush1.msra.mxu0 0.0
        %3627 = vmatprep.subr.mxu0 0.0
        %3628 = vmatpush1.msra.mxu0 0.0
        %3629 = vmatprep.subr.mxu0 0.0
        %3630 = vmatpush1.msra.mxu0 0.0
        %3631 = vmatprep.subr.mxu0 0.0
        %3632 = vmatpush1.msra.mxu0 0.0
        %3633 = vmatprep.mubr.f32.mxu0 0.0
        %3634 = vmatmul.mubr.f32.gmra.mrb[0].mxu0 %v3567
        %v3635 = vpop.f32.mrb[0].mxu0
        %v3636 = vadd.f32 0.0, %v3635
        %v3637 = vpop.f32.mrb[0].mxu0
        %3638 = vdwg.mxu0
        %3639 = vrot.lane.b32.xlu0 %v826, 32
        %v3640 = vpop.permute.xlu0 %3639
        %v3643 = vsel %vm1161, %v3485, 0
        %3645 = vmatprep.subr.mxu0 0.0
        %3646 = vmatpush1.msra.mxu0 %v3640
        %3647 = vmatprep.subr.mxu0 0.0
        %3648 = vmatpush1.msra.mxu0 0.0
        %3649 = vmatprep.subr.mxu0 0.0
        %3650 = vmatpush1.msra.mxu0 0.0
        %3651 = vmatprep.subr.mxu0 0.0
        %3652 = vmatpush1.msra.mxu0 0.0
        %3653 = vmatprep.subr.mxu0 0.0
        %3654 = vmatpush1.msra.mxu0 0.0
        %3655 = vmatprep.subr.mxu0 0.0
        %3656 = vmatpush1.msra.mxu0 0.0
        %3657 = vmatprep.subr.mxu0 0.0
        %3658 = vmatpush1.msra.mxu0 0.0
        %3659 = vmatprep.subr.mxu0 0.0
        %3660 = vmatpush1.msra.mxu0 0.0
        %3661 = vmatprep.subr.mxu0 0.0
        %3662 = vmatpush1.msra.mxu0 0.0
        %3663 = vmatprep.subr.mxu0 0.0
        %3664 = vmatpush1.msra.mxu0 0.0
        %3665 = vmatprep.subr.mxu0 0.0
        %3666 = vmatpush1.msra.mxu0 0.0
        %3667 = vmatprep.subr.mxu0 0.0
        %3668 = vmatpush1.msra.mxu0 0.0
        %3669 = vmatprep.subr.mxu0 0.0
        %3670 = vmatpush1.msra.mxu0 0.0
        %3671 = vmatprep.subr.mxu0 0.0
        %3672 = vmatpush1.msra.mxu0 0.0
        %3673 = vmatprep.subr.mxu0 0.0
        %3674 = vmatpush1.msra.mxu0 0.0
        %3675 = vmatprep.subr.mxu0 0.0
        %3676 = vmatpush1.msra.mxu0 0.0
        %3677 = vmatprep.subr.mxu0 0.0
        %3678 = vmatpush1.msra.mxu0 0.0
        %3679 = vmatprep.subr.mxu0 0.0
        %3680 = vmatpush1.msra.mxu0 0.0
        %3681 = vmatprep.subr.mxu0 0.0
        %3682 = vmatpush1.msra.mxu0 0.0
        %3683 = vmatprep.subr.mxu0 0.0
        %3684 = vmatpush1.msra.mxu0 0.0
        %3685 = vmatprep.subr.mxu0 0.0
        %3686 = vmatpush1.msra.mxu0 0.0
        %3687 = vmatprep.subr.mxu0 0.0
        %3688 = vmatpush1.msra.mxu0 0.0
        %3689 = vmatprep.subr.mxu0 0.0
        %3690 = vmatpush1.msra.mxu0 0.0
        %3691 = vmatprep.subr.mxu0 0.0
        %3692 = vmatpush1.msra.mxu0 0.0
        %3693 = vmatprep.subr.mxu0 0.0
        %3694 = vmatpush1.msra.mxu0 0.0
        %3695 = vmatprep.subr.mxu0 0.0
        %3696 = vmatpush1.msra.mxu0 0.0
        %3697 = vmatprep.subr.mxu0 0.0
        %3698 = vmatpush1.msra.mxu0 0.0
        %3699 = vmatprep.subr.mxu0 0.0
        %3700 = vmatpush1.msra.mxu0 0.0
        %3701 = vmatprep.subr.mxu0 0.0
        %3702 = vmatpush1.msra.mxu0 0.0
        %3703 = vmatprep.subr.mxu0 0.0
        %3704 = vmatpush1.msra.mxu0 0.0
        %3705 = vmatprep.subr.mxu0 0.0
        %3706 = vmatpush1.msra.mxu0 0.0
        %3707 = vmatprep.subr.mxu0 0.0
        %3708 = vmatpush1.msra.mxu0 0.0
        %3709 = vmatprep.mubr.f32.mxu0 0.0
        %3710 = vmatmul.mubr.f32.gmra.mrb[0].mxu0 %v3643
        %v3711 = vpop.f32.mrb[0].mxu0
        %v3712 = vadd.f32 0.0, %v3711
        %v3713 = vpop.f32.mrb[0].mxu0
        %3714 = vdwg.mxu0
        %3715 = vrot.lane.b32.xlu0 %v831, 32
        %v3716 = vpop.permute.xlu0 %3715
        %v3719 = vsel %vm1161, %v3486, 0
        %3721 = vmatprep.subr.mxu0 0.0
        %3722 = vmatpush1.msra.mxu0 %v3716
        %3723 = vmatprep.subr.mxu0 0.0
        %3724 = vmatpush1.msra.mxu0 0.0
        %3725 = vmatprep.subr.mxu0 0.0
        %3726 = vmatpush1.msra.mxu0 0.0
        %3727 = vmatprep.subr.mxu0 0.0
        %3728 = vmatpush1.msra.mxu0 0.0
        %3729 = vmatprep.subr.mxu0 0.0
        %3730 = vmatpush1.msra.mxu0 0.0
        %3731 = vmatprep.subr.mxu0 0.0
        %3732 = vmatpush1.msra.mxu0 0.0
        %3733 = vmatprep.subr.mxu0 0.0
        %3734 = vmatpush1.msra.mxu0 0.0
        %3735 = vmatprep.subr.mxu0 0.0
        %3736 = vmatpush1.msra.mxu0 0.0
        %3737 = vmatprep.subr.mxu0 0.0
        %3738 = vmatpush1.msra.mxu0 0.0
        %3739 = vmatprep.subr.mxu0 0.0
        %3740 = vmatpush1.msra.mxu0 0.0
        %3741 = vmatprep.subr.mxu0 0.0
        %3742 = vmatpush1.msra.mxu0 0.0
        %3743 = vmatprep.subr.mxu0 0.0
        %3744 = vmatpush1.msra.mxu0 0.0
        %3745 = vmatprep.subr.mxu0 0.0
        %3746 = vmatpush1.msra.mxu0 0.0
        %3747 = vmatprep.subr.mxu0 0.0
        %3748 = vmatpush1.msra.mxu0 0.0
        %3749 = vmatprep.subr.mxu0 0.0
        %3750 = vmatpush1.msra.mxu0 0.0
        %3751 = vmatprep.subr.mxu0 0.0
        %3752 = vmatpush1.msra.mxu0 0.0
        %3753 = vmatprep.subr.mxu0 0.0
        %3754 = vmatpush1.msra.mxu0 0.0
        %3755 = vmatprep.subr.mxu0 0.0
        %3756 = vmatpush1.msra.mxu0 0.0
        %3757 = vmatprep.subr.mxu0 0.0
        %3758 = vmatpush1.msra.mxu0 0.0
        %3759 = vmatprep.subr.mxu0 0.0
        %3760 = vmatpush1.msra.mxu0 0.0
        %3761 = vmatprep.subr.mxu0 0.0
        %3762 = vmatpush1.msra.mxu0 0.0
        %3763 = vmatprep.subr.mxu0 0.0
        %3764 = vmatpush1.msra.mxu0 0.0
        %3765 = vmatprep.subr.mxu0 0.0
        %3766 = vmatpush1.msra.mxu0 0.0
        %3767 = vmatprep.subr.mxu0 0.0
        %3768 = vmatpush1.msra.mxu0 0.0
        %3769 = vmatprep.subr.mxu0 0.0
        %3770 = vmatpush1.msra.mxu0 0.0
        %3771 = vmatprep.subr.mxu0 0.0
        %3772 = vmatpush1.msra.mxu0 0.0
        %3773 = vmatprep.subr.mxu0 0.0
        %3774 = vmatpush1.msra.mxu0 0.0
        %3775 = vmatprep.subr.mxu0 0.0
        %3776 = vmatpush1.msra.mxu0 0.0
        %3777 = vmatprep.subr.mxu0 0.0
        %3778 = vmatpush1.msra.mxu0 0.0
        %3779 = vmatprep.subr.mxu0 0.0
        %3780 = vmatpush1.msra.mxu0 0.0
        %3781 = vmatprep.subr.mxu0 0.0
        %3782 = vmatpush1.msra.mxu0 0.0
        %3783 = vmatprep.subr.mxu0 0.0
        %3784 = vmatpush1.msra.mxu0 0.0
        %3785 = vmatprep.mubr.f32.mxu0 0.0
        %3786 = vmatmul.mubr.f32.gmra.mrb[0].mxu0 %v3719
        %v3787 = vpop.f32.mrb[0].mxu0
        %v3788 = vadd.f32 0.0, %v3787
        %v3789 = vpop.f32.mrb[0].mxu0
        %3790 = vdwg.mxu0
        %s3791 = scalar_lea.vmem [#allocation9], 96
        %v3792 = vld [vmem:[%s3791] sm:$0xff]
        %v3793 = vld [vmem:[%s3791 + $0x8] sm:$0xff]
        %v3794 = vld [vmem:[%s3791 + $0x10] sm:$0xff]
        %v3795 = vld [vmem:[%s3791 + $0x18] sm:$0xff]
        %v3797 = vsel %vm856, %v3560, 0
        %v3800 = vsel %vm856, %v3636, 0
        %v3803 = vsel %vm856, %v3712, 0
        %v3806 = vsel %vm856, %v3788, 0
        %3808 = vmatprep.subr.mxu0 0.0
        %3809 = vmatpush1.msra.mxu0 %v3792
        %3810 = vmatprep.subr.mxu0 0.0
        %3811 = vmatpush1.msra.mxu0 %v3793
        %3812 = vmatprep.subr.mxu0 0.0
        %3813 = vmatpush1.msra.mxu0 %v3794
        %3814 = vmatprep.subr.mxu0 0.0
        %3815 = vmatpush1.msra.mxu0 %v3795
        %3816 = vmatprep.subr.mxu0 0.0
        %3817 = vmatpush1.msra.mxu0 0.0
        %3818 = vmatprep.subr.mxu0 0.0
        %3819 = vmatpush1.msra.mxu0 0.0
        %3820 = vmatprep.subr.mxu0 0.0
        %3821 = vmatpush1.msra.mxu0 0.0
        %3822 = vmatprep.subr.mxu0 0.0
        %3823 = vmatpush1.msra.mxu0 0.0
        %3824 = vmatprep.subr.mxu0 0.0
        %3825 = vmatpush1.msra.mxu0 0.0
        %3826 = vmatprep.subr.mxu0 0.0
        %3827 = vmatpush1.msra.mxu0 0.0
        %3828 = vmatprep.subr.mxu0 0.0
        %3829 = vmatpush1.msra.mxu0 0.0
        %3830 = vmatprep.subr.mxu0 0.0
        %3831 = vmatpush1.msra.mxu0 0.0
        %3832 = vmatprep.subr.mxu0 0.0
        %3833 = vmatpush1.msra.mxu0 0.0
        %3834 = vmatprep.subr.mxu0 0.0
        %3835 = vmatpush1.msra.mxu0 0.0
        %3836 = vmatprep.subr.mxu0 0.0
        %3837 = vmatpush1.msra.mxu0 0.0
        %3838 = vmatprep.subr.mxu0 0.0
        %3839 = vmatpush1.msra.mxu0 0.0
        %3840 = vmatprep.subr.mxu0 0.0
        %3841 = vmatpush1.msra.mxu0 0.0
        %3842 = vmatprep.subr.mxu0 0.0
        %3843 = vmatpush1.msra.mxu0 0.0
        %3844 = vmatprep.subr.mxu0 0.0
        %3845 = vmatpush1.msra.mxu0 0.0
        %3846 = vmatprep.subr.mxu0 0.0
        %3847 = vmatpush1.msra.mxu0 0.0
        %3848 = vmatprep.subr.mxu0 0.0
        %3849 = vmatpush1.msra.mxu0 0.0
        %3850 = vmatprep.subr.mxu0 0.0
        %3851 = vmatpush1.msra.mxu0 0.0
        %3852 = vmatprep.subr.mxu0 0.0
        %3853 = vmatpush1.msra.mxu0 0.0
        %3854 = vmatprep.subr.mxu0 0.0
        %3855 = vmatpush1.msra.mxu0 0.0
        %3856 = vmatprep.subr.mxu0 0.0
        %3857 = vmatpush1.msra.mxu0 0.0
        %3858 = vmatprep.subr.mxu0 0.0
        %3859 = vmatpush1.msra.mxu0 0.0
        %3860 = vmatprep.subr.mxu0 0.0
        %3861 = vmatpush1.msra.mxu0 0.0
        %3862 = vmatprep.subr.mxu0 0.0
        %3863 = vmatpush1.msra.mxu0 0.0
        %3864 = vmatprep.subr.mxu0 0.0
        %3865 = vmatpush1.msra.mxu0 0.0
        %3866 = vmatprep.subr.mxu0 0.0
        %3867 = vmatpush1.msra.mxu0 0.0
        %3868 = vmatprep.subr.mxu0 0.0
        %3869 = vmatpush1.msra.mxu0 0.0
        %3870 = vmatprep.subr.mxu0 0.0
        %3871 = vmatpush1.msra.mxu0 0.0
        %3872 = vmatprep.mubr.f32.mxu0 0.0
        %3873 = vmatmul.mubr.f32.gmra.mrb[0].mxu0 %v3797
        %v3874 = vpop.f32.mrb[0].mxu0
        %v3875 = vadd.f32 0.0, %v3874
        %v3876 = vpop.f32.mrb[0].mxu0
        %3877 = vmatprep.mubr.f32.mxu0 0.0
        %3878 = vmatmul.mubr.f32.gmra.mrb[0].mxu0 %v3800
        %v3879 = vpop.f32.mrb[0].mxu0
        %v3880 = vadd.f32 0.0, %v3879
        %v3881 = vpop.f32.mrb[0].mxu0
        %3882 = vmatprep.mubr.f32.mxu0 0.0
        %3883 = vmatmul.mubr.f32.gmra.mrb[0].mxu0 %v3803
        %v3884 = vpop.f32.mrb[0].mxu0
        %v3885 = vadd.f32 0.0, %v3884
        %v3886 = vpop.f32.mrb[0].mxu0
        %3887 = vmatprep.mubr.f32.mxu0 0.0
        %3888 = vmatmul.mubr.f32.gmra.mrb[0].mxu0 %v3806
        %v3889 = vpop.f32.mrb[0].mxu0
        %v3890 = vadd.f32 0.0, %v3889
        %v3891 = vpop.f32.mrb[0].mxu0
        %3892 = vdwg.mxu0
        %v3893 = vadd.f32 %v3127, %v3875
        %v3894 = vadd.f32 %v3128, %v3880
        %v3895 = vadd.f32 %v3129, %v3885
        %v3896 = vadd.f32 %v3130, %v3890
        %v3897 = vld [vmem:[%s7] sm:$0x1]
        %v3899 = vlaneseq
        %v3900 = vshrl.u32 %v3899, 7
        %v3901 = vsub.s32 0, %v3900
        %v3902 = vrot.slane %v3897, %v3901
        %v3904 = vadd.f32 %v3893, %v3902
        %v3905 = vadd.f32 %v3894, %v3902
        %v3906 = vadd.f32 %v3895, %v3902
        %v3907 = vadd.f32 %v3896, %v3902
        %v3908 = vadd.f32 %v524, %v3904
        %v3909 = vadd.f32 %v525, %v3905
        %v3910 = vadd.f32 %v526, %v3906
        %v3911 = vadd.f32 %v527, %v3907
        %v3912 = vld [vmem:[%s8] sm:$0x1]
        %v3913 = vld [vmem:[%s9] sm:$0x1]
        %3914 = vadd.xlane.f32.xlu0 %v3908
        %v3915 = vpop.xlane.xlu0 %3914
        %3916 = vadd.xlane.f32.xlu0 %v3909
        %v3917 = vpop.xlane.xlu0 %3916
        %3918 = vadd.xlane.f32.xlu0 %v3910
        %v3919 = vpop.xlane.xlu0 %3918
        %3920 = vadd.xlane.f32.xlu0 %v3911
        %v3921 = vpop.xlane.xlu0 %3920
        %v3922 = vmul.f32 %v3915, %v538
        %v3923 = vmul.f32 %v3917, %v538
        %v3924 = vmul.f32 %v3919, %v538
        %v3925 = vmul.f32 %v3921, %v538
        %v3926 = vsub.f32 %v3908, %v3922
        %v3927 = vsub.f32 %v3909, %v3923
        %v3928 = vsub.f32 %v3910, %v3924
        %v3929 = vsub.f32 %v3911, %v3925
        %v3930 = vmul.f32 %v3926, %v3926
        %v3931 = vmul.f32 %v3927, %v3927
        %v3932 = vmul.f32 %v3928, %v3928
        %v3933 = vmul.f32 %v3929, %v3929
        %3934 = vadd.xlane.f32.xlu0 %v3930
        %v3935 = vpop.xlane.xlu0 %3934
        %3936 = vadd.xlane.f32.xlu0 %v3931
        %v3937 = vpop.xlane.xlu0 %3936
        %3938 = vadd.xlane.f32.xlu0 %v3932
        %v3939 = vpop.xlane.xlu0 %3938
        %3940 = vadd.xlane.f32.xlu0 %v3933
        %v3941 = vpop.xlane.xlu0 %3940
        %v3942 = vmul.f32 %v3935, %v538
        %v3943 = vmul.f32 %v3937, %v538
        %v3944 = vmul.f32 %v3939, %v538
        %v3945 = vmul.f32 %v3941, %v538
        %v3946 = vadd.f32 %v3942, 1e-05
        %v3947 = vadd.f32 %v3943, 1e-05
        %v3948 = vadd.f32 %v3944, 1e-05
        %v3949 = vadd.f32 %v3945, 1e-05
        %v3950 = vrsqrt.pop %v3946
        %v3951 = vrsqrt.pop %v3947
        %v3952 = vrsqrt.pop %v3948
        %v3953 = vrsqrt.pop %v3949
        %v3954 = vmul.f32 %v3926, %v3950
        %v3955 = vmul.f32 %v3927, %v3951
        %v3956 = vmul.f32 %v3928, %v3952
        %v3957 = vmul.f32 %v3929, %v3953
        %v3959 = vlaneseq
        %v3960 = vshrl.u32 %v3959, 7
        %v3961 = vsub.s32 0, %v3960
        %v3962 = vrot.slane %v3912, %v3961
        %v3964 = vmul.f32 %v3954, %v3962
        %v3965 = vmul.f32 %v3955, %v3962
        %v3966 = vmul.f32 %v3956, %v3962
        %v3967 = vmul.f32 %v3957, %v3962
        %v3969 = vlaneseq
        %v3970 = vshrl.u32 %v3969, 7
        %v3971 = vsub.s32 0, %v3970
        %v3972 = vrot.slane %v3913, %v3971
        %v3974 = vadd.f32 %v3964, %v3972
        %v3975 = vadd.f32 %v3965, %v3972
        %v3976 = vadd.f32 %v3966, %v3972
        %v3977 = vadd.f32 %v3967, %v3972
        %v3978 = vld [vmem:[#allocation10] sm:$0xff]
        %v3979 = vld [vmem:[#allocation10 + $0x8] sm:$0xff]
        %v3980 = vld [vmem:[#allocation10 + $0x10] sm:$0xff]
        %v3981 = vld [vmem:[#allocation10 + $0x18] sm:$0xff]
        %v3982 = vld [vmem:[#allocation10 + $0x20] sm:$0xff]
        %v3983 = vld [vmem:[#allocation10 + $0x28] sm:$0xff]
        %v3984 = vld [vmem:[#allocation10 + $0x30] sm:$0xff]
        %v3985 = vld [vmem:[#allocation10 + $0x38] sm:$0xff]
        %v3986 = vld [vmem:[#allocation10 + $0x40] sm:$0xff]
        %v3987 = vld [vmem:[#allocation10 + $0x48] sm:$0xff]
        %v3988 = vld [vmem:[#allocation10 + $0x50] sm:$0xff]
        %v3989 = vld [vmem:[#allocation10 + $0x58] sm:$0xff]
        %v3990 = vld [vmem:[#allocation10 + $0x60] sm:$0xff]
        %v3991 = vld [vmem:[#allocation10 + $0x68] sm:$0xff]
        %v3992 = vld [vmem:[#allocation10 + $0x70] sm:$0xff]
        %v3993 = vld [vmem:[#allocation10 + $0x78] sm:$0xff]
        %v3994 = vld [vmem:[#allocation10 + $0x80] sm:$0xff]
        %v3995 = vld [vmem:[#allocation10 + $0x88] sm:$0xff]
        %v3996 = vld [vmem:[#allocation10 + $0x90] sm:$0xff]
        %v3997 = vld [vmem:[#allocation10 + $0x98] sm:$0xff]
        %v3998 = vld [vmem:[#allocation10 + $0xa0] sm:$0xff]
        %v3999 = vld [vmem:[#allocation10 + $0xa8] sm:$0xff]
        %v4000 = vld [vmem:[#allocation10 + $0xb0] sm:$0xff]
        %v4001 = vld [vmem:[#allocation10 + $0xb8] sm:$0xff]
        %v4002 = vld [vmem:[#allocation10 + $0xc0] sm:$0xff]
        %v4003 = vld [vmem:[#allocation10 + $0xc8] sm:$0xff]
        %v4004 = vld [vmem:[#allocation10 + $0xd0] sm:$0xff]
        %v4005 = vld [vmem:[#allocation10 + $0xd8] sm:$0xff]
        %v4006 = vld [vmem:[#allocation10 + $0xe0] sm:$0xff]
        %v4007 = vld [vmem:[#allocation10 + $0xe8] sm:$0xff]
        %v4008 = vld [vmem:[#allocation10 + $0xf0] sm:$0xff]
        %v4009 = vld [vmem:[#allocation10 + $0xf8] sm:$0xff]
        %v4010 = vld [vmem:[%s11] sm:$0x3]
        %v4012 = vlaneseq
        %v4013 = vshrl.u32 %v4012, 7
        %v4014 = vsub.s32 0, %v4013
        %v4015 = vrot.slane %v4010, %v4014
        %v4016 = vlaneseq
        %v4017 = vshrl.u32 %v4016, 7
        %v4018 = vsub.s32 1, %v4017
        %v4019 = vrot.slane %v4010, %v4018
        %4022 = vmatprep.subr.mxu0 %v3979
        %4023 = vmatpush1.msra.mxu0 %v3978
        %4024 = vmatprep.subr.mxu0 %v3981
        %4025 = vmatpush1.msra.mxu0 %v3980
        %4026 = vmatprep.subr.mxu0 %v3983
        %4027 = vmatpush1.msra.mxu0 %v3982
        %4028 = vmatprep.subr.mxu0 %v3985
        %4029 = vmatpush1.msra.mxu0 %v3984
        %4030 = vmatprep.subr.mxu0 %v3987
        %4031 = vmatpush1.msra.mxu0 %v3986
        %4032 = vmatprep.subr.mxu0 %v3989
        %4033 = vmatpush1.msra.mxu0 %v3988
        %4034 = vmatprep.subr.mxu0 %v3991
        %4035 = vmatpush1.msra.mxu0 %v3990
        %4036 = vmatprep.subr.mxu0 %v3993
        %4037 = vmatpush1.msra.mxu0 %v3992
        %4038 = vmatprep.subr.mxu0 %v3995
        %4039 = vmatpush1.msra.mxu0 %v3994
        %4040 = vmatprep.subr.mxu0 %v3997
        %4041 = vmatpush1.msra.mxu0 %v3996
        %4042 = vmatprep.subr.mxu0 %v3999
        %4043 = vmatpush1.msra.mxu0 %v3998
        %4044 = vmatprep.subr.mxu0 %v4001
        %4045 = vmatpush1.msra.mxu0 %v4000
        %4046 = vmatprep.subr.mxu0 %v4003
        %4047 = vmatpush1.msra.mxu0 %v4002
        %4048 = vmatprep.subr.mxu0 %v4005
        %4049 = vmatpush1.msra.mxu0 %v4004
        %4050 = vmatprep.subr.mxu0 %v4007
        %4051 = vmatpush1.msra.mxu0 %v4006
        %4052 = vmatprep.subr.mxu0 %v4009
        %4053 = vmatpush1.msra.mxu0 %v4008
        %4054 = vmatprep.subr.mxu0 0.0
        %4055 = vmatpush1.msra.mxu0 0.0
        %4056 = vmatprep.subr.mxu0 0.0
        %4057 = vmatpush1.msra.mxu0 0.0
        %4058 = vmatprep.subr.mxu0 0.0
        %4059 = vmatpush1.msra.mxu0 0.0
        %4060 = vmatprep.subr.mxu0 0.0
        %4061 = vmatpush1.msra.mxu0 0.0
        %4062 = vmatprep.subr.mxu0 0.0
        %4063 = vmatpush1.msra.mxu0 0.0
        %4064 = vmatprep.subr.mxu0 0.0
        %4065 = vmatpush1.msra.mxu0 0.0
        %4066 = vmatprep.subr.mxu0 0.0
        %4067 = vmatpush1.msra.mxu0 0.0
        %4068 = vmatprep.subr.mxu0 0.0
        %4069 = vmatpush1.msra.mxu0 0.0
        %4070 = vmatprep.subr.mxu0 0.0
        %4071 = vmatpush1.msra.mxu0 0.0
        %4072 = vmatprep.subr.mxu0 0.0
        %4073 = vmatpush1.msra.mxu0 0.0
        %4074 = vmatprep.subr.mxu0 0.0
        %4075 = vmatpush1.msra.mxu0 0.0
        %4076 = vmatprep.subr.mxu0 0.0
        %4077 = vmatpush1.msra.mxu0 0.0
        %4078 = vmatprep.subr.mxu0 0.0
        %4079 = vmatpush1.msra.mxu0 0.0
        %4080 = vmatprep.subr.mxu0 0.0
        %4081 = vmatpush1.msra.mxu0 0.0
        %4082 = vmatprep.subr.mxu0 0.0
        %4083 = vmatpush1.msra.mxu0 0.0
        %4084 = vmatprep.subr.mxu0 0.0
        %4085 = vmatpush1.msra.mxu0 0.0
        %4086 = vmatprep.mubr.f32.mxu0 0.0
        %4087 = vmatmul.mubr.f32.gmra.mrb[0].mxu0 %v3974
        %v4088 = vpop.f32.mrb[0].mxu0
        %v4089 = vadd.f32 %v4015, %v4088
        %v4090 = vpop.f32.mrb[0].mxu0
        %v4091 = vadd.f32 %v4019, %v4090
        %4092 = vmatprep.mubr.f32.mxu0 0.0
        %4093 = vmatmul.mubr.f32.gmra.mrb[0].mxu0 %v3975
        %v4094 = vpop.f32.mrb[0].mxu0
        %v4095 = vadd.f32 %v4015, %v4094
        %v4096 = vpop.f32.mrb[0].mxu0
        %v4097 = vadd.f32 %v4019, %v4096
        %4098 = vmatprep.mubr.f32.mxu0 0.0
        %4099 = vmatmul.mubr.f32.gmra.mrb[0].mxu0 %v3976
        %v4100 = vpop.f32.mrb[0].mxu0
        %v4101 = vadd.f32 %v4015, %v4100
        %v4102 = vpop.f32.mrb[0].mxu0
        %v4103 = vadd.f32 %v4019, %v4102
        %4104 = vmatprep.mubr.f32.mxu0 0.0
        %4105 = vmatmul.mubr.f32.gmra.mrb[0].mxu0 %v3977
        %v4106 = vpop.f32.mrb[0].mxu0
        %v4107 = vadd.f32 %v4015, %v4106
        %v4108 = vpop.f32.mrb[0].mxu0
        %v4109 = vadd.f32 %v4019, %v4108
        %4110 = vdwg.mxu0
        %v4111 = vmax.f32 %v4089, 0.0
        %v4112 = vmax.f32 %v4091, 0.0
        %v4113 = vmax.f32 %v4095, 0.0
        %v4114 = vmax.f32 %v4097, 0.0
        %v4115 = vmax.f32 %v4101, 0.0
        %v4116 = vmax.f32 %v4103, 0.0
        %v4117 = vmax.f32 %v4107, 0.0
        %v4118 = vmax.f32 %v4109, 0.0
        %v4119 = vld [vmem:[#allocation12] sm:$0xff]
        %v4120 = vld [vmem:[#allocation12 + $0x8] sm:$0xff]
        %v4121 = vld [vmem:[#allocation12 + $0x10] sm:$0xff]
        %v4122 = vld [vmem:[#allocation12 + $0x18] sm:$0xff]
        %v4123 = vld [vmem:[#allocation12 + $0x20] sm:$0xff]
        %v4124 = vld [vmem:[#allocation12 + $0x28] sm:$0xff]
        %v4125 = vld [vmem:[#allocation12 + $0x30] sm:$0xff]
        %v4126 = vld [vmem:[#allocation12 + $0x38] sm:$0xff]
        %v4127 = vld [vmem:[#allocation12 + $0x40] sm:$0xff]
        %v4128 = vld [vmem:[#allocation12 + $0x48] sm:$0xff]
        %v4129 = vld [vmem:[#allocation12 + $0x50] sm:$0xff]
        %v4130 = vld [vmem:[#allocation12 + $0x58] sm:$0xff]
        %v4131 = vld [vmem:[#allocation12 + $0x60] sm:$0xff]
        %v4132 = vld [vmem:[#allocation12 + $0x68] sm:$0xff]
        %v4133 = vld [vmem:[#allocation12 + $0x70] sm:$0xff]
        %v4134 = vld [vmem:[#allocation12 + $0x78] sm:$0xff]
        %v4135 = vld [vmem:[#allocation12 + $0x80] sm:$0xff]
        %v4136 = vld [vmem:[#allocation12 + $0x88] sm:$0xff]
        %v4137 = vld [vmem:[#allocation12 + $0x90] sm:$0xff]
        %v4138 = vld [vmem:[#allocation12 + $0x98] sm:$0xff]
        %v4139 = vld [vmem:[#allocation12 + $0xa0] sm:$0xff]
        %v4140 = vld [vmem:[#allocation12 + $0xa8] sm:$0xff]
        %v4141 = vld [vmem:[#allocation12 + $0xb0] sm:$0xff]
        %v4142 = vld [vmem:[#allocation12 + $0xb8] sm:$0xff]
        %v4143 = vld [vmem:[#allocation12 + $0xc0] sm:$0xff]
        %v4144 = vld [vmem:[#allocation12 + $0xc8] sm:$0xff]
        %v4145 = vld [vmem:[#allocation12 + $0xd0] sm:$0xff]
        %v4146 = vld [vmem:[#allocation12 + $0xd8] sm:$0xff]
        %v4147 = vld [vmem:[#allocation12 + $0xe0] sm:$0xff]
        %v4148 = vld [vmem:[#allocation12 + $0xe8] sm:$0xff]
        %v4149 = vld [vmem:[#allocation12 + $0xf0] sm:$0xff]
        %v4150 = vld [vmem:[#allocation12 + $0xf8] sm:$0xff]
        %v4151 = vld [vmem:[%s13] sm:$0x1]
        %v4153 = vlaneseq
        %v4154 = vshrl.u32 %v4153, 7
        %v4155 = vsub.s32 0, %v4154
        %v4156 = vrot.slane %v4151, %v4155
        %4158 = vmatprep.subr.mxu0 0.0
        %4159 = vmatpush1.msra.mxu0 %v4119
        %4160 = vmatprep.subr.mxu0 0.0
        %4161 = vmatpush1.msra.mxu0 %v4120
        %4162 = vmatprep.subr.mxu0 0.0
        %4163 = vmatpush1.msra.mxu0 %v4121
        %4164 = vmatprep.subr.mxu0 0.0
        %4165 = vmatpush1.msra.mxu0 %v4122
        %4166 = vmatprep.subr.mxu0 0.0
        %4167 = vmatpush1.msra.mxu0 %v4123
        %4168 = vmatprep.subr.mxu0 0.0
        %4169 = vmatpush1.msra.mxu0 %v4124
        %4170 = vmatprep.subr.mxu0 0.0
        %4171 = vmatpush1.msra.mxu0 %v4125
        %4172 = vmatprep.subr.mxu0 0.0
        %4173 = vmatpush1.msra.mxu0 %v4126
        %4174 = vmatprep.subr.mxu0 0.0
        %4175 = vmatpush1.msra.mxu0 %v4127
        %4176 = vmatprep.subr.mxu0 0.0
        %4177 = vmatpush1.msra.mxu0 %v4128
        %4178 = vmatprep.subr.mxu0 0.0
        %4179 = vmatpush1.msra.mxu0 %v4129
        %4180 = vmatprep.subr.mxu0 0.0
        %4181 = vmatpush1.msra.mxu0 %v4130
        %4182 = vmatprep.subr.mxu0 0.0
        %4183 = vmatpush1.msra.mxu0 %v4131
        %4184 = vmatprep.subr.mxu0 0.0
        %4185 = vmatpush1.msra.mxu0 %v4132
        %4186 = vmatprep.subr.mxu0 0.0
        %4187 = vmatpush1.msra.mxu0 %v4133
        %4188 = vmatprep.subr.mxu0 0.0
        %4189 = vmatpush1.msra.mxu0 %v4134
        %4190 = vmatprep.subr.mxu0 0.0
        %4191 = vmatpush1.msra.mxu0 %v4135
        %4192 = vmatprep.subr.mxu0 0.0
        %4193 = vmatpush1.msra.mxu0 %v4136
        %4194 = vmatprep.subr.mxu0 0.0
        %4195 = vmatpush1.msra.mxu0 %v4137
        %4196 = vmatprep.subr.mxu0 0.0
        %4197 = vmatpush1.msra.mxu0 %v4138
        %4198 = vmatprep.subr.mxu0 0.0
        %4199 = vmatpush1.msra.mxu0 %v4139
        %4200 = vmatprep.subr.mxu0 0.0
        %4201 = vmatpush1.msra.mxu0 %v4140
        %4202 = vmatprep.subr.mxu0 0.0
        %4203 = vmatpush1.msra.mxu0 %v4141
        %4204 = vmatprep.subr.mxu0 0.0
        %4205 = vmatpush1.msra.mxu0 %v4142
        %4206 = vmatprep.subr.mxu0 0.0
        %4207 = vmatpush1.msra.mxu0 %v4143
        %4208 = vmatprep.subr.mxu0 0.0
        %4209 = vmatpush1.msra.mxu0 %v4144
        %4210 = vmatprep.subr.mxu0 0.0
        %4211 = vmatpush1.msra.mxu0 %v4145
        %4212 = vmatprep.subr.mxu0 0.0
        %4213 = vmatpush1.msra.mxu0 %v4146
        %4214 = vmatprep.subr.mxu0 0.0
        %4215 = vmatpush1.msra.mxu0 %v4147
        %4216 = vmatprep.subr.mxu0 0.0
        %4217 = vmatpush1.msra.mxu0 %v4148
        %4218 = vmatprep.subr.mxu0 0.0
        %4219 = vmatpush1.msra.mxu0 %v4149
        %4220 = vmatprep.subr.mxu0 0.0
        %4221 = vmatpush1.msra.mxu0 %v4150
        %4222 = vmatprep.mubr.f32.mxu0 %v4112
        %4223 = vmatmul.mubr.f32.gmra.mrb[0].mxu0 %v4111
        %v4224 = vpop.f32.mrb[0].mxu0
        %v4225 = vadd.f32 %v4156, %v4224
        %v4226 = vpop.f32.mrb[0].mxu0
        %4227 = vmatprep.mubr.f32.mxu0 %v4114
        %4228 = vmatmul.mubr.f32.gmra.mrb[0].mxu0 %v4113
        %v4229 = vpop.f32.mrb[0].mxu0
        %v4230 = vadd.f32 %v4156, %v4229
        %v4231 = vpop.f32.mrb[0].mxu0
        %4232 = vmatprep.mubr.f32.mxu0 %v4116
        %4233 = vmatmul.mubr.f32.gmra.mrb[0].mxu0 %v4115
        %v4234 = vpop.f32.mrb[0].mxu0
        %v4235 = vadd.f32 %v4156, %v4234
        %v4236 = vpop.f32.mrb[0].mxu0
        %4237 = vmatprep.mubr.f32.mxu0 %v4118
        %4238 = vmatmul.mubr.f32.gmra.mrb[0].mxu0 %v4117
        %v4239 = vpop.f32.mrb[0].mxu0
        %v4240 = vadd.f32 %v4156, %v4239
        %v4241 = vpop.f32.mrb[0].mxu0
        %4242 = vdwg.mxu0
        %v4243 = vadd.f32 %v3908, %v4225
        %v4244 = vadd.f32 %v3909, %v4230
        %v4245 = vadd.f32 %v3910, %v4235
        %v4246 = vadd.f32 %v3911, %v4240
        %4247 = vst [vmem:[%s521] sm:$0xff] %v4243
        %4248 = vst [vmem:[%s521 + $0x8] sm:$0xff] %v4244
        %4249 = vst [vmem:[%s521 + $0x10] sm:$0xff] %v4245
        %4250 = vst [vmem:[%s521 + $0x18] sm:$0xff] %v4246
        %s4251 = sand.u32 %s323, 1
        %s4252 = scalar_lea.sflag [#allocation6], %s4251
        %s4253 = sand.u32 %s323, 1
        %s4254 = smul.addr %s4253, 32
        %s4255 = scalar_lea.vmem [#allocation13], %s4254
        // Predicated region
        $region93: #{tpu_custom_call.1} parent=71 // pred_check
          %p4256 = pneg %p333
        $region94: #{tpu_custom_call.1} parent=71 // pred_check_branch
          %4258 = sbr.rel (%p4256) target = $region96
        $region95: #{tpu_custom_call.1} parent=71 // pred_region
          %s4259 = smul.u32 4, %s37
          %s4261 = ssub.s32 512, 512
          %4262 = vsyncadd %s4252, %s4261
          %s4263 = smul.addr %s4259, 128
          %s4264 = scalar_lea.hbm %s14, %s4263
          %s4265 = sshll.u32 %s4255, 4
          %s4266 = int_to_ptr.vmem [resolvable:$true] %s4265
          %4271 = dma.vmem_to_hbm [thread:$0]  %s4266, 512, %s4264, %s4252, 128, 128, 8
        $region96: #{tpu_custom_call.1} parent=71 // pred_fallthru
          _
      $region72: #{tpu_custom_call.1} parent=5 // pred_fallthru
        _
      %p4272 = scmp.le.s32.totalorder 2, %s32
      // Predicated region
      $region97: #{tpu_custom_call.1} parent=5 // pred_check
        %p4273 = pneg %p4272
      $region98: #{tpu_custom_call.1} parent=5 // pred_check_branch
        %4275 = sbr.rel (%p4273) target = $region100
      $region99: #{tpu_custom_call.1} parent=5 // pred_region
        %s4276 = ssub.s32 %s32, 2
        // Predicated region
        $region101: #{tpu_custom_call.1} parent=99 // pred_check
          %p4277 = pneg %p339
        $region102: #{tpu_custom_call.1} parent=99 // pred_check_branch
          %4279 = sbr.rel (%p4277) target = $region104
        $region103: #{tpu_custom_call.1} parent=99 // pred_region
          %s4280 = sand.u32 %s324, 1
          %s4281 = scalar_lea.sflag [#allocation6], %s4280
          %s4282 = sand.u32 %s324, 1
          %s4283 = smul.addr %s4282, 32
          %s4284 = scalar_lea.vmem [#allocation13], %s4283
          %4285 = dma.done %s4281, 512
        $region104: #{tpu_custom_call.1} parent=99 // pred_fallthru
          _
      $region100: #{tpu_custom_call.1} parent=5 // pred_fallthru
        _
    $region6: #{tpu_custom_call.1} parent=1 // loop_footer
      %s36 = sadd.s32 1, %s32
    $region7: #{tpu_custom_call.1} parent=1 // loop_footer_branch
      %31 = sbr.rel target = $region3
    $region8: #{tpu_custom_call.1} parent=1 // loop_exit
      _
    %4286 = vsyncpa [#allocation5], 1
    %s4287 = scalar_lea.sflag [#allocation5], 1
    %4288 = vsyncpa %s4287, 1
    %4289 = vsyncpa [#allocation8], 1
    %4290 = vsyncpa [#allocation11], 1
    %4291 = vsyncpa [#allocation6], 1
    %s4292 = scalar_lea.sflag [#allocation6], 1
    %4293 = vsyncpa %s4292, 1

</llo_original>
